<compile_context>
chip_gen: v7x
topology: tpu7x:2x2x1
jax: 0.10.0
libtpu: 0.0.40
codegen_flags: <defaults>
</compile_context>

<pallas_src>
import math

import jax
import jax.numpy as jnp
from jax.experimental import pallas as pl
from jax.experimental.pallas import tpu as pltpu

NODE_FEAT = 39
EDGE_FEAT = 11
NUM_LAYERS = 3
NUM_TIMESTEPS = 2
GRAPH_FEAT = 64
PRED_DIM = 256

# ---- tiling (big graphs) -----------------------------------------------------
GC_DST_TILE = 128      # get_context dst rows per grid step
SRC_CHUNK = 128        # get_context src columns per inner (pipelined, "arbitrary") step
GNN_DST_TILE = 256     # gnn_layer dst rows per grid step

# bf16 elementwise math on the O(dst*src*G) he1 tensor (v6e/v7x bf16 VPU ~2x VALU).
# Set False on TPU v5e (no bf16 VPU — conversions would cost more than they save).
USE_BF16_ELEMENTWISE = True
_ELEM_DT = jnp.bfloat16 if USE_BF16_ELEMENTWISE else jnp.float32


def _vmem_limit_bytes():
    # ~80% of physical VMEM/core: ~51 MiB on v7x (64 MiB/TC), ~102 MiB on v5e/v6e (128 MiB).
    try:
        cap = int(pltpu.get_tpu_info().vmem_capacity_bytes)
    except Exception:
        cap = 64 * 1024 * 1024
    return int(cap * 0.8)


_VMEM_LIMIT = _vmem_limit_bytes()


def _round_up(x, m):
    return ((x + m - 1) // m) * m


def _choose_tiles(n):
    """Return (padded N, get_context dst tile, get_context src chunk, gnn dst tile).

    VMEM budget for the big-graph case (td=sc=128, G=64, bf16 streams):
      edge tile (11 feats lane-padded to 128): 128*128*128*2 B = 4 MiB, x2 double-buffered
      he1/ec temporaries ~ 3 * 128*128*64*(2..4) B ~ 6-12 MiB; adj / hv_wn tiles < 0.1 MiB
    -> well below the ~51 MiB v7x limit, with headroom on v5e/v6e.
    """
    if n <= 128:
        npad = _round_up(max(n, 8), 8)
        return npad, npad, npad, npad          # one tile covers the whole graph
    npad = _round_up(n, 256)                   # multiple of every tile below
    return npad, GC_DST_TILE, SRC_CHUNK, GNN_DST_TILE


# ---------------- in-kernel math helpers (operate on values, not refs) --------
def _mm(a, b):
    """MXU matmul: bf16 operands, f32 accumulation."""
    return jnp.dot(a.astype(jnp.bfloat16), b.astype(jnp.bfloat16),
                   preferred_element_type=jnp.float32)


def _leaky_relu(x):
    # 2 VPU ops (mul + max) instead of cmp + select + mul
    return jnp.maximum(x, 0.01 * x)


def _elu(x):
    # clamp the exp argument so the unselected branch never produces inf
    return jnp.where(x > 0, x, jnp.exp(jnp.minimum(x, 0.0)) - 1.0)


def _masked_softmax_rows(logits, mask):
    # softmax over axis=1 restricted to mask==1; all-masked rows -> zeros
    neg = jnp.where(mask > 0, logits, jnp.float32(-1e30))
    m = jnp.max(neg, axis=1, keepdims=True)
    e = jnp.exp(neg - m) * mask
    s = jnp.sum(e, axis=1, keepdims=True)
    return e * pl.reciprocal(jnp.where(s > 0, s, jnp.float32(1.0)), approx=True)


def _gru(x, h, wi_ref, wh_ref, b_ref):
    # PyTorch nn.GRUCell, per-gate stacked weights:
    #   wi/wh: [3, in, H] (gates r, z, n);  b: [4, 1, H] = (b_ir+b_hr, b_iz+b_hz, b_in, b_hn)
    r = jax.nn.sigmoid(_mm(x, wi_ref[0]) + _mm(h, wh_ref[0]) + b_ref[0])
    z = jax.nn.sigmoid(_mm(x, wi_ref[1]) + _mm(h, wh_ref[1]) + b_ref[1])
    n = jnp.tanh(_mm(x, wi_ref[2]) + b_ref[2] + r * (_mm(h, wh_ref[2]) + b_ref[3]))
    return (1.0 - z) * n + z * h


# ---------------- Pallas kernels -----------------------------------------------
def _get_context_kernel(edge_ref, adj_ref, hvnew_d_ref, dscore_d_ref, hvwn_ref,
                        w1e_ref, w2s_ref, wet_ref, bet_ref,
                        wi_ref, wh_ref, b4_ref,
                        out_ref, m_sc, l_sc, agg_sc):
    # grid = (dst tiles "parallel", src chunks "arbitrary"); online masked softmax over src.
    s_idx = pl.program_id(1)

    @pl.when(s_idx == 0)
    def _init():
        m_sc[...] = jnp.full_like(m_sc, -1e30)
        l_sc[...] = jnp.zeros_like(l_sc)
        agg_sc[...] = jnp.zeros_like(agg_sc)

    td, sc, fe = edge_ref.shape
    g = hvwn_ref.shape[1]

    # project_edge1: edge half on the MXU (K=11); src-node half precomputed (hv_wn incl. bias)
    ec = jnp.dot(edge_ref[...].reshape(td * sc, fe), w1e_ref[...],
                 preferred_element_type=jnp.float32)                       # [td*sc, G]
    he1 = _leaky_relu(ec.astype(_ELEM_DT).reshape(td, sc, g)
                      + hvwn_ref[...][None, :, :])                          # [td, sc, G]

    # project_edge2: dst half precomputed (dscore incl. bias); he1 half here.
    # (kept as VPU mult + XLU lane-reduce: an MXU version would emit a [*,1]-minor
    #  result needing a worse sublane->lane relayout to land src back on lanes)
    w2s = w2s_ref[...].reshape(1, 1, g).astype(he1.dtype)
    src_score = jnp.sum(he1 * w2s, axis=-1).astype(jnp.float32)             # [td, sc]
    logits = _leaky_relu(dscore_d_ref[...] + src_score)                     # [td, sc]

    # online (flash-style) masked softmax over the src axis
    mask = adj_ref[...].astype(jnp.float32)
    neg = jnp.where(mask > 0, logits, jnp.float32(-1e30))
    m_prev = m_sc[...]
    m_new = jnp.maximum(m_prev, jnp.max(neg, axis=1, keepdims=True))        # [td, 1]
    alpha = jnp.exp(m_prev - m_new)
    p = jnp.exp(neg - m_new) * mask                                         # [td, sc]
    l_sc[...] = alpha * l_sc[...] + jnp.sum(p, axis=1, keepdims=True)
    # AttentiveGRU1 numerator: sum_s p * he1 (batched [1,sc]@[sc,G] on the idle MXU)
    contrib = jnp.einsum('tqs,tsg->tqg',
                         p[:, None, :].astype(jnp.bfloat16),
                         he1.astype(jnp.bfloat16),
                         preferred_element_type=jnp.float32)[:, 0, :]       # [td, G]
    agg_sc[...] = alpha * agg_sc[...] + contrib
    m_sc[...] = m_new

    @pl.when(s_idx == pl.num_programs(1) - 1)
    def _finalize():
        l = l_sc[...]
        inv_l = pl.reciprocal(jnp.where(l > 0, l, jnp.float32(1.0)), approx=True)
        agg = agg_sc[...] * inv_l                                           # sum_s a*he1
        rowsum = (l > 0).astype(jnp.float32)                                # sum_s a (1 or 0)
        # sum_s a*(he1@Wet + bet) = (sum_s a*he1)@Wet + (sum_s a)*bet
        ctx = _elu(_mm(agg, wet_ref[...]) + rowsum * bet_ref[...])          # [td, G]
        h_new = _gru(ctx, hvnew_d_ref[...], wi_ref, wh_ref, b4_ref)
        out_ref[...] = jnp.maximum(h_new, 0.0)


def _gnn_layer_kernel(node_d_ref, adj_ref, sscore_ref, hvproj_ref,
                      wdst_ref, b2_ref, wi_ref, wh_ref, b4_ref, out_ref):
    # Fused GNNLayer for one dst tile: rank-split edge logits -> edge softmax ->
    # AttentiveGRU2 -> GRU -> relu.
    node_d = node_d_ref[...]                                  # [td, G] f32
    dscore = _mm(node_d, wdst_ref[...]) + b2_ref[...]         # [td, 1]
    logits = _leaky_relu(dscore + sscore_ref[...])            # [td, N]
    a = _masked_softmax_rows(logits, adj_ref[...].astype(jnp.float32))
    ctx = _elu(_mm(a, hvproj_ref[...]))                       # [td, G]
    h_new = _gru(ctx, node_d, wi_ref, wh_ref, b4_ref)
    out_ref[...] = jnp.maximum(h_new, 0.0)


def _readout_step_kernel(gfeat_ref, member_ref, nscore_ref, hvproj_ref,
                         wzg_ref, bz_ref, wi_ref, wh_ref, b4_ref, out_ref):
    # Fused GlobalPool timestep: logits -> softmax_nodes -> weighted sum -> elu -> relu -> GRU
    gf = gfeat_ref[...]                                               # [B, G] f32
    gscore = _mm(jnp.maximum(gf, 0.0), wzg_ref[...]) + bz_ref[...]    # [B, 1]
    logits = _leaky_relu(gscore + nscore_ref[...])                    # [B, N]
    a = _masked_softmax_rows(logits, member_ref[...].astype(jnp.float32))
    ctx = jnp.maximum(_elu(_mm(a, hvproj_ref[...])), 0.0)             # [B, G]
    out_ref[...] = _gru(ctx, gf, wi_ref, wh_ref, b4_ref)


# ---------------- pallas_call wrappers ------------------------------------------
def _bcast(shape):
    nd = len(shape)
    return pl.BlockSpec(shape, lambda *_: (0,) * nd)


def _full_vmem(n):
    return [pl.BlockSpec(memory_space=pltpu.MemorySpace.VMEM) for _ in range(n)]


def get_context(edge_b, adj_b, hv_new, dscore, hv_wn, w1e, w2s, wet, bet, gru_p, *, td, sc):
    n = adj_b.shape[0]
    g = GRAPH_FEAT
    wi, wh, b4 = gru_p
    return pl.pallas_call(
        _get_context_kernel,
        out_shape=jax.ShapeDtypeStruct((n, g), jnp.float32),
        grid=(n // td, n // sc),
        in_specs=[
            pl.BlockSpec((td, sc, EDGE_FEAT), lambda d, s: (d, s, 0)),   # edge tile (bf16)
            pl.BlockSpec((td, sc), lambda d, s: (d, s)),                 # adj tile (bf16)
            pl.BlockSpec((td, g), lambda d, s: (d, 0)),                  # hv_new dst tile
            pl.BlockSpec((td, 1), lambda d, s: (d, 0)),                  # dscore dst tile
            pl.BlockSpec((sc, g), lambda d, s: (s, 0)),                  # hv_wn src chunk
            _bcast((EDGE_FEAT, g)),                                      # W_edge1 edge half
            _bcast((1, g)),                                              # w2 he1-half row
            _bcast((g, g)),                                              # edge_transform W
            _bcast((1, g)),                                              # edge_transform b
            _bcast(wi.shape), _bcast(wh.shape), _bcast(b4.shape),
        ],
        out_specs=pl.BlockSpec((td, g), lambda d, s: (d, 0)),
        scratch_shapes=[pltpu.VMEM((td, 1), jnp.float32),   # running max
                        pltpu.VMEM((td, 1), jnp.float32),   # running denominator
                        pltpu.VMEM((td, g), jnp.float32)],  # running numerator
        compiler_params=pltpu.CompilerParams(
            dimension_semantics=("parallel", "arbitrary"),
            vmem_limit_bytes=_VMEM_LIMIT),
    )(edge_b, adj_b, hv_new, dscore, hv_wn, w1e, w2s, wet, bet, wi, wh, b4)


def gnn_layer(node, adj_b, sscore_row, hvproj_b, wdst, b2, gru_p, *, td):
    n, g = node.shape
    wi, wh, b4 = gru_p
    return pl.pallas_call(
        _gnn_layer_kernel,
        out_shape=jax.ShapeDtypeStruct((n, g), jnp.float32),
        grid=(n // td,),
        in_specs=[
            pl.BlockSpec((td, g), lambda d: (d, 0)),                     # node dst tile
            pl.BlockSpec((td, n), lambda d: (d, 0)),                     # adj tile (bf16)
            _bcast((1, n)),                                              # src scores
            _bcast((n, g)),                                              # projected nodes (bf16)
            _bcast((g, 1)),                                              # w_dst
            _bcast((1, 1)),                                              # bias
            _bcast(wi.shape), _bcast(wh.shape), _bcast(b4.shape),
        ],
        out_specs=pl.BlockSpec((td, g), lambda d: (d, 0)),
        compiler_params=pltpu.CompilerParams(
            dimension_semantics=("parallel",),
            vmem_limit_bytes=_VMEM_LIMIT),
    )(node, adj_b, sscore_row, hvproj_b, wdst, b2, wi, wh, b4)


def readout_step(g_feats, member_b, nscore_row, hvproj_b, wzg, bz, gru_p):
    b, g = g_feats.shape
    wi, wh, b4 = gru_p
    return pl.pallas_call(
        _readout_step_kernel,
        out_shape=jax.ShapeDtypeStruct((b, g), jnp.float32),
        in_specs=_full_vmem(9),
        out_specs=pl.BlockSpec(memory_space=pltpu.MemorySpace.VMEM),
    )(g_feats, member_b, nscore_row, hvproj_b, wzg, bz, wi, wh, b4)


# ---------------- parameters -----------------------------------------------------
def init_params(key):
    keys = iter(jax.random.split(key, 64))

    def lin(out_d, in_d):
        k1, k2 = jax.random.split(next(keys))
        bd = 1.0 / math.sqrt(in_d)
        return (jax.random.uniform(k1, (out_d, in_d), jnp.float32, -bd, bd),
                jax.random.uniform(k2, (out_d,), jnp.float32, -bd, bd))

    def gru(in_d, hid):
        k1, k2, k3, k4 = jax.random.split(next(keys), 4)
        bd = 1.0 / math.sqrt(hid)
        return (jax.random.uniform(k1, (3 * hid, in_d), jnp.float32, -bd, bd),
                jax.random.uniform(k2, (3 * hid, hid), jnp.float32, -bd, bd),
                jax.random.uniform(k3, (3 * hid,), jnp.float32, -bd, bd),
                jax.random.uniform(k4, (3 * hid,), jnp.float32, -bd, bd))

    G = GRAPH_FEAT
    return {
        'get_context': {
            'project_node': lin(G, NODE_FEAT),
            'project_edge1': lin(G, NODE_FEAT + EDGE_FEAT),
            'project_edge2': lin(1, 2 * G),
            'edge_transform': lin(G, G),
            'gru': gru(G, G),
        },
        'gnn_layers': [
            {'project_edge': lin(1, 2 * G),
             'project_node': lin(G, G),
             'gru': gru(G, G)} for _ in range(NUM_LAYERS - 1)
        ],
        'readouts': [
            {'compute_logits': lin(1, 2 * G),
             'project_nodes': lin(G, G),
             'gru': gru(G, G)} for _ in range(NUM_TIMESTEPS)
        ],
        'transform': lin(PRED_DIM, G),
    }


def _b16(w):
    return w.astype(jnp.bfloat16)


def _pack_gru(gp):
    # torch GRUCell layout -> per-gate stacked, lane-aligned weights
    wih, whh, bih, bhh = gp                      # [3H, in], [3H, H], [3H], [3H]
    H = whh.shape[1]
    wi = _b16(jnp.stack([wih[0:H].T, wih[H:2 * H].T, wih[2 * H:3 * H].T]))   # [3, in, H]
    wh = _b16(jnp.stack([whh[0:H].T, whh[H:2 * H].T, whh[2 * H:3 * H].T]))   # [3, H, H]
    b4 = jnp.stack([
        (bih[0:H] + bhh[0:H]).reshape(1, H),
        (bih[H:2 * H] + bhh[H:2 * H]).reshape(1, H),
        bih[2 * H:3 * H].reshape(1, H),
        bhh[2 * H:3 * H].reshape(1, H),
    ])                                                                        # [4, 1, H]
    return wi, wh, b4


# ---------------- forward pass -----------------------------------------------------
def attentive_fp_forward(params, node_feats, edge_dense, adj, member):
    # dropout prob is 0.0 in the reference module defaults -> identity (omitted)
    G = GRAPH_FEAT
    N = node_feats.shape[0]
    Np, gc_td, gc_sc, gnn_td = _choose_tiles(N)
    pad = Np - N
    if pad:
        # padded nodes have zero adjacency & zero membership -> never influence real outputs
        node_feats = jnp.pad(node_feats, ((0, pad), (0, 0)))
        adj = jnp.pad(adj, ((0, pad), (0, pad)))
        edge_dense = jnp.pad(edge_dense, ((0, pad), (0, pad), (0, 0)))
        member = jnp.pad(member, ((0, 0), (0, pad)))

    # bf16 HBM streams (adj/member are exact 0/1; edge feats feed a bf16 MXU op anyway)
    adj_b = adj.astype(jnp.bfloat16)
    edge_b = edge_dense.astype(jnp.bfloat16)
    member_b = member.astype(jnp.bfloat16)

    # ---- GetContext prep (tiny [N,64] projections -> plain XLA, fused by the compiler) ----
    p = params['get_context']
    wpn, bpn = p['project_node']            # [G, 39], [G]
    w1, b1 = p['project_edge1']             # [G, 50], [G]
    w2, b2 = p['project_edge2']             # [1, 2G], [1]
    wet, bet = p['edge_transform']          # [G, G], [G]

    hv_new = _leaky_relu(node_feats @ wpn.T + bpn)                  # [Np, G]
    hv_wn = node_feats @ w1[:, :NODE_FEAT].T + b1                   # [Np, G] (src/node half)
    dscore = hv_new @ w2[:, :G].T + b2                              # [Np, 1] (dst half)

    node = get_context(
        edge_b, adj_b, hv_new, dscore,
        hv_wn.astype(_ELEM_DT),
        _b16(w1[:, NODE_FEAT:].T),          # edge half of project_edge1  [Fe, G]
        w2[:, G:],                          # he1 half of project_edge2   [1, G]
        _b16(wet.T), bet.reshape(1, G),
        _pack_gru(p['gru']), td=gc_td, sc=gc_sc)

    # ---- remaining GNN layers ----
    for lp in params['gnn_layers']:
        we, be = lp['project_edge']          # [1, 2G], [1]
        wp, bp = lp['project_node']          # [G, G], [G]
        hvproj = _b16(node @ wp.T + bp)                              # [Np, G]
        sscore = (node @ we[:, G:].T).reshape(1, Np)                 # src half of logits
        node = gnn_layer(node, adj_b, sscore, hvproj,
                         _b16(we[:, :G].T), be.reshape(1, 1),
                         _pack_gru(lp['gru']), td=gnn_td)

    # ---- AttentiveFPReadout ----
    g_feats = member @ node                                          # sum_nodes  [B, G]
    for rp in params['readouts']:
        wz, bz = rp['compute_logits']        # [1, 2G], [1]
        wp, bp = rp['project_nodes']         # [G, G], [G]
        hvproj = _b16(node @ wp.T + bp)                              # [Np, G]
        nscore = (node @ wz[:, G:].T).reshape(1, Np)                 # node half of logits
        g_feats = readout_step(g_feats, member_b, nscore, hvproj,
                               _b16(wz[:, :G].T), bz.reshape(1, 1),
                               _pack_gru(rp['gru']))

    # ---- final transform: Linear(graph_feat_size, predictor_dim) (tiny -> plain XLA) ----
    wt, bt = params['transform']
    return g_feats @ wt.T + bt                                       # [B, PRED_DIM]


# ---------------- demo ---------------------------------------------------------------
if __name__ == "__main__":
    key = jax.random.PRNGKey(0)
    kp, kn, ke = jax.random.split(key, 3)
    params = init_params(kp)

    # small batched graph: 2 molecules with 7 and 9 nodes, bidirectional ring edges
    sizes = [7, 9]
    B = len(sizes)
    N = sum(sizes)

    node_feats = jax.random.normal(kn, (N, NODE_FEAT), jnp.float32)

    src_list, dst_list, graph_id = [], [], []
    offset = 0
    for gi, n in enumerate(sizes):
        graph_id += [gi] * n
        for i in range(n):
            s = offset + i
            d = offset + (i + 1) % n
            src_list += [s, d]
            dst_list += [d, s]
        offset += n
    E = len(src_list)
    src = jnp.array(src_list, jnp.int32)
    dst = jnp.array(dst_list, jnp.int32)
    efeat = jax.random.normal(ke, (E, EDGE_FEAT), jnp.float32)

    adj = jnp.zeros((N, N), jnp.float32).at[dst, src].set(1.0)                      # [dst, src]
    edge_dense = jnp.zeros((N, N, EDGE_FEAT), jnp.float32).at[dst, src].set(efeat)
    member = jnp.zeros((B, N), jnp.float32).at[jnp.array(graph_id), jnp.arange(N)].set(1.0)

    fwd = jax.jit(attentive_fp_forward)
    out = jax.block_until_ready(fwd(params, node_feats, edge_dense, adj, member))
    assert out.shape == (B, PRED_DIM)
    assert bool(jnp.all(jnp.isfinite(out)))
    print("KERNEL_OK")
</pallas_src>

<mosaic_0001>
module attributes {stable_mosaic.version = 11 : i64} {
  func.func @_get_context_kernel(%arg0: i32, %arg1: i32, %arg2: memref<16x16x11xbf16, #tpu.memory_space<vmem>>, %arg3: memref<16x16xbf16, #tpu.memory_space<vmem>>, %arg4: memref<16x64xf32, #tpu.memory_space<vmem>>, %arg5: memref<16x1xf32, #tpu.memory_space<vmem>>, %arg6: memref<16x64xbf16, #tpu.memory_space<vmem>>, %arg7: memref<11x64xbf16, #tpu.memory_space<vmem>>, %arg8: memref<1x64xf32, #tpu.memory_space<vmem>>, %arg9: memref<64x64xbf16, #tpu.memory_space<vmem>>, %arg10: memref<1x64xf32, #tpu.memory_space<vmem>>, %arg11: memref<3x64x64xbf16, #tpu.memory_space<vmem>>, %arg12: memref<3x64x64xbf16, #tpu.memory_space<vmem>>, %arg13: memref<4x1x64xf32, #tpu.memory_space<vmem>>, %arg14: memref<16x64xf32, #tpu.memory_space<vmem>>, %arg15: memref<16x1xf32, #tpu.memory_space<vmem>>, %arg16: memref<16x1xf32, #tpu.memory_space<vmem>>, %arg17: memref<16x64xf32, #tpu.memory_space<vmem>>) attributes {dimension_semantics = [#tpu.dimension_semantics<parallel>, #tpu.dimension_semantics<arbitrary>], iteration_bounds = array<i64: 1, 1>, scalar_prefetch = 0 : i64, scratch_operands = 3 : i64, tpu.core_type = #tpu.core_type<tc>, window_params = [{transform_indices = @transform_0, window_bounds = array<i64: 16, 16, 11>}, {transform_indices = @transform_1, window_bounds = array<i64: 16, 16>}, {transform_indices = @transform_2, window_bounds = array<i64: 16, 64>}, {transform_indices = @transform_3, window_bounds = array<i64: 16, 1>}, {transform_indices = @transform_4, window_bounds = array<i64: 16, 64>}, {pipeline_mode = #tpu.pipeline_mode<synchronous>, transform_indices = @transform_5, window_bounds = array<i64: 11, 64>}, {pipeline_mode = #tpu.pipeline_mode<synchronous>, transform_indices = @transform_6, window_bounds = array<i64: 1, 64>}, {pipeline_mode = #tpu.pipeline_mode<synchronous>, transform_indices = @transform_7, window_bounds = array<i64: 64, 64>}, {pipeline_mode = #tpu.pipeline_mode<synchronous>, transform_indices = @transform_8, window_bounds = array<i64: 1, 64>}, {pipeline_mode = #tpu.pipeline_mode<synchronous>, transform_indices = @transform_9, window_bounds = array<i64: 3, 64, 64>}, {pipeline_mode = #tpu.pipeline_mode<synchronous>, transform_indices = @transform_10, window_bounds = array<i64: 3, 64, 64>}, {pipeline_mode = #tpu.pipeline_mode<synchronous>, transform_indices = @transform_11, window_bounds = array<i64: 4, 1, 64>}, {transform_indices = @transform_12, window_bounds = array<i64: 16, 64>}]} {
    %c0_i32 = arith.constant 0 : i32
    %0 = arith.cmpi eq, %arg1, %c0_i32 : i32
    %1 = arith.extui %0 : i1 to i32
    %c0_i32_0 = arith.constant 0 : i32
    %2 = arith.cmpi ne, %1, %c0_i32_0 : i32
    scf.if %2 {
      %cst_35 = arith.constant -1.000000e+30 : f32
      %66 = vector.broadcast %cst_35 : f32 to vector<16x1xf32>
      %c0_36 = arith.constant 0 : index
      %c0_37 = arith.constant 0 : index
      %67 = vector.load %arg15[%c0_36, %c0_37] : memref<16x1xf32, #tpu.memory_space<vmem>>, vector<16x1xf32>
      tpu.vector_store %arg15[%c0_36, %c0_37], %66 {strides = array<i32>} : memref<16x1xf32, #tpu.memory_space<vmem>>, vector<16x1xf32>,
      %cst_38 = arith.constant 0.000000e+00 : f32
      %68 = vector.broadcast %cst_38 : f32 to vector<16x1xf32>
      %c0_39 = arith.constant 0 : index
      %c0_40 = arith.constant 0 : index
      %69 = vector.load %arg16[%c0_39, %c0_40] : memref<16x1xf32, #tpu.memory_space<vmem>>, vector<16x1xf32>
      tpu.vector_store %arg16[%c0_39, %c0_40], %68 {strides = array<i32>} : memref<16x1xf32, #tpu.memory_space<vmem>>, vector<16x1xf32>,
      %cst_41 = arith.constant 0.000000e+00 : f32
      %70 = vector.broadcast %cst_41 : f32 to vector<16x64xf32>
      %c0_42 = arith.constant 0 : index
      %c0_43 = arith.constant 0 : index
      %71 = vector.load %arg17[%c0_42, %c0_43] : memref<16x64xf32, #tpu.memory_space<vmem>>, vector<16x64xf32>
      tpu.vector_store %arg17[%c0_42, %c0_43], %70 {strides = array<i32>} : memref<16x64xf32, #tpu.memory_space<vmem>>, vector<16x64xf32>,
    } else {
    }
    %c0 = arith.constant 0 : index
    %c0_1 = arith.constant 0 : index
    %c0_2 = arith.constant 0 : index
    %3 = vector.load %arg2[%c0, %c0_1, %c0_2] : memref<16x16x11xbf16, #tpu.memory_space<vmem>>, vector<16x16x11xbf16>
    %4 = vector.shape_cast %3 : vector<16x16x11xbf16> to vector<256x11xbf16>
    %c0_3 = arith.constant 0 : index
    %c0_4 = arith.constant 0 : index
    %5 = vector.load %arg7[%c0_3, %c0_4] : memref<11x64xbf16, #tpu.memory_space<vmem>>, vector<11x64xbf16>
    %cst = arith.constant dense<0.000000e+00> : vector<256x64xf32>
    %6 = tpu.matmul %4, %5, %cst {dimension_numbers = #tpu.dot_dimension_numbers<[1], [0], [0], [1], [0, 0, 1, 1], [], []>} : vector<256x11xbf16>, vector<11x64xbf16>, vector<256x64xf32> -> vector<256x64xf32>
    %7 = arith.truncf %6 : vector<256x64xf32> to vector<256x64xbf16>
    %8 = vector.shape_cast %7 : vector<256x64xbf16> to vector<16x16x64xbf16>
    %c0_5 = arith.constant 0 : index
    %c0_6 = arith.constant 0 : index
    %9 = vector.load %arg6[%c0_5, %c0_6] : memref<16x64xbf16, #tpu.memory_space<vmem>>, vector<16x64xbf16>
    %10 = vector.shape_cast %9 : vector<16x64xbf16> to vector<1x16x64xbf16>
    %11 = vector.broadcast %10 : vector<1x16x64xbf16> to vector<16x16x64xbf16>
    %12 = arith.addf %8, %11 : vector<16x16x64xbf16>
    %cst_7 = arith.constant 1.000980e-02 : bf16
    %13 = vector.broadcast %cst_7 : bf16 to vector<16x16x64xbf16>
    %14 = arith.mulf %13, %12 : vector<16x16x64xbf16>
    %15 = arith.maximumf %12, %14 : vector<16x16x64xbf16>
    %c0_8 = arith.constant 0 : index
    %c0_9 = arith.constant 0 : index
    %16 = vector.load %arg8[%c0_8, %c0_9] : memref<1x64xf32, #tpu.memory_space<vmem>>, vector<1x64xf32>
    %17 = vector.shape_cast %16 : vector<1x64xf32> to vector<1x1x64xf32>
    %18 = arith.truncf %17 : vector<1x1x64xf32> to vector<1x1x64xbf16>
    %19 = vector.broadcast %18 : vector<1x1x64xbf16> to vector<16x16x64xbf16>
    %20 = arith.mulf %15, %19 : vector<16x16x64xbf16>
    %21 = arith.extf %20 : vector<16x16x64xbf16> to vector<16x16x64xf32>
    %cst_10 = arith.constant dense<0.000000e+00> : vector<16x16xf32>
    %22 = vector.multi_reduction <add>, %21, %cst_10 [2] : vector<16x16x64xf32> to vector<16x16xf32>
    %23 = arith.truncf %22 : vector<16x16xf32> to vector<16x16xbf16>
    %24 = arith.extf %23 : vector<16x16xbf16> to vector<16x16xf32>
    %c0_11 = arith.constant 0 : index
    %c0_12 = arith.constant 0 : index
    %25 = vector.load %arg5[%c0_11, %c0_12] : memref<16x1xf32, #tpu.memory_space<vmem>>, vector<16x1xf32>
    %26 = vector.broadcast %25 : vector<16x1xf32> to vector<16x16xf32>
    %27 = arith.addf %26, %24 : vector<16x16xf32>
    %cst_13 = arith.constant 0.00999999977 : f32
    %28 = vector.broadcast %cst_13 : f32 to vector<16x16xf32>
    %29 = arith.mulf %28, %27 : vector<16x16xf32>
    %30 = arith.maximumf %27, %29 : vector<16x16xf32>
    %c0_14 = arith.constant 0 : index
    %c0_15 = arith.constant 0 : index
    %31 = vector.load %arg3[%c0_14, %c0_15] : memref<16x16xbf16, #tpu.memory_space<vmem>>, vector<16x16xbf16>
    %32 = arith.extf %31 : vector<16x16xbf16> to vector<16x16xf32>
    %cst_16 = arith.constant 0.000000e+00 : f32
    %33 = vector.broadcast %cst_16 : f32 to vector<16x16xf32>
    %34 = arith.cmpf ogt, %32, %33 : vector<16x16xf32>
    %cst_17 = arith.constant -1.000000e+30 : f32
    %35 = vector.broadcast %cst_17 : f32 to vector<16x16xf32>
    %36 = arith.select %34, %30, %35 : vector<16x16xi1>, vector<16x16xf32>
    %c0_18 = arith.constant 0 : index
    %c0_19 = arith.constant 0 : index
    %37 = vector.load %arg15[%c0_18, %c0_19] : memref<16x1xf32, #tpu.memory_space<vmem>>, vector<16x1xf32>
    %cst_20 = arith.constant dense<0xFF800000> : vector<16xf32>
    %38 = vector.multi_reduction <maximumf>, %36, %cst_20 [1] : vector<16x16xf32> to vector<16xf32>
    %39 = vector.shape_cast %38 : vector<16xf32> to vector<16x1xf32>
    %40 = arith.maximumf %37, %39 : vector<16x1xf32>
    %41 = arith.subf %37, %40 : vector<16x1xf32>
    %42 = math.exp %41 : vector<16x1xf32>
    %43 = vector.broadcast %40 : vector<16x1xf32> to vector<16x16xf32>
    %44 = arith.subf %36, %43 : vector<16x16xf32>
    %45 = math.exp %44 : vector<16x16xf32>
    %46 = arith.mulf %45, %32 : vector<16x16xf32>
    %c0_21 = arith.constant 0 : index
    %c0_22 = arith.constant 0 : index
    %47 = vector.load %arg16[%c0_21, %c0_22] : memref<16x1xf32, #tpu.memory_space<vmem>>, vector<16x1xf32>
    %48 = arith.mulf %42, %47 : vector<16x1xf32>
    %cst_23 = arith.constant dense<0.000000e+00> : vector<16xf32>
    %49 = vector.multi_reduction <add>, %46, %cst_23 [1] : vector<16x16xf32> to vector<16xf32>
    %50 = vector.shape_cast %49 : vector<16xf32> to vector<16x1xf32>
    %51 = arith.addf %48, %50 : vector<16x1xf32>
    %c0_24 = arith.constant 0 : index
    %c0_25 = arith.constant 0 : index
    %52 = vector.load %arg16[%c0_24, %c0_25] : memref<16x1xf32, #tpu.memory_space<vmem>>, vector<16x1xf32>
    tpu.vector_store %arg16[%c0_24, %c0_25], %51 {strides = array<i32>} : memref<16x1xf32, #tpu.memory_space<vmem>>, vector<16x1xf32>,
    %53 = vector.shape_cast %46 : vector<16x16xf32> to vector<16x1x16xf32>
    %54 = arith.truncf %53 : vector<16x1x16xf32> to vector<16x1x16xbf16>
    "tpu.trace_start"() <{level = 10 : i32, message = "tqs,tsg->tqg"}> : () -> ()
    %cst_26 = arith.constant dense<0.000000e+00> : vector<16x1x64xf32>
    %55 = tpu.matmul %54, %15, %cst_26 {dimension_numbers = #tpu.dot_dimension_numbers<[2], [1], [1], [2], [0, 0, 0, 1, 1, 2], [0], [0]>} : vector<16x1x16xbf16>, vector<16x16x64xbf16>, vector<16x1x64xf32> -> vector<16x1x64xf32>
    "tpu.trace_stop"() : () -> ()
    %56 = vector.shape_cast %55 : vector<16x1x64xf32> to vector<16x64xf32>
    %c0_27 = arith.constant 0 : index
    %c0_28 = arith.constant 0 : index
    %57 = vector.load %arg17[%c0_27, %c0_28] : memref<16x64xf32, #tpu.memory_space<vmem>>, vector<16x64xf32>
    %58 = vector.broadcast %42 : vector<16x1xf32> to vector<16x64xf32>
    %59 = arith.mulf %58, %57 : vector<16x64xf32>
    %60 = arith.addf %59, %56 : vector<16x64xf32>
    %c0_29 = arith.constant 0 : index
    %c0_30 = arith.constant 0 : index
    %61 = vector.load %arg17[%c0_29, %c0_30] : memref<16x64xf32, #tpu.memory_space<vmem>>, vector<16x64xf32>
    tpu.vector_store %arg17[%c0_29, %c0_30], %60 {strides = array<i32>} : memref<16x64xf32, #tpu.memory_space<vmem>>, vector<16x64xf32>,
    %c0_31 = arith.constant 0 : index
    %c0_32 = arith.constant 0 : index
    %62 = vector.load %arg15[%c0_31, %c0_32] : memref<16x1xf32, #tpu.memory_space<vmem>>, vector<16x1xf32>
    tpu.vector_store %arg15[%c0_31, %c0_32], %40 {strides = array<i32>} : memref<16x1xf32, #tpu.memory_space<vmem>>, vector<16x1xf32>,
    %c0_i32_33 = arith.constant 0 : i32
    %63 = arith.cmpi eq, %arg1, %c0_i32_33 : i32
    %64 = arith.extui %63 : i1 to i32
    %c0_i32_34 = arith.constant 0 : i32
    %65 = arith.cmpi ne, %64, %c0_i32_34 : i32
    scf.if %65 {
      %c0_35 = arith.constant 0 : index
      %c0_36 = arith.constant 0 : index
      %66 = vector.load %arg16[%c0_35, %c0_36] : memref<16x1xf32, #tpu.memory_space<vmem>>, vector<16x1xf32>
      %cst_37 = arith.constant 0.000000e+00 : f32
      %67 = vector.broadcast %cst_37 : f32 to vector<16x1xf32>
      %68 = arith.cmpf ogt, %66, %67 : vector<16x1xf32>
      %cst_38 = arith.constant 1.000000e+00 : f32
      %69 = vector.broadcast %cst_38 : f32 to vector<16x1xf32>
      %70 = arith.select %68, %66, %69 : vector<16x1xi1>, vector<16x1xf32>
      %71 = tpu.reciprocal %70 {approx = true} : vector<16x1xf32> -> vector<16x1xf32>
      %c0_39 = arith.constant 0 : index
      %c0_40 = arith.constant 0 : index
      %72 = vector.load %arg17[%c0_39, %c0_40] : memref<16x64xf32, #tpu.memory_space<vmem>>, vector<16x64xf32>
      %73 = vector.broadcast %71 : vector<16x1xf32> to vector<16x64xf32>
      %74 = arith.mulf %72, %73 : vector<16x64xf32>
      %cst_41 = arith.constant 0.000000e+00 : f32
      %75 = vector.broadcast %cst_41 : f32 to vector<16x1xf32>
      %76 = arith.cmpf ogt, %66, %75 : vector<16x1xf32>
      %77 = arith.extui %76 : vector<16x1xi1> to vector<16x1xi32>
      %78 = arith.sitofp %77 : vector<16x1xi32> to vector<16x1xf32>
      %c0_42 = arith.constant 0 : index
      %c0_43 = arith.constant 0 : index
      %79 = vector.load %arg9[%c0_42, %c0_43] : memref<64x64xbf16, #tpu.memory_space<vmem>>, vector<64x64xbf16>
      %80 = arith.truncf %74 : vector<16x64xf32> to vector<16x64xbf16>
      %cst_44 = arith.constant dense<0.000000e+00> : vector<16x64xf32>
      %81 = tpu.matmul %80, %79, %cst_44 {dimension_numbers = #tpu.dot_dimension_numbers<[1], [0], [0], [1], [0, 0, 1, 1], [], []>} : vector<16x64xbf16>, vector<64x64xbf16>, vector<16x64xf32> -> vector<16x64xf32>
      %c0_45 = arith.constant 0 : index
      %c0_46 = arith.constant 0 : index
      %82 = vector.load %arg10[%c0_45, %c0_46] : memref<1x64xf32, #tpu.memory_space<vmem>>, vector<1x64xf32>
      %83 = vector.broadcast %78 : vector<16x1xf32> to vector<16x64xf32>
      %84 = vector.broadcast %82 : vector<1x64xf32> to vector<16x64xf32>
      %85 = arith.mulf %83, %84 : vector<16x64xf32>
      %86 = arith.addf %81, %85 : vector<16x64xf32>
      %cst_47 = arith.constant 0.000000e+00 : f32
      %87 = vector.broadcast %cst_47 : f32 to vector<16x64xf32>
      %88 = arith.cmpf ogt, %86, %87 : vector<16x64xf32>
      %cst_48 = arith.constant 0.000000e+00 : f32
      %89 = vector.broadcast %cst_48 : f32 to vector<16x64xf32>
      %90 = arith.minimumf %86, %89 : vector<16x64xf32>
      %91 = math.exp %90 : vector<16x64xf32>
      %cst_49 = arith.constant 1.000000e+00 : f32
      %92 = vector.broadcast %cst_49 : f32 to vector<16x64xf32>
      %93 = arith.subf %91, %92 : vector<16x64xf32>
      %94 = arith.select %88, %86, %93 : vector<16x64xi1>, vector<16x64xf32>
      %c0_50 = arith.constant 0 : index
      %c0_51 = arith.constant 0 : index
      %95 = vector.load %arg4[%c0_50, %c0_51] : memref<16x64xf32, #tpu.memory_space<vmem>>, vector<16x64xf32>
      %c0_52 = arith.constant 0 : index
      %c0_53 = arith.constant 0 : index
      %c0_54 = arith.constant 0 : index
      %96 = vector.load %arg11[%c0_52, %c0_53, %c0_54] : memref<3x64x64xbf16, #tpu.memory_space<vmem>>, vector<1x64x64xbf16>
      %97 = vector.shape_cast %96 : vector<1x64x64xbf16> to vector<64x64xbf16>
      %98 = arith.truncf %94 : vector<16x64xf32> to vector<16x64xbf16>
      %cst_55 = arith.constant dense<0.000000e+00> : vector<16x64xf32>
      %99 = tpu.matmul %98, %97, %cst_55 {dimension_numbers = #tpu.dot_dimension_numbers<[1], [0], [0], [1], [0, 0, 1, 1], [], []>} : vector<16x64xbf16>, vector<64x64xbf16>, vector<16x64xf32> -> vector<16x64xf32>
      %c0_56 = arith.constant 0 : index
      %c0_57 = arith.constant 0 : index
      %c0_58 = arith.constant 0 : index
      %100 = vector.load %arg12[%c0_56, %c0_57, %c0_58] : memref<3x64x64xbf16, #tpu.memory_space<vmem>>, vector<1x64x64xbf16>
      %101 = vector.shape_cast %100 : vector<1x64x64xbf16> to vector<64x64xbf16>
      %102 = arith.truncf %95 : vector<16x64xf32> to vector<16x64xbf16>
      %cst_59 = arith.constant dense<0.000000e+00> : vector<16x64xf32>
      %103 = tpu.matmul %102, %101, %cst_59 {dimension_numbers = #tpu.dot_dimension_numbers<[1], [0], [0], [1], [0, 0, 1, 1], [], []>} : vector<16x64xbf16>, vector<64x64xbf16>, vector<16x64xf32> -> vector<16x64xf32>
      %104 = arith.addf %99, %103 : vector<16x64xf32>
      %c0_60 = arith.constant 0 : index
      %c0_61 = arith.constant 0 : index
      %c0_62 = arith.constant 0 : index
      %105 = vector.load %arg13[%c0_60, %c0_61, %c0_62] : memref<4x1x64xf32, #tpu.memory_space<vmem>>, vector<1x1x64xf32>
      %106 = vector.shape_cast %105 : vector<1x1x64xf32> to vector<1x64xf32>
      %107 = vector.broadcast %106 : vector<1x64xf32> to vector<16x64xf32>
      %108 = arith.addf %104, %107 : vector<16x64xf32>
      %109 = arith.negf %108 : vector<16x64xf32>
      %110 = math.exp %109 : vector<16x64xf32>
      %cst_63 = arith.constant 1.000000e+00 : f32
      %111 = vector.broadcast %cst_63 : f32 to vector<16x64xf32>
      %112 = arith.addf %111, %110 : vector<16x64xf32>
      %113 = arith.divf %111, %112 : vector<16x64xf32>
      %c1 = arith.constant 1 : index
      %c0_64 = arith.constant 0 : index
      %c0_65 = arith.constant 0 : index
      %114 = vector.load %arg11[%c1, %c0_64, %c0_65] : memref<3x64x64xbf16, #tpu.memory_space<vmem>>, vector<1x64x64xbf16>
      %115 = vector.shape_cast %114 : vector<1x64x64xbf16> to vector<64x64xbf16>
      %116 = arith.truncf %94 : vector<16x64xf32> to vector<16x64xbf16>
      %cst_66 = arith.constant dense<0.000000e+00> : vector<16x64xf32>
      %117 = tpu.matmul %116, %115, %cst_66 {dimension_numbers = #tpu.dot_dimension_numbers<[1], [0], [0], [1], [0, 0, 1, 1], [], []>} : vector<16x64xbf16>, vector<64x64xbf16>, vector<16x64xf32> -> vector<16x64xf32>
      %c1_67 = arith.constant 1 : index
      %c0_68 = arith.constant 0 : index
      %c0_69 = arith.constant 0 : index
      %118 = vector.load %arg12[%c1_67, %c0_68, %c0_69] : memref<3x64x64xbf16, #tpu.memory_space<vmem>>, vector<1x64x64xbf16>
      %119 = vector.shape_cast %118 : vector<1x64x64xbf16> to vector<64x64xbf16>
      %120 = arith.truncf %95 : vector<16x64xf32> to vector<16x64xbf16>
      %cst_70 = arith.constant dense<0.000000e+00> : vector<16x64xf32>
      %121 = tpu.matmul %120, %119, %cst_70 {dimension_numbers = #tpu.dot_dimension_numbers<[1], [0], [0], [1], [0, 0, 1, 1], [], []>} : vector<16x64xbf16>, vector<64x64xbf16>, vector<16x64xf32> -> vector<16x64xf32>
      %122 = arith.addf %117, %121 : vector<16x64xf32>
      %c1_71 = arith.constant 1 : index
      %c0_72 = arith.constant 0 : index
      %c0_73 = arith.constant 0 : index
      %123 = vector.load %arg13[%c1_71, %c0_72, %c0_73] : memref<4x1x64xf32, #tpu.memory_space<vmem>>, vector<1x1x64xf32>
      %124 = vector.shape_cast %123 : vector<1x1x64xf32> to vector<1x64xf32>
      %125 = vector.broadcast %124 : vector<1x64xf32> to vector<16x64xf32>
      %126 = arith.addf %122, %125 : vector<16x64xf32>
      %127 = arith.negf %126 : vector<16x64xf32>
      %128 = math.exp %127 : vector<16x64xf32>
      %cst_74 = arith.constant 1.000000e+00 : f32
      %129 = vector.broadcast %cst_74 : f32 to vector<16x64xf32>
      %130 = arith.addf %129, %128 : vector<16x64xf32>
      %131 = arith.divf %129, %130 : vector<16x64xf32>
      %c2 = arith.constant 2 : index
      %c0_75 = arith.constant 0 : index
      %c0_76 = arith.constant 0 : index
      %132 = vector.load %arg11[%c2, %c0_75, %c0_76] : memref<3x64x64xbf16, #tpu.memory_space<vmem>>, vector<1x64x64xbf16>
      %133 = vector.shape_cast %132 : vector<1x64x64xbf16> to vector<64x64xbf16>
      %134 = arith.truncf %94 : vector<16x64xf32> to vector<16x64xbf16>
      %cst_77 = arith.constant dense<0.000000e+00> : vector<16x64xf32>
      %135 = tpu.matmul %134, %133, %cst_77 {dimension_numbers = #tpu.dot_dimension_numbers<[1], [0], [0], [1], [0, 0, 1, 1], [], []>} : vector<16x64xbf16>, vector<64x64xbf16>, vector<16x64xf32> -> vector<16x64xf32>
      %c2_78 = arith.constant 2 : index
      %c0_79 = arith.constant 0 : index
      %c0_80 = arith.constant 0 : index
      %136 = vector.load %arg13[%c2_78, %c0_79, %c0_80] : memref<4x1x64xf32, #tpu.memory_space<vmem>>, vector<1x1x64xf32>
      %137 = vector.shape_cast %136 : vector<1x1x64xf32> to vector<1x64xf32>
      %138 = vector.broadcast %137 : vector<1x64xf32> to vector<16x64xf32>
      %139 = arith.addf %135, %138 : vector<16x64xf32>
      %c2_81 = arith.constant 2 : index
      %c0_82 = arith.constant 0 : index
      %c0_83 = arith.constant 0 : index
      %140 = vector.load %arg12[%c2_81, %c0_82, %c0_83] : memref<3x64x64xbf16, #tpu.memory_space<vmem>>, vector<1x64x64xbf16>
      %141 = vector.shape_cast %140 : vector<1x64x64xbf16> to vector<64x64xbf16>
      %142 = arith.truncf %95 : vector<16x64xf32> to vector<16x64xbf16>
      %cst_84 = arith.constant dense<0.000000e+00> : vector<16x64xf32>
      %143 = tpu.matmul %142, %141, %cst_84 {dimension_numbers = #tpu.dot_dimension_numbers<[1], [0], [0], [1], [0, 0, 1, 1], [], []>} : vector<16x64xbf16>, vector<64x64xbf16>, vector<16x64xf32> -> vector<16x64xf32>
      %c3 = arith.constant 3 : index
      %c0_85 = arith.constant 0 : index
      %c0_86 = arith.constant 0 : index
      %144 = vector.load %arg13[%c3, %c0_85, %c0_86] : memref<4x1x64xf32, #tpu.memory_space<vmem>>, vector<1x1x64xf32>
      %145 = vector.shape_cast %144 : vector<1x1x64xf32> to vector<1x64xf32>
      %146 = vector.broadcast %145 : vector<1x64xf32> to vector<16x64xf32>
      %147 = arith.addf %143, %146 : vector<16x64xf32>
      %148 = arith.mulf %113, %147 : vector<16x64xf32>
      %149 = arith.addf %139, %148 : vector<16x64xf32>
      %150 = math.tanh %149 : vector<16x64xf32>
      %cst_87 = arith.constant 1.000000e+00 : f32
      %151 = vector.broadcast %cst_87 : f32 to vector<16x64xf32>
      %152 = arith.subf %151, %131 : vector<16x64xf32>
      %153 = arith.mulf %152, %150 : vector<16x64xf32>
      %154 = arith.mulf %131, %95 : vector<16x64xf32>
      %155 = arith.addf %153, %154 : vector<16x64xf32>
      %cst_88 = arith.constant 0.000000e+00 : f32
      %156 = vector.broadcast %cst_88 : f32 to vector<16x64xf32>
      %157 = arith.maximumf %155, %156 : vector<16x64xf32>
      %c0_89 = arith.constant 0 : index
      %c0_90 = arith.constant 0 : index
      %158 = vector.load %arg14[%c0_89, %c0_90] : memref<16x64xf32, #tpu.memory_space<vmem>>, vector<16x64xf32>
      tpu.vector_store %arg14[%c0_89, %c0_90], %157 {strides = array<i32>} : memref<16x64xf32, #tpu.memory_space<vmem>>, vector<16x64xf32>,
    } else {
    }
    return
  }
  func.func @transform_0(%arg0: i32, %arg1: i32) -> (i32, i32, i32) {
    %c0_i32 = arith.constant 0 : i32
    %c0_i32_0 = arith.constant 0 : i32
    return %arg0, %arg1, %c0_i32 : i32, i32, i32
  }
  func.func @transform_1(%arg0: i32, %arg1: i32) -> (i32, i32) {
    %c0_i32 = arith.constant 0 : i32
    return %arg0, %arg1 : i32, i32
  }
  func.func @transform_2(%arg0: i32, %arg1: i32) -> (i32, i32) {
    %c0_i32 = arith.constant 0 : i32
    %c0_i32_0 = arith.constant 0 : i32
    return %arg0, %c0_i32 : i32, i32
  }
  func.func @transform_3(%arg0: i32, %arg1: i32) -> (i32, i32) {
    %c0_i32 = arith.constant 0 : i32
    %c0_i32_0 = arith.constant 0 : i32
    return %arg0, %c0_i32 : i32, i32
  }
  func.func @transform_4(%arg0: i32, %arg1: i32) -> (i32, i32) {
    %c0_i32 = arith.constant 0 : i32
    %c0_i32_0 = arith.constant 0 : i32
    return %arg1, %c0_i32 : i32, i32
  }
  func.func @transform_5(%arg0: i32, %arg1: i32) -> (i32, i32) {
    %c0_i32 = arith.constant 0 : i32
    %c0_i32_0 = arith.constant 0 : i32
    %c0_i32_1 = arith.constant 0 : i32
    return %c0_i32, %c0_i32_0 : i32, i32
  }
  func.func @transform_6(%arg0: i32, %arg1: i32) -> (i32, i32) {
    %c0_i32 = arith.constant 0 : i32
    %c0_i32_0 = arith.constant 0 : i32
    %c0_i32_1 = arith.constant 0 : i32
    return %c0_i32, %c0_i32_0 : i32, i32
  }
  func.func @transform_7(%arg0: i32, %arg1: i32) -> (i32, i32) {
    %c0_i32 = arith.constant 0 : i32
    %c0_i32_0 = arith.constant 0 : i32
    %c0_i32_1 = arith.constant 0 : i32
    return %c0_i32, %c0_i32_0 : i32, i32
  }
  func.func @transform_8(%arg0: i32, %arg1: i32) -> (i32, i32) {
    %c0_i32 = arith.constant 0 : i32
    %c0_i32_0 = arith.constant 0 : i32
    %c0_i32_1 = arith.constant 0 : i32
    return %c0_i32, %c0_i32_0 : i32, i32
  }
  func.func @transform_9(%arg0: i32, %arg1: i32) -> (i32, i32, i32) {
    %c0_i32 = arith.constant 0 : i32
    %c0_i32_0 = arith.constant 0 : i32
    %c0_i32_1 = arith.constant 0 : i32
    %c0_i32_2 = arith.constant 0 : i32
    return %c0_i32, %c0_i32_0, %c0_i32_1 : i32, i32, i32
  }
  func.func @transform_10(%arg0: i32, %arg1: i32) -> (i32, i32, i32) {
    %c0_i32 = arith.constant 0 : i32
    %c0_i32_0 = arith.constant 0 : i32
    %c0_i32_1 = arith.constant 0 : i32
    %c0_i32_2 = arith.constant 0 : i32
    return %c0_i32, %c0_i32_0, %c0_i32_1 : i32, i32, i32
  }
  func.func @transform_11(%arg0: i32, %arg1: i32) -> (i32, i32, i32) {
    %c0_i32 = arith.constant 0 : i32
    %c0_i32_0 = arith.constant 0 : i32
    %c0_i32_1 = arith.constant 0 : i32
    %c0_i32_2 = arith.constant 0 : i32
    return %c0_i32, %c0_i32_0, %c0_i32_1 : i32, i32, i32
  }
  func.func @transform_12(%arg0: i32, %arg1: i32) -> (i32, i32) {
    %c0_i32 = arith.constant 0 : i32
    %c0_i32_0 = arith.constant 0 : i32
    return %arg0, %c0_i32 : i32, i32
  }
}

module attributes {stable_mosaic.version = 11 : i64} {
  func.func @_gnn_layer_kernel(%arg0: i32, %arg1: memref<16x64xf32, #tpu.memory_space<vmem>>, %arg2: memref<16x16xbf16, #tpu.memory_space<vmem>>, %arg3: memref<1x16xf32, #tpu.memory_space<vmem>>, %arg4: memref<16x64xbf16, #tpu.memory_space<vmem>>, %arg5: memref<64x1xbf16, #tpu.memory_space<vmem>>, %arg6: memref<1x1xf32, #tpu.memory_space<vmem>>, %arg7: memref<3x64x64xbf16, #tpu.memory_space<vmem>>, %arg8: memref<3x64x64xbf16, #tpu.memory_space<vmem>>, %arg9: memref<4x1x64xf32, #tpu.memory_space<vmem>>, %arg10: memref<16x64xf32, #tpu.memory_space<vmem>>) attributes {dimension_semantics = [#tpu.dimension_semantics<parallel>], iteration_bounds = array<i64: 1>, scalar_prefetch = 0 : i64, scratch_operands = 0 : i64, tpu.core_type = #tpu.core_type<tc>, window_params = [{transform_indices = @transform_0, window_bounds = array<i64: 16, 64>}, {transform_indices = @transform_1, window_bounds = array<i64: 16, 16>}, {pipeline_mode = #tpu.pipeline_mode<synchronous>, transform_indices = @transform_2, window_bounds = array<i64: 1, 16>}, {pipeline_mode = #tpu.pipeline_mode<synchronous>, transform_indices = @transform_3, window_bounds = array<i64: 16, 64>}, {pipeline_mode = #tpu.pipeline_mode<synchronous>, transform_indices = @transform_4, window_bounds = array<i64: 64, 1>}, {pipeline_mode = #tpu.pipeline_mode<synchronous>, transform_indices = @transform_5, window_bounds = array<i64: 1, 1>}, {pipeline_mode = #tpu.pipeline_mode<synchronous>, transform_indices = @transform_6, window_bounds = array<i64: 3, 64, 64>}, {pipeline_mode = #tpu.pipeline_mode<synchronous>, transform_indices = @transform_7, window_bounds = array<i64: 3, 64, 64>}, {pipeline_mode = #tpu.pipeline_mode<synchronous>, transform_indices = @transform_8, window_bounds = array<i64: 4, 1, 64>}, {transform_indices = @transform_9, window_bounds = array<i64: 16, 64>}]} {
    %c0 = arith.constant 0 : index
    %c0_0 = arith.constant 0 : index
    %0 = vector.load %arg1[%c0, %c0_0] : memref<16x64xf32, #tpu.memory_space<vmem>>, vector<16x64xf32>
    %c0_1 = arith.constant 0 : index
    %c0_2 = arith.constant 0 : index
    %1 = vector.load %arg5[%c0_1, %c0_2] : memref<64x1xbf16, #tpu.memory_space<vmem>>, vector<64x1xbf16>
    %2 = arith.truncf %0 : vector<16x64xf32> to vector<16x64xbf16>
    %cst = arith.constant dense<0.000000e+00> : vector<16x1xf32>
    %3 = tpu.matmul %2, %1, %cst {dimension_numbers = #tpu.dot_dimension_numbers<[1], [0], [0], [1], [0, 0, 1, 1], [], []>} : vector<16x64xbf16>, vector<64x1xbf16>, vector<16x1xf32> -> vector<16x1xf32>
    %c0_3 = arith.constant 0 : index
    %c0_4 = arith.constant 0 : index
    %4 = vector.load %arg6[%c0_3, %c0_4] : memref<1x1xf32, #tpu.memory_space<vmem>>, vector<1x1xf32>
    %5 = vector.broadcast %4 : vector<1x1xf32> to vector<16x1xf32>
    %6 = arith.addf %3, %5 : vector<16x1xf32>
    %c0_5 = arith.constant 0 : index
    %c0_6 = arith.constant 0 : index
    %7 = vector.load %arg3[%c0_5, %c0_6] : memref<1x16xf32, #tpu.memory_space<vmem>>, vector<1x16xf32>
    %8 = vector.broadcast %6 : vector<16x1xf32> to vector<16x16xf32>
    %9 = vector.broadcast %7 : vector<1x16xf32> to vector<16x16xf32>
    %10 = arith.addf %8, %9 : vector<16x16xf32>
    %cst_7 = arith.constant 0.00999999977 : f32
    %11 = vector.broadcast %cst_7 : f32 to vector<16x16xf32>
    %12 = arith.mulf %11, %10 : vector<16x16xf32>
    %13 = arith.maximumf %10, %12 : vector<16x16xf32>
    %c0_8 = arith.constant 0 : index
    %c0_9 = arith.constant 0 : index
    %14 = vector.load %arg2[%c0_8, %c0_9] : memref<16x16xbf16, #tpu.memory_space<vmem>>, vector<16x16xbf16>
    %15 = arith.extf %14 : vector<16x16xbf16> to vector<16x16xf32>
    %cst_10 = arith.constant 0.000000e+00 : f32
    %16 = vector.broadcast %cst_10 : f32 to vector<16x16xf32>
    %17 = arith.cmpf ogt, %15, %16 : vector<16x16xf32>
    %cst_11 = arith.constant -1.000000e+30 : f32
    %18 = vector.broadcast %cst_11 : f32 to vector<16x16xf32>
    %19 = arith.select %17, %13, %18 : vector<16x16xi1>, vector<16x16xf32>
    %cst_12 = arith.constant dense<0xFF800000> : vector<16xf32>
    %20 = vector.multi_reduction <maximumf>, %19, %cst_12 [1] : vector<16x16xf32> to vector<16xf32>
    %21 = vector.shape_cast %20 : vector<16xf32> to vector<16x1xf32>
    %22 = vector.broadcast %21 : vector<16x1xf32> to vector<16x16xf32>
    %23 = arith.subf %19, %22 : vector<16x16xf32>
    %24 = math.exp %23 : vector<16x16xf32>
    %25 = arith.mulf %24, %15 : vector<16x16xf32>
    %cst_13 = arith.constant dense<0.000000e+00> : vector<16xf32>
    %26 = vector.multi_reduction <add>, %25, %cst_13 [1] : vector<16x16xf32> to vector<16xf32>
    %27 = vector.shape_cast %26 : vector<16xf32> to vector<16x1xf32>
    %cst_14 = arith.constant 0.000000e+00 : f32
    %28 = vector.broadcast %cst_14 : f32 to vector<16x1xf32>
    %29 = arith.cmpf ogt, %27, %28 : vector<16x1xf32>
    %cst_15 = arith.constant 1.000000e+00 : f32
    %30 = vector.broadcast %cst_15 : f32 to vector<16x1xf32>
    %31 = arith.select %29, %27, %30 : vector<16x1xi1>, vector<16x1xf32>
    %32 = tpu.reciprocal %31 {approx = true} : vector<16x1xf32> -> vector<16x1xf32>
    %33 = vector.broadcast %32 : vector<16x1xf32> to vector<16x16xf32>
    %34 = arith.mulf %25, %33 : vector<16x16xf32>
    %c0_16 = arith.constant 0 : index
    %c0_17 = arith.constant 0 : index
    %35 = vector.load %arg4[%c0_16, %c0_17] : memref<16x64xbf16, #tpu.memory_space<vmem>>, vector<16x64xbf16>
    %36 = arith.truncf %34 : vector<16x16xf32> to vector<16x16xbf16>
    %cst_18 = arith.constant dense<0.000000e+00> : vector<16x64xf32>
    %37 = tpu.matmul %36, %35, %cst_18 {dimension_numbers = #tpu.dot_dimension_numbers<[1], [0], [0], [1], [0, 0, 1, 1], [], []>} : vector<16x16xbf16>, vector<16x64xbf16>, vector<16x64xf32> -> vector<16x64xf32>
    %cst_19 = arith.constant 0.000000e+00 : f32
    %38 = vector.broadcast %cst_19 : f32 to vector<16x64xf32>
    %39 = arith.cmpf ogt, %37, %38 : vector<16x64xf32>
    %cst_20 = arith.constant 0.000000e+00 : f32
    %40 = vector.broadcast %cst_20 : f32 to vector<16x64xf32>
    %41 = arith.minimumf %37, %40 : vector<16x64xf32>
    %42 = math.exp %41 : vector<16x64xf32>
    %cst_21 = arith.constant 1.000000e+00 : f32
    %43 = vector.broadcast %cst_21 : f32 to vector<16x64xf32>
    %44 = arith.subf %42, %43 : vector<16x64xf32>
    %45 = arith.select %39, %37, %44 : vector<16x64xi1>, vector<16x64xf32>
    %c0_22 = arith.constant 0 : index
    %c0_23 = arith.constant 0 : index
    %c0_24 = arith.constant 0 : index
    %46 = vector.load %arg7[%c0_22, %c0_23, %c0_24] : memref<3x64x64xbf16, #tpu.memory_space<vmem>>, vector<1x64x64xbf16>
    %47 = vector.shape_cast %46 : vector<1x64x64xbf16> to vector<64x64xbf16>
    %48 = arith.truncf %45 : vector<16x64xf32> to vector<16x64xbf16>
    %cst_25 = arith.constant dense<0.000000e+00> : vector<16x64xf32>
    %49 = tpu.matmul %48, %47, %cst_25 {dimension_numbers = #tpu.dot_dimension_numbers<[1], [0], [0], [1], [0, 0, 1, 1], [], []>} : vector<16x64xbf16>, vector<64x64xbf16>, vector<16x64xf32> -> vector<16x64xf32>
    %c0_26 = arith.constant 0 : index
    %c0_27 = arith.constant 0 : index
    %c0_28 = arith.constant 0 : index
    %50 = vector.load %arg8[%c0_26, %c0_27, %c0_28] : memref<3x64x64xbf16, #tpu.memory_space<vmem>>, vector<1x64x64xbf16>
    %51 = vector.shape_cast %50 : vector<1x64x64xbf16> to vector<64x64xbf16>
    %52 = arith.truncf %0 : vector<16x64xf32> to vector<16x64xbf16>
    %cst_29 = arith.constant dense<0.000000e+00> : vector<16x64xf32>
    %53 = tpu.matmul %52, %51, %cst_29 {dimension_numbers = #tpu.dot_dimension_numbers<[1], [0], [0], [1], [0, 0, 1, 1], [], []>} : vector<16x64xbf16>, vector<64x64xbf16>, vector<16x64xf32> -> vector<16x64xf32>
    %54 = arith.addf %49, %53 : vector<16x64xf32>
    %c0_30 = arith.constant 0 : index
    %c0_31 = arith.constant 0 : index
    %c0_32 = arith.constant 0 : index
    %55 = vector.load %arg9[%c0_30, %c0_31, %c0_32] : memref<4x1x64xf32, #tpu.memory_space<vmem>>, vector<1x1x64xf32>
    %56 = vector.shape_cast %55 : vector<1x1x64xf32> to vector<1x64xf32>
    %57 = vector.broadcast %56 : vector<1x64xf32> to vector<16x64xf32>
    %58 = arith.addf %54, %57 : vector<16x64xf32>
    %59 = arith.negf %58 : vector<16x64xf32>
    %60 = math.exp %59 : vector<16x64xf32>
    %cst_33 = arith.constant 1.000000e+00 : f32
    %61 = vector.broadcast %cst_33 : f32 to vector<16x64xf32>
    %62 = arith.addf %61, %60 : vector<16x64xf32>
    %63 = arith.divf %61, %62 : vector<16x64xf32>
    %c1 = arith.constant 1 : index
    %c0_34 = arith.constant 0 : index
    %c0_35 = arith.constant 0 : index
    %64 = vector.load %arg7[%c1, %c0_34, %c0_35] : memref<3x64x64xbf16, #tpu.memory_space<vmem>>, vector<1x64x64xbf16>
    %65 = vector.shape_cast %64 : vector<1x64x64xbf16> to vector<64x64xbf16>
    %66 = arith.truncf %45 : vector<16x64xf32> to vector<16x64xbf16>
    %cst_36 = arith.constant dense<0.000000e+00> : vector<16x64xf32>
    %67 = tpu.matmul %66, %65, %cst_36 {dimension_numbers = #tpu.dot_dimension_numbers<[1], [0], [0], [1], [0, 0, 1, 1], [], []>} : vector<16x64xbf16>, vector<64x64xbf16>, vector<16x64xf32> -> vector<16x64xf32>
    %c1_37 = arith.constant 1 : index
    %c0_38 = arith.constant 0 : index
    %c0_39 = arith.constant 0 : index
    %68 = vector.load %arg8[%c1_37, %c0_38, %c0_39] : memref<3x64x64xbf16, #tpu.memory_space<vmem>>, vector<1x64x64xbf16>
    %69 = vector.shape_cast %68 : vector<1x64x64xbf16> to vector<64x64xbf16>
    %70 = arith.truncf %0 : vector<16x64xf32> to vector<16x64xbf16>
    %cst_40 = arith.constant dense<0.000000e+00> : vector<16x64xf32>
    %71 = tpu.matmul %70, %69, %cst_40 {dimension_numbers = #tpu.dot_dimension_numbers<[1], [0], [0], [1], [0, 0, 1, 1], [], []>} : vector<16x64xbf16>, vector<64x64xbf16>, vector<16x64xf32> -> vector<16x64xf32>
    %72 = arith.addf %67, %71 : vector<16x64xf32>
    %c1_41 = arith.constant 1 : index
    %c0_42 = arith.constant 0 : index
    %c0_43 = arith.constant 0 : index
    %73 = vector.load %arg9[%c1_41, %c0_42, %c0_43] : memref<4x1x64xf32, #tpu.memory_space<vmem>>, vector<1x1x64xf32>
    %74 = vector.shape_cast %73 : vector<1x1x64xf32> to vector<1x64xf32>
    %75 = vector.broadcast %74 : vector<1x64xf32> to vector<16x64xf32>
    %76 = arith.addf %72, %75 : vector<16x64xf32>
    %77 = arith.negf %76 : vector<16x64xf32>
    %78 = math.exp %77 : vector<16x64xf32>
    %cst_44 = arith.constant 1.000000e+00 : f32
    %79 = vector.broadcast %cst_44 : f32 to vector<16x64xf32>
    %80 = arith.addf %79, %78 : vector<16x64xf32>
    %81 = arith.divf %79, %80 : vector<16x64xf32>
    %c2 = arith.constant 2 : index
    %c0_45 = arith.constant 0 : index
    %c0_46 = arith.constant 0 : index
    %82 = vector.load %arg7[%c2, %c0_45, %c0_46] : memref<3x64x64xbf16, #tpu.memory_space<vmem>>, vector<1x64x64xbf16>
    %83 = vector.shape_cast %82 : vector<1x64x64xbf16> to vector<64x64xbf16>
    %84 = arith.truncf %45 : vector<16x64xf32> to vector<16x64xbf16>
    %cst_47 = arith.constant dense<0.000000e+00> : vector<16x64xf32>
    %85 = tpu.matmul %84, %83, %cst_47 {dimension_numbers = #tpu.dot_dimension_numbers<[1], [0], [0], [1], [0, 0, 1, 1], [], []>} : vector<16x64xbf16>, vector<64x64xbf16>, vector<16x64xf32> -> vector<16x64xf32>
    %c2_48 = arith.constant 2 : index
    %c0_49 = arith.constant 0 : index
    %c0_50 = arith.constant 0 : index
    %86 = vector.load %arg9[%c2_48, %c0_49, %c0_50] : memref<4x1x64xf32, #tpu.memory_space<vmem>>, vector<1x1x64xf32>
    %87 = vector.shape_cast %86 : vector<1x1x64xf32> to vector<1x64xf32>
    %88 = vector.broadcast %87 : vector<1x64xf32> to vector<16x64xf32>
    %89 = arith.addf %85, %88 : vector<16x64xf32>
    %c2_51 = arith.constant 2 : index
    %c0_52 = arith.constant 0 : index
    %c0_53 = arith.constant 0 : index
    %90 = vector.load %arg8[%c2_51, %c0_52, %c0_53] : memref<3x64x64xbf16, #tpu.memory_space<vmem>>, vector<1x64x64xbf16>
    %91 = vector.shape_cast %90 : vector<1x64x64xbf16> to vector<64x64xbf16>
    %92 = arith.truncf %0 : vector<16x64xf32> to vector<16x64xbf16>
    %cst_54 = arith.constant dense<0.000000e+00> : vector<16x64xf32>
    %93 = tpu.matmul %92, %91, %cst_54 {dimension_numbers = #tpu.dot_dimension_numbers<[1], [0], [0], [1], [0, 0, 1, 1], [], []>} : vector<16x64xbf16>, vector<64x64xbf16>, vector<16x64xf32> -> vector<16x64xf32>
    %c3 = arith.constant 3 : index
    %c0_55 = arith.constant 0 : index
    %c0_56 = arith.constant 0 : index
    %94 = vector.load %arg9[%c3, %c0_55, %c0_56] : memref<4x1x64xf32, #tpu.memory_space<vmem>>, vector<1x1x64xf32>
    %95 = vector.shape_cast %94 : vector<1x1x64xf32> to vector<1x64xf32>
    %96 = vector.broadcast %95 : vector<1x64xf32> to vector<16x64xf32>
    %97 = arith.addf %93, %96 : vector<16x64xf32>
    %98 = arith.mulf %63, %97 : vector<16x64xf32>
    %99 = arith.addf %89, %98 : vector<16x64xf32>
    %100 = math.tanh %99 : vector<16x64xf32>
    %cst_57 = arith.constant 1.000000e+00 : f32
    %101 = vector.broadcast %cst_57 : f32 to vector<16x64xf32>
    %102 = arith.subf %101, %81 : vector<16x64xf32>
    %103 = arith.mulf %102, %100 : vector<16x64xf32>
    %104 = arith.mulf %81, %0 : vector<16x64xf32>
    %105 = arith.addf %103, %104 : vector<16x64xf32>
    %cst_58 = arith.constant 0.000000e+00 : f32
    %106 = vector.broadcast %cst_58 : f32 to vector<16x64xf32>
    %107 = arith.maximumf %105, %106 : vector<16x64xf32>
    %c0_59 = arith.constant 0 : index
    %c0_60 = arith.constant 0 : index
    %108 = vector.load %arg10[%c0_59, %c0_60] : memref<16x64xf32, #tpu.memory_space<vmem>>, vector<16x64xf32>
    tpu.vector_store %arg10[%c0_59, %c0_60], %107 {strides = array<i32>} : memref<16x64xf32, #tpu.memory_space<vmem>>, vector<16x64xf32>,
    return
  }
  func.func @transform_0(%arg0: i32) -> (i32, i32) {
    %c0_i32 = arith.constant 0 : i32
    %c0_i32_0 = arith.constant 0 : i32
    return %arg0, %c0_i32 : i32, i32
  }
  func.func @transform_1(%arg0: i32) -> (i32, i32) {
    %c0_i32 = arith.constant 0 : i32
    %c0_i32_0 = arith.constant 0 : i32
    return %arg0, %c0_i32 : i32, i32
  }
  func.func @transform_2(%arg0: i32) -> (i32, i32) {
    %c0_i32 = arith.constant 0 : i32
    %c0_i32_0 = arith.constant 0 : i32
    %c0_i32_1 = arith.constant 0 : i32
    return %c0_i32, %c0_i32_0 : i32, i32
  }
  func.func @transform_3(%arg0: i32) -> (i32, i32) {
    %c0_i32 = arith.constant 0 : i32
    %c0_i32_0 = arith.constant 0 : i32
    %c0_i32_1 = arith.constant 0 : i32
    return %c0_i32, %c0_i32_0 : i32, i32
  }
  func.func @transform_4(%arg0: i32) -> (i32, i32) {
    %c0_i32 = arith.constant 0 : i32
    %c0_i32_0 = arith.constant 0 : i32
    %c0_i32_1 = arith.constant 0 : i32
    return %c0_i32, %c0_i32_0 : i32, i32
  }
  func.func @transform_5(%arg0: i32) -> (i32, i32) {
    %c0_i32 = arith.constant 0 : i32
    %c0_i32_0 = arith.constant 0 : i32
    %c0_i32_1 = arith.constant 0 : i32
    return %c0_i32, %c0_i32_0 : i32, i32
  }
  func.func @transform_6(%arg0: i32) -> (i32, i32, i32) {
    %c0_i32 = arith.constant 0 : i32
    %c0_i32_0 = arith.constant 0 : i32
    %c0_i32_1 = arith.constant 0 : i32
    %c0_i32_2 = arith.constant 0 : i32
    return %c0_i32, %c0_i32_0, %c0_i32_1 : i32, i32, i32
  }
  func.func @transform_7(%arg0: i32) -> (i32, i32, i32) {
    %c0_i32 = arith.constant 0 : i32
    %c0_i32_0 = arith.constant 0 : i32
    %c0_i32_1 = arith.constant 0 : i32
    %c0_i32_2 = arith.constant 0 : i32
    return %c0_i32, %c0_i32_0, %c0_i32_1 : i32, i32, i32
  }
  func.func @transform_8(%arg0: i32) -> (i32, i32, i32) {
    %c0_i32 = arith.constant 0 : i32
    %c0_i32_0 = arith.constant 0 : i32
    %c0_i32_1 = arith.constant 0 : i32
    %c0_i32_2 = arith.constant 0 : i32
    return %c0_i32, %c0_i32_0, %c0_i32_1 : i32, i32, i32
  }
  func.func @transform_9(%arg0: i32) -> (i32, i32) {
    %c0_i32 = arith.constant 0 : i32
    %c0_i32_0 = arith.constant 0 : i32
    return %arg0, %c0_i32 : i32, i32
  }
}

module attributes {stable_mosaic.version = 11 : i64} {
  func.func @_readout_step_kernel(%arg0: memref<2x64xf32, #tpu.memory_space<vmem>>, %arg1: memref<2x16xbf16, #tpu.memory_space<vmem>>, %arg2: memref<1x16xf32, #tpu.memory_space<vmem>>, %arg3: memref<16x64xbf16, #tpu.memory_space<vmem>>, %arg4: memref<64x1xbf16, #tpu.memory_space<vmem>>, %arg5: memref<1x1xf32, #tpu.memory_space<vmem>>, %arg6: memref<3x64x64xbf16, #tpu.memory_space<vmem>>, %arg7: memref<3x64x64xbf16, #tpu.memory_space<vmem>>, %arg8: memref<4x1x64xf32, #tpu.memory_space<vmem>>, %arg9: memref<2x64xf32, #tpu.memory_space<vmem>>) attributes {dimension_semantics = [], scalar_prefetch = 0 : i64, scratch_operands = 0 : i64, tpu.core_type = #tpu.core_type<tc>} {
    %c0 = arith.constant 0 : index
    %c0_0 = arith.constant 0 : index
    %0 = vector.load %arg0[%c0, %c0_0] : memref<2x64xf32, #tpu.memory_space<vmem>>, vector<2x64xf32>
    %cst = arith.constant 0.000000e+00 : f32
    %1 = vector.broadcast %cst : f32 to vector<2x64xf32>
    %2 = arith.maximumf %0, %1 : vector<2x64xf32>
    %c0_1 = arith.constant 0 : index
    %c0_2 = arith.constant 0 : index
    %3 = vector.load %arg4[%c0_1, %c0_2] : memref<64x1xbf16, #tpu.memory_space<vmem>>, vector<64x1xbf16>
    %4 = arith.truncf %2 : vector<2x64xf32> to vector<2x64xbf16>
    %cst_3 = arith.constant dense<0.000000e+00> : vector<2x1xf32>
    %5 = tpu.matmul %4, %3, %cst_3 {dimension_numbers = #tpu.dot_dimension_numbers<[1], [0], [0], [1], [0, 0, 1, 1], [], []>} : vector<2x64xbf16>, vector<64x1xbf16>, vector<2x1xf32> -> vector<2x1xf32>
    %c0_4 = arith.constant 0 : index
    %c0_5 = arith.constant 0 : index
    %6 = vector.load %arg5[%c0_4, %c0_5] : memref<1x1xf32, #tpu.memory_space<vmem>>, vector<1x1xf32>
    %7 = vector.broadcast %6 : vector<1x1xf32> to vector<2x1xf32>
    %8 = arith.addf %5, %7 : vector<2x1xf32>
    %c0_6 = arith.constant 0 : index
    %c0_7 = arith.constant 0 : index
    %9 = vector.load %arg2[%c0_6, %c0_7] : memref<1x16xf32, #tpu.memory_space<vmem>>, vector<1x16xf32>
    %10 = vector.broadcast %8 : vector<2x1xf32> to vector<2x16xf32>
    %11 = vector.broadcast %9 : vector<1x16xf32> to vector<2x16xf32>
    %12 = arith.addf %10, %11 : vector<2x16xf32>
    %cst_8 = arith.constant 0.00999999977 : f32
    %13 = vector.broadcast %cst_8 : f32 to vector<2x16xf32>
    %14 = arith.mulf %13, %12 : vector<2x16xf32>
    %15 = arith.maximumf %12, %14 : vector<2x16xf32>
    %c0_9 = arith.constant 0 : index
    %c0_10 = arith.constant 0 : index
    %16 = vector.load %arg1[%c0_9, %c0_10] : memref<2x16xbf16, #tpu.memory_space<vmem>>, vector<2x16xbf16>
    %17 = arith.extf %16 : vector<2x16xbf16> to vector<2x16xf32>
    %cst_11 = arith.constant 0.000000e+00 : f32
    %18 = vector.broadcast %cst_11 : f32 to vector<2x16xf32>
    %19 = arith.cmpf ogt, %17, %18 : vector<2x16xf32>
    %cst_12 = arith.constant -1.000000e+30 : f32
    %20 = vector.broadcast %cst_12 : f32 to vector<2x16xf32>
    %21 = arith.select %19, %15, %20 : vector<2x16xi1>, vector<2x16xf32>
    %cst_13 = arith.constant dense<0xFF800000> : vector<2xf32>
    %22 = vector.multi_reduction <maximumf>, %21, %cst_13 [1] : vector<2x16xf32> to vector<2xf32>
    %23 = vector.shape_cast %22 : vector<2xf32> to vector<2x1xf32>
    %24 = vector.broadcast %23 : vector<2x1xf32> to vector<2x16xf32>
    %25 = arith.subf %21, %24 : vector<2x16xf32>
    %26 = math.exp %25 : vector<2x16xf32>
    %27 = arith.mulf %26, %17 : vector<2x16xf32>
    %cst_14 = arith.constant dense<0.000000e+00> : vector<2xf32>
    %28 = vector.multi_reduction <add>, %27, %cst_14 [1] : vector<2x16xf32> to vector<2xf32>
    %29 = vector.shape_cast %28 : vector<2xf32> to vector<2x1xf32>
    %cst_15 = arith.constant 0.000000e+00 : f32
    %30 = vector.broadcast %cst_15 : f32 to vector<2x1xf32>
    %31 = arith.cmpf ogt, %29, %30 : vector<2x1xf32>
    %cst_16 = arith.constant 1.000000e+00 : f32
    %32 = vector.broadcast %cst_16 : f32 to vector<2x1xf32>
    %33 = arith.select %31, %29, %32 : vector<2x1xi1>, vector<2x1xf32>
    %34 = tpu.reciprocal %33 {approx = true} : vector<2x1xf32> -> vector<2x1xf32>
    %35 = vector.broadcast %34 : vector<2x1xf32> to vector<2x16xf32>
    %36 = arith.mulf %27, %35 : vector<2x16xf32>
    %c0_17 = arith.constant 0 : index
    %c0_18 = arith.constant 0 : index
    %37 = vector.load %arg3[%c0_17, %c0_18] : memref<16x64xbf16, #tpu.memory_space<vmem>>, vector<16x64xbf16>
    %38 = arith.truncf %36 : vector<2x16xf32> to vector<2x16xbf16>
    %cst_19 = arith.constant dense<0.000000e+00> : vector<2x64xf32>
    %39 = tpu.matmul %38, %37, %cst_19 {dimension_numbers = #tpu.dot_dimension_numbers<[1], [0], [0], [1], [0, 0, 1, 1], [], []>} : vector<2x16xbf16>, vector<16x64xbf16>, vector<2x64xf32> -> vector<2x64xf32>
    %cst_20 = arith.constant 0.000000e+00 : f32
    %40 = vector.broadcast %cst_20 : f32 to vector<2x64xf32>
    %41 = arith.cmpf ogt, %39, %40 : vector<2x64xf32>
    %cst_21 = arith.constant 0.000000e+00 : f32
    %42 = vector.broadcast %cst_21 : f32 to vector<2x64xf32>
    %43 = arith.minimumf %39, %42 : vector<2x64xf32>
    %44 = math.exp %43 : vector<2x64xf32>
    %cst_22 = arith.constant 1.000000e+00 : f32
    %45 = vector.broadcast %cst_22 : f32 to vector<2x64xf32>
    %46 = arith.subf %44, %45 : vector<2x64xf32>
    %47 = arith.select %41, %39, %46 : vector<2x64xi1>, vector<2x64xf32>
    %cst_23 = arith.constant 0.000000e+00 : f32
    %48 = vector.broadcast %cst_23 : f32 to vector<2x64xf32>
    %49 = arith.maximumf %47, %48 : vector<2x64xf32>
    %c0_24 = arith.constant 0 : index
    %c0_25 = arith.constant 0 : index
    %c0_26 = arith.constant 0 : index
    %50 = vector.load %arg6[%c0_24, %c0_25, %c0_26] : memref<3x64x64xbf16, #tpu.memory_space<vmem>>, vector<1x64x64xbf16>
    %51 = vector.shape_cast %50 : vector<1x64x64xbf16> to vector<64x64xbf16>
    %52 = arith.truncf %49 : vector<2x64xf32> to vector<2x64xbf16>
    %cst_27 = arith.constant dense<0.000000e+00> : vector<2x64xf32>
    %53 = tpu.matmul %52, %51, %cst_27 {dimension_numbers = #tpu.dot_dimension_numbers<[1], [0], [0], [1], [0, 0, 1, 1], [], []>} : vector<2x64xbf16>, vector<64x64xbf16>, vector<2x64xf32> -> vector<2x64xf32>
    %c0_28 = arith.constant 0 : index
    %c0_29 = arith.constant 0 : index
    %c0_30 = arith.constant 0 : index
    %54 = vector.load %arg7[%c0_28, %c0_29, %c0_30] : memref<3x64x64xbf16, #tpu.memory_space<vmem>>, vector<1x64x64xbf16>
    %55 = vector.shape_cast %54 : vector<1x64x64xbf16> to vector<64x64xbf16>
    %56 = arith.truncf %0 : vector<2x64xf32> to vector<2x64xbf16>
    %cst_31 = arith.constant dense<0.000000e+00> : vector<2x64xf32>
    %57 = tpu.matmul %56, %55, %cst_31 {dimension_numbers = #tpu.dot_dimension_numbers<[1], [0], [0], [1], [0, 0, 1, 1], [], []>} : vector<2x64xbf16>, vector<64x64xbf16>, vector<2x64xf32> -> vector<2x64xf32>
    %58 = arith.addf %53, %57 : vector<2x64xf32>
    %c0_32 = arith.constant 0 : index
    %c0_33 = arith.constant 0 : index
    %c0_34 = arith.constant 0 : index
    %59 = vector.load %arg8[%c0_32, %c0_33, %c0_34] : memref<4x1x64xf32, #tpu.memory_space<vmem>>, vector<1x1x64xf32>
    %60 = vector.shape_cast %59 : vector<1x1x64xf32> to vector<1x64xf32>
    %61 = vector.broadcast %60 : vector<1x64xf32> to vector<2x64xf32>
    %62 = arith.addf %58, %61 : vector<2x64xf32>
    %63 = arith.negf %62 : vector<2x64xf32>
    %64 = math.exp %63 : vector<2x64xf32>
    %cst_35 = arith.constant 1.000000e+00 : f32
    %65 = vector.broadcast %cst_35 : f32 to vector<2x64xf32>
    %66 = arith.addf %65, %64 : vector<2x64xf32>
    %67 = arith.divf %65, %66 : vector<2x64xf32>
    %c1 = arith.constant 1 : index
    %c0_36 = arith.constant 0 : index
    %c0_37 = arith.constant 0 : index
    %68 = vector.load %arg6[%c1, %c0_36, %c0_37] : memref<3x64x64xbf16, #tpu.memory_space<vmem>>, vector<1x64x64xbf16>
    %69 = vector.shape_cast %68 : vector<1x64x64xbf16> to vector<64x64xbf16>
    %70 = arith.truncf %49 : vector<2x64xf32> to vector<2x64xbf16>
    %cst_38 = arith.constant dense<0.000000e+00> : vector<2x64xf32>
    %71 = tpu.matmul %70, %69, %cst_38 {dimension_numbers = #tpu.dot_dimension_numbers<[1], [0], [0], [1], [0, 0, 1, 1], [], []>} : vector<2x64xbf16>, vector<64x64xbf16>, vector<2x64xf32> -> vector<2x64xf32>
    %c1_39 = arith.constant 1 : index
    %c0_40 = arith.constant 0 : index
    %c0_41 = arith.constant 0 : index
    %72 = vector.load %arg7[%c1_39, %c0_40, %c0_41] : memref<3x64x64xbf16, #tpu.memory_space<vmem>>, vector<1x64x64xbf16>
    %73 = vector.shape_cast %72 : vector<1x64x64xbf16> to vector<64x64xbf16>
    %74 = arith.truncf %0 : vector<2x64xf32> to vector<2x64xbf16>
    %cst_42 = arith.constant dense<0.000000e+00> : vector<2x64xf32>
    %75 = tpu.matmul %74, %73, %cst_42 {dimension_numbers = #tpu.dot_dimension_numbers<[1], [0], [0], [1], [0, 0, 1, 1], [], []>} : vector<2x64xbf16>, vector<64x64xbf16>, vector<2x64xf32> -> vector<2x64xf32>
    %76 = arith.addf %71, %75 : vector<2x64xf32>
    %c1_43 = arith.constant 1 : index
    %c0_44 = arith.constant 0 : index
    %c0_45 = arith.constant 0 : index
    %77 = vector.load %arg8[%c1_43, %c0_44, %c0_45] : memref<4x1x64xf32, #tpu.memory_space<vmem>>, vector<1x1x64xf32>
    %78 = vector.shape_cast %77 : vector<1x1x64xf32> to vector<1x64xf32>
    %79 = vector.broadcast %78 : vector<1x64xf32> to vector<2x64xf32>
    %80 = arith.addf %76, %79 : vector<2x64xf32>
    %81 = arith.negf %80 : vector<2x64xf32>
    %82 = math.exp %81 : vector<2x64xf32>
    %cst_46 = arith.constant 1.000000e+00 : f32
    %83 = vector.broadcast %cst_46 : f32 to vector<2x64xf32>
    %84 = arith.addf %83, %82 : vector<2x64xf32>
    %85 = arith.divf %83, %84 : vector<2x64xf32>
    %c2 = arith.constant 2 : index
    %c0_47 = arith.constant 0 : index
    %c0_48 = arith.constant 0 : index
    %86 = vector.load %arg6[%c2, %c0_47, %c0_48] : memref<3x64x64xbf16, #tpu.memory_space<vmem>>, vector<1x64x64xbf16>
    %87 = vector.shape_cast %86 : vector<1x64x64xbf16> to vector<64x64xbf16>
    %88 = arith.truncf %49 : vector<2x64xf32> to vector<2x64xbf16>
    %cst_49 = arith.constant dense<0.000000e+00> : vector<2x64xf32>
    %89 = tpu.matmul %88, %87, %cst_49 {dimension_numbers = #tpu.dot_dimension_numbers<[1], [0], [0], [1], [0, 0, 1, 1], [], []>} : vector<2x64xbf16>, vector<64x64xbf16>, vector<2x64xf32> -> vector<2x64xf32>
    %c2_50 = arith.constant 2 : index
    %c0_51 = arith.constant 0 : index
    %c0_52 = arith.constant 0 : index
    %90 = vector.load %arg8[%c2_50, %c0_51, %c0_52] : memref<4x1x64xf32, #tpu.memory_space<vmem>>, vector<1x1x64xf32>
    %91 = vector.shape_cast %90 : vector<1x1x64xf32> to vector<1x64xf32>
    %92 = vector.broadcast %91 : vector<1x64xf32> to vector<2x64xf32>
    %93 = arith.addf %89, %92 : vector<2x64xf32>
    %c2_53 = arith.constant 2 : index
    %c0_54 = arith.constant 0 : index
    %c0_55 = arith.constant 0 : index
    %94 = vector.load %arg7[%c2_53, %c0_54, %c0_55] : memref<3x64x64xbf16, #tpu.memory_space<vmem>>, vector<1x64x64xbf16>
    %95 = vector.shape_cast %94 : vector<1x64x64xbf16> to vector<64x64xbf16>
    %96 = arith.truncf %0 : vector<2x64xf32> to vector<2x64xbf16>
    %cst_56 = arith.constant dense<0.000000e+00> : vector<2x64xf32>
    %97 = tpu.matmul %96, %95, %cst_56 {dimension_numbers = #tpu.dot_dimension_numbers<[1], [0], [0], [1], [0, 0, 1, 1], [], []>} : vector<2x64xbf16>, vector<64x64xbf16>, vector<2x64xf32> -> vector<2x64xf32>
    %c3 = arith.constant 3 : index
    %c0_57 = arith.constant 0 : index
    %c0_58 = arith.constant 0 : index
    %98 = vector.load %arg8[%c3, %c0_57, %c0_58] : memref<4x1x64xf32, #tpu.memory_space<vmem>>, vector<1x1x64xf32>
    %99 = vector.shape_cast %98 : vector<1x1x64xf32> to vector<1x64xf32>
    %100 = vector.broadcast %99 : vector<1x64xf32> to vector<2x64xf32>
    %101 = arith.addf %97, %100 : vector<2x64xf32>
    %102 = arith.mulf %67, %101 : vector<2x64xf32>
    %103 = arith.addf %93, %102 : vector<2x64xf32>
    %104 = math.tanh %103 : vector<2x64xf32>
    %cst_59 = arith.constant 1.000000e+00 : f32
    %105 = vector.broadcast %cst_59 : f32 to vector<2x64xf32>
    %106 = arith.subf %105, %85 : vector<2x64xf32>
    %107 = arith.mulf %106, %104 : vector<2x64xf32>
    %108 = arith.mulf %85, %0 : vector<2x64xf32>
    %109 = arith.addf %107, %108 : vector<2x64xf32>
    %c0_60 = arith.constant 0 : index
    %c0_61 = arith.constant 0 : index
    %110 = vector.load %arg9[%c0_60, %c0_61] : memref<2x64xf32, #tpu.memory_space<vmem>>, vector<2x64xf32>
    tpu.vector_store %arg9[%c0_60, %c0_61], %109 {strides = array<i32>} : memref<2x64xf32, #tpu.memory_space<vmem>>, vector<2x64xf32>,
    return
  }
}

</mosaic_0001>

<llo_original>
// kernel: attentive_fp_forward.6
$region0: #{attentive_fp_forward.6}
  #allocation0 [shape = 'u32[]', space=smem, size = 0x4, offset = 0x4, fixed_abs, tag = 'smem constant byte address 0x4 - core index']
  #allocation1 [shape = 'u32[144,128]{1,0:T(1,128)}', space=vmem, size = 0x12000, scoped, tag = 'internal scratch']
  #allocation2 [shape = 'f32[1,1]{1,0:T(1,128)S(1)}', space=vmem, size = 0x200, scoped, tag = 'scoped memory for attentive_fp_forward.6']
  %s0 = inlined_call_operand.vmem [shape: f32[16,64], index: 0, kind: input, shape index: {}]
  %s1 = inlined_call_operand.vmem [shape: bf16[16,16], index: 1, kind: input, shape index: {}]
  %s2 = inlined_call_operand.vmem [shape: f32[1,16], index: 2, kind: input, shape index: {}]
  %s3 = inlined_call_operand.vmem [shape: bf16[16,64], index: 3, kind: input, shape index: {}]
  %s4 = inlined_call_operand.vmem [shape: bf16[64,1], index: 4, kind: input, shape index: {}]
  %s5 = inlined_call_operand.<no memory space> [shape: f32[1,1], index: 5, kind: input, shape index: {}]
  %s6 = inlined_call_operand.vmem [shape: bf16[3,64,64], index: 6, kind: input, shape index: {}]
  %s7 = inlined_call_operand.vmem [shape: bf16[3,64,64], index: 7, kind: input, shape index: {}]
  %s8 = inlined_call_operand.vmem [shape: f32[4,1,64], index: 8, kind: input, shape index: {}]
  %s9 = inlined_call_operand.vmem [shape: f32[16,64], index: 9, kind: output, shape index: {}]
  %s10 = sld [smem:[#allocation0]]
  $region46: #{attentive_fp_forward.6} parent=0
    _
  %s12 = ssub.s32 1, %s10
  %s13 = scalar_select 0, %s12, %s10
  %v14 = vstv %s5
  %15 = vst [vmem:[#allocation2] sm:$0x1] %v14
  // Predicated region
  $region2: #{attentive_fp_forward.6} parent=0 // pred_check
    _
  $region3: #{attentive_fp_forward.6} parent=0 // pred_check_branch
    %17 = sbr.rel (0) target = $region5
  $region4: #{attentive_fp_forward.6} parent=0 // pred_region
    _
  $region5: #{attentive_fp_forward.6} parent=0 // pred_fallthru
    _
  // Predicated region
  $region6: #{attentive_fp_forward.6} parent=0 // pred_check
    _
  $region7: #{attentive_fp_forward.6} parent=0 // pred_check_branch
    %19 = sbr.rel (0) target = $region9
  $region8: #{attentive_fp_forward.6} parent=0 // pred_region
    _
  $region9: #{attentive_fp_forward.6} parent=0 // pred_fallthru
    _
  // Predicated region
  $region10: #{attentive_fp_forward.6} parent=0 // pred_check
    _
  $region11: #{attentive_fp_forward.6} parent=0 // pred_check_branch
    %21 = sbr.rel (0) target = $region13
  $region12: #{attentive_fp_forward.6} parent=0 // pred_region
    _
  $region13: #{attentive_fp_forward.6} parent=0 // pred_fallthru
    _
  // Predicated region
  $region14: #{attentive_fp_forward.6} parent=0 // pred_check
    _
  $region15: #{attentive_fp_forward.6} parent=0 // pred_check_branch
    %23 = sbr.rel (0) target = $region17
  $region16: #{attentive_fp_forward.6} parent=0 // pred_region
    _
  $region17: #{attentive_fp_forward.6} parent=0 // pred_fallthru
    _
  // Predicated region
  $region18: #{attentive_fp_forward.6} parent=0 // pred_check
    _
  $region19: #{attentive_fp_forward.6} parent=0 // pred_check_branch
    %25 = sbr.rel (0) target = $region21
  $region20: #{attentive_fp_forward.6} parent=0 // pred_region
    _
  $region21: #{attentive_fp_forward.6} parent=0 // pred_fallthru
    _
  // Predicated region
  $region22: #{attentive_fp_forward.6} parent=0 // pred_check
    _
  $region23: #{attentive_fp_forward.6} parent=0 // pred_check_branch
    %27 = sbr.rel (0) target = $region25
  $region24: #{attentive_fp_forward.6} parent=0 // pred_region
    _
  $region25: #{attentive_fp_forward.6} parent=0 // pred_fallthru
    _
  // Predicated region
  $region26: #{attentive_fp_forward.6} parent=0 // pred_check
    _
  $region27: #{attentive_fp_forward.6} parent=0 // pred_check_branch
    %29 = sbr.rel (0) target = $region29
  $region28: #{attentive_fp_forward.6} parent=0 // pred_region
    _
  $region29: #{attentive_fp_forward.6} parent=0 // pred_fallthru
    _
  // Predicated region
  $region30: #{attentive_fp_forward.6} parent=0 // pred_check
    _
  $region31: #{attentive_fp_forward.6} parent=0 // pred_check_branch
    %31 = sbr.rel (0) target = $region33
  $region32: #{attentive_fp_forward.6} parent=0 // pred_region
    _
  $region33: #{attentive_fp_forward.6} parent=0 // pred_fallthru
    _
  // Predicated region
  $region34: #{attentive_fp_forward.6} parent=0 // pred_check
    _
  $region35: #{attentive_fp_forward.6} parent=0 // pred_check_branch
    %33 = sbr.rel (0) target = $region37
  $region36: #{attentive_fp_forward.6} parent=0 // pred_region
    _
  $region37: #{attentive_fp_forward.6} parent=0 // pred_fallthru
    _
  %v35 = vld [vmem:[%s0] sm:$0xff]
  %v36 = vld [vmem:[%s0 + $0x8] sm:$0xff]
  %v37 = vld [vmem:[%s4] sm:$0xf]
  %v38 = vld [vmem:[%s4 + $0x4] sm:$0xf]
  %v39 = vld [vmem:[%s4 + $0x8] sm:$0xf]
  %v40 = vld [vmem:[%s4 + $0xc] sm:$0xf]
  %v41 = vld [vmem:[%s4 + $0x10] sm:$0xf]
  %v42 = vld [vmem:[%s4 + $0x14] sm:$0xf]
  %v43 = vld [vmem:[%s4 + $0x18] sm:$0xf]
  %v44 = vld [vmem:[%s4 + $0x1c] sm:$0xf]
  %v45 = vpack.c.bf16 %v36, %v35
  %v46 = vld [vmem:[#allocation2] sm:$0x1]
  %v48 = vlaneseq
  %v49 = vshrl.u32 %v48, 7
  %v50 = vsub.s32 0, %v49
  %v51 = vrot.slane %v46, %v50
  %v61 = vunpack.c.l.b16 %v37
  %v62 = vunpack.c.l.b16 %v38
  %v63 = vunpack.c.l.b16 %v39
  %v64 = vunpack.c.l.b16 %v40
  %v65 = vunpack.c.l.b16 %v41
  %v66 = vunpack.c.l.b16 %v42
  %v67 = vunpack.c.l.b16 %v43
  %v68 = vunpack.c.l.b16 %v44
  %v69 = vpack.c.b16 %v62, %v61
  %v70 = vpack.c.b16 %v64, %v63
  %v71 = vpack.c.b16 %v66, %v65
  %v72 = vpack.c.b16 %v68, %v67
  %vm77 = vcmask 523264
  %v79 = vsel %vm77, %v45, 0
  %81 = vmatprep.subr.bf16.mxu0 0
  %82 = vmatpush1.bf16.msra.mxu0 %v69
  %83 = vmatprep.subr.bf16.mxu0 0
  %84 = vmatpush1.bf16.msra.mxu0 %v70
  %85 = vmatprep.subr.bf16.mxu0 0
  %86 = vmatpush1.bf16.msra.mxu0 %v71
  %87 = vmatprep.subr.bf16.mxu0 0
  %88 = vmatpush1.bf16.msra.mxu0 %v72
  %89 = vmatprep.subr.bf16.mxu0 0
  %90 = vmatpush1.bf16.msra.mxu0 0
  %91 = vmatprep.subr.bf16.mxu0 0
  %92 = vmatpush1.bf16.msra.mxu0 0
  %93 = vmatprep.subr.bf16.mxu0 0
  %94 = vmatpush1.bf16.msra.mxu0 0
  %95 = vmatprep.subr.bf16.mxu0 0
  %96 = vmatpush1.bf16.msra.mxu0 0
  %97 = vmatprep.subr.bf16.mxu0 0
  %98 = vmatpush1.bf16.msra.mxu0 0
  %99 = vmatprep.subr.bf16.mxu0 0
  %100 = vmatpush1.bf16.msra.mxu0 0
  %101 = vmatprep.subr.bf16.mxu0 0
  %102 = vmatpush1.bf16.msra.mxu0 0
  %103 = vmatprep.subr.bf16.mxu0 0
  %104 = vmatpush1.bf16.msra.mxu0 0
  %105 = vmatprep.subr.bf16.mxu0 0
  %106 = vmatpush1.bf16.msra.mxu0 0
  %107 = vmatprep.subr.bf16.mxu0 0
  %108 = vmatpush1.bf16.msra.mxu0 0
  %109 = vmatprep.subr.bf16.mxu0 0
  %110 = vmatpush1.bf16.msra.mxu0 0
  %111 = vmatprep.subr.bf16.mxu0 0
  %112 = vmatpush1.bf16.msra.mxu0 0
  %113 = vmatprep.mubr.bf16.mxu0 0
  %114 = vmatmul.mubr.bf16.gmra.mrb[0].mxu0 %v79
  %v115 = vpop.f32.mrb[0].mxu0
  %v116 = vadd.f32 %v51, %v115
  %v117 = vpop.f32.mrb[0].mxu0
  %v118 = vpop.f32.mrb[0].mxu0
  %v119 = vadd.f32 %v51, %v118
  %v120 = vpop.f32.mrb[0].mxu0
  %121 = vdwg.mxu0
  %v122 = vld [vmem:[%s2] sm:$0x1]
  %124 = vset.pattern.permute.xlu0 0
  %125 = vperm.xlu0 %124, %v116
  %v126 = vpop.permute.xlu0 %125
  %129 = vset.pattern.permute.xlu0 0
  %130 = vperm.xlu0 %129, %v119
  %v131 = vpop.permute.xlu0 %130
  %v134 = vlaneseq
  %v135 = vshrl.u32 %v134, 7
  %v136 = vsub.s32 0, %v135
  %v137 = vrot.slane %v122, %v136
  %v139 = vadd.f32 %v126, %v137
  %v140 = vadd.f32 %v131, %v137
  %v141 = vmul.f32 %v139, 0.01
  %v142 = vmul.f32 %v140, 0.01
  %v143 = vmax.f32 %v139, %v141
  %v144 = vmax.f32 %v140, %v142
  %v145 = vld [vmem:[%s1] sm:$0xf]
  %v146 = vld [vmem:[%s1 + $0x4] sm:$0xf]
  %v147 = vunpack.c.l.bf16 %v145
  %v148 = vunpack.c.l.bf16 %v146
  %vm149 = vcmp.gt.f32.partialorder %v147, 0.0
  %vm150 = vcmp.gt.f32.partialorder %v148, 0.0
  %v151 = vsel %vm149, %v143, -1e+30
  %v152 = vsel %vm150, %v144, -1e+30
  %vm153 = vcmask 130048
  %v154 = vsel %vm153, %v151, -inf
  %155 = vmax.xlane.f32.xlu0 %v154
  %v156 = vpop.xlane.xlu0 %155
  %v157 = vsel %vm153, %v152, -inf
  %158 = vmax.xlane.f32.xlu0 %v157
  %v159 = vpop.xlane.xlu0 %158
  %v160 = vsub.f32 %v151, %v156
  %v161 = vsub.f32 %v152, %v159
  %v162 = vmul.f32 %v160, 1.442695
  %v163 = vpow.pop %v162
  %v164 = vmul.f32 %v161, 1.442695
  %v165 = vpow.pop %v164
  %v166 = vmul.f32 %v163, %v147
  %v167 = vmul.f32 %v165, %v148
  %v168 = vsel %vm153, %v166, 0.0
  %169 = vadd.xlane.f32.xlu0 %v168
  %v170 = vpop.xlane.xlu0 %169
  %v171 = vsel %vm153, %v167, 0.0
  %172 = vadd.xlane.f32.xlu0 %v171
  %v173 = vpop.xlane.xlu0 %172
  %vm174 = vcmp.gt.f32.partialorder %v170, 0.0
  %vm175 = vcmp.gt.f32.partialorder %v173, 0.0
  %v176 = vsel %vm174, %v170, 1.0
  %v177 = vsel %vm175, %v173, 1.0
  %v178 = vrcp.pop %v176
  %v179 = vrcp.pop %v177
  %v180 = vmul.f32 %v166, %v178
  %v181 = vmul.f32 %v167, %v179
  %v182 = vld [vmem:[%s3] sm:$0xf]
  %v183 = vld [vmem:[%s3 + $0x4] sm:$0xf]
  %v184 = vpack.c.bf16 %v181, %v180
  %v187 = vunpack.c.l.b16 %v182
  %v188 = vunpack.c.l.b16 %v183
  %v189 = vpack.c.b16 %v188, %v187
  %v192 = vsel %vm153, %v184, 0
  %194 = vmatprep.subr.bf16.mxu0 0
  %195 = vmatpush1.bf16.msra.mxu0 %v189
  %196 = vmatprep.subr.bf16.mxu0 0
  %197 = vmatpush1.bf16.msra.mxu0 0
  %198 = vmatprep.subr.bf16.mxu0 0
  %199 = vmatpush1.bf16.msra.mxu0 0
  %200 = vmatprep.subr.bf16.mxu0 0
  %201 = vmatpush1.bf16.msra.mxu0 0
  %202 = vmatprep.subr.bf16.mxu0 0
  %203 = vmatpush1.bf16.msra.mxu0 0
  %204 = vmatprep.subr.bf16.mxu0 0
  %205 = vmatpush1.bf16.msra.mxu0 0
  %206 = vmatprep.subr.bf16.mxu0 0
  %207 = vmatpush1.bf16.msra.mxu0 0
  %208 = vmatprep.subr.bf16.mxu0 0
  %209 = vmatpush1.bf16.msra.mxu0 0
  %210 = vmatprep.subr.bf16.mxu0 0
  %211 = vmatpush1.bf16.msra.mxu0 0
  %212 = vmatprep.subr.bf16.mxu0 0
  %213 = vmatpush1.bf16.msra.mxu0 0
  %214 = vmatprep.subr.bf16.mxu0 0
  %215 = vmatpush1.bf16.msra.mxu0 0
  %216 = vmatprep.subr.bf16.mxu0 0
  %217 = vmatpush1.bf16.msra.mxu0 0
  %218 = vmatprep.subr.bf16.mxu0 0
  %219 = vmatpush1.bf16.msra.mxu0 0
  %220 = vmatprep.subr.bf16.mxu0 0
  %221 = vmatpush1.bf16.msra.mxu0 0
  %222 = vmatprep.subr.bf16.mxu0 0
  %223 = vmatpush1.bf16.msra.mxu0 0
  %224 = vmatprep.subr.bf16.mxu0 0
  %225 = vmatpush1.bf16.msra.mxu0 0
  %226 = vmatprep.mubr.bf16.mxu0 0
  %227 = vmatmul.mubr.bf16.gmra.mrb[0].mxu0 %v192
  %v228 = vpop.f32.mrb[0].mxu0
  %v229 = vadd.f32 0.0, %v228
  %v230 = vpop.f32.mrb[0].mxu0
  %v231 = vpop.f32.mrb[0].mxu0
  %v232 = vadd.f32 0.0, %v231
  %v233 = vpop.f32.mrb[0].mxu0
  %234 = vdwg.mxu0
  %vm235 = vcmp.gt.f32.partialorder %v229, 0.0
  %vm236 = vcmp.gt.f32.partialorder %v232, 0.0
  %v237 = vmin.f32 %v229, 0.0
  %v238 = vmin.f32 %v232, 0.0
  %v239 = vmul.f32 %v237, 1.442695
  %v240 = vpow.pop %v239
  %v241 = vmul.f32 %v238, 1.442695
  %v242 = vpow.pop %v241
  %v243 = vsub.f32 %v240, 1.0
  %v244 = vsub.f32 %v242, 1.0
  %v245 = vsel %vm235, %v229, %v243
  %v246 = vsel %vm236, %v232, %v244
  %v247 = vld [vmem:[%s6] sm:$0xf]
  %v248 = vld [vmem:[%s6 + $0x4] sm:$0xf]
  %v249 = vld [vmem:[%s6 + $0x8] sm:$0xf]
  %v250 = vld [vmem:[%s6 + $0xc] sm:$0xf]
  %v251 = vld [vmem:[%s6 + $0x10] sm:$0xf]
  %v252 = vld [vmem:[%s6 + $0x14] sm:$0xf]
  %v253 = vld [vmem:[%s6 + $0x18] sm:$0xf]
  %v254 = vld [vmem:[%s6 + $0x1c] sm:$0xf]
  %v255 = vpack.c.bf16 %v246, %v245
  %v256 = vld [vmem:[%s7] sm:$0xf]
  %v257 = vld [vmem:[%s7 + $0x4] sm:$0xf]
  %v258 = vld [vmem:[%s7 + $0x8] sm:$0xf]
  %v259 = vld [vmem:[%s7 + $0xc] sm:$0xf]
  %v260 = vld [vmem:[%s7 + $0x10] sm:$0xf]
  %v261 = vld [vmem:[%s7 + $0x14] sm:$0xf]
  %v262 = vld [vmem:[%s7 + $0x18] sm:$0xf]
  %v263 = vld [vmem:[%s7 + $0x1c] sm:$0xf]
  %v272 = vunpack.c.l.b16 %v256
  %v273 = vunpack.c.l.b16 %v257
  %v274 = vunpack.c.l.b16 %v258
  %v275 = vunpack.c.l.b16 %v259
  %v276 = vunpack.c.l.b16 %v260
  %v277 = vunpack.c.l.b16 %v261
  %v278 = vunpack.c.l.b16 %v262
  %v279 = vunpack.c.l.b16 %v263
  %v280 = vpack.c.b16 %v273, %v272
  %v281 = vpack.c.b16 %v275, %v274
  %v282 = vpack.c.b16 %v277, %v276
  %v283 = vpack.c.b16 %v279, %v278
  %288 = vmatprep.subr.bf16.mxu0 0
  %289 = vmatpush1.bf16.msra.mxu0 %v280
  %290 = vmatprep.subr.bf16.mxu0 0
  %291 = vmatpush1.bf16.msra.mxu0 %v281
  %292 = vmatprep.subr.bf16.mxu0 0
  %293 = vmatpush1.bf16.msra.mxu0 %v282
  %294 = vmatprep.subr.bf16.mxu0 0
  %295 = vmatpush1.bf16.msra.mxu0 %v283
  %296 = vmatprep.subr.bf16.mxu0 0
  %297 = vmatpush1.bf16.msra.mxu0 0
  %298 = vmatprep.subr.bf16.mxu0 0
  %299 = vmatpush1.bf16.msra.mxu0 0
  %300 = vmatprep.subr.bf16.mxu0 0
  %301 = vmatpush1.bf16.msra.mxu0 0
  %302 = vmatprep.subr.bf16.mxu0 0
  %303 = vmatpush1.bf16.msra.mxu0 0
  %304 = vmatprep.subr.bf16.mxu0 0
  %305 = vmatpush1.bf16.msra.mxu0 0
  %306 = vmatprep.subr.bf16.mxu0 0
  %307 = vmatpush1.bf16.msra.mxu0 0
  %308 = vmatprep.subr.bf16.mxu0 0
  %309 = vmatpush1.bf16.msra.mxu0 0
  %310 = vmatprep.subr.bf16.mxu0 0
  %311 = vmatpush1.bf16.msra.mxu0 0
  %312 = vmatprep.subr.bf16.mxu0 0
  %313 = vmatpush1.bf16.msra.mxu0 0
  %314 = vmatprep.subr.bf16.mxu0 0
  %315 = vmatpush1.bf16.msra.mxu0 0
  %316 = vmatprep.subr.bf16.mxu0 0
  %317 = vmatpush1.bf16.msra.mxu0 0
  %318 = vmatprep.subr.bf16.mxu0 0
  %319 = vmatpush1.bf16.msra.mxu0 0
  %320 = vmatprep.mubr.bf16.mxu0 0
  %321 = vmatmul.mubr.bf16.gmra.mrb[0].mxu0 %v79
  %v322 = vpop.f32.mrb[0].mxu0
  %v323 = vadd.f32 0.0, %v322
  %v324 = vpop.f32.mrb[0].mxu0
  %v325 = vpop.f32.mrb[0].mxu0
  %v326 = vadd.f32 0.0, %v325
  %v327 = vpop.f32.mrb[0].mxu0
  %328 = vdwg.mxu0
  %v337 = vunpack.c.l.b16 %v247
  %v338 = vunpack.c.l.b16 %v248
  %v339 = vunpack.c.l.b16 %v249
  %v340 = vunpack.c.l.b16 %v250
  %v341 = vunpack.c.l.b16 %v251
  %v342 = vunpack.c.l.b16 %v252
  %v343 = vunpack.c.l.b16 %v253
  %v344 = vunpack.c.l.b16 %v254
  %v345 = vpack.c.b16 %v338, %v337
  %v346 = vpack.c.b16 %v340, %v339
  %v347 = vpack.c.b16 %v342, %v341
  %v348 = vpack.c.b16 %v344, %v343
  %v354 = vsel %vm77, %v255, 0
  %356 = vmatprep.subr.bf16.mxu0 0
  %357 = vmatpush1.bf16.msra.mxu0 %v345
  %358 = vmatprep.subr.bf16.mxu0 0
  %359 = vmatpush1.bf16.msra.mxu0 %v346
  %360 = vmatprep.subr.bf16.mxu0 0
  %361 = vmatpush1.bf16.msra.mxu0 %v347
  %362 = vmatprep.subr.bf16.mxu0 0
  %363 = vmatpush1.bf16.msra.mxu0 %v348
  %364 = vmatprep.subr.bf16.mxu0 0
  %365 = vmatpush1.bf16.msra.mxu0 0
  %366 = vmatprep.subr.bf16.mxu0 0
  %367 = vmatpush1.bf16.msra.mxu0 0
  %368 = vmatprep.subr.bf16.mxu0 0
  %369 = vmatpush1.bf16.msra.mxu0 0
  %370 = vmatprep.subr.bf16.mxu0 0
  %371 = vmatpush1.bf16.msra.mxu0 0
  %372 = vmatprep.subr.bf16.mxu0 0
  %373 = vmatpush1.bf16.msra.mxu0 0
  %374 = vmatprep.subr.bf16.mxu0 0
  %375 = vmatpush1.bf16.msra.mxu0 0
  %376 = vmatprep.subr.bf16.mxu0 0
  %377 = vmatpush1.bf16.msra.mxu0 0
  %378 = vmatprep.subr.bf16.mxu0 0
  %379 = vmatpush1.bf16.msra.mxu0 0
  %380 = vmatprep.subr.bf16.mxu0 0
  %381 = vmatpush1.bf16.msra.mxu0 0
  %382 = vmatprep.subr.bf16.mxu0 0
  %383 = vmatpush1.bf16.msra.mxu0 0
  %384 = vmatprep.subr.bf16.mxu0 0
  %385 = vmatpush1.bf16.msra.mxu0 0
  %386 = vmatprep.subr.bf16.mxu0 0
  %387 = vmatpush1.bf16.msra.mxu0 0
  %388 = vmatprep.mubr.bf16.mxu0 0
  %389 = vmatmul.mubr.bf16.gmra.mrb[0].mxu0 %v354
  %v390 = vpop.f32.mrb[0].mxu0
  %v391 = vadd.f32 %v323, %v390
  %v392 = vpop.f32.mrb[0].mxu0
  %v393 = vpop.f32.mrb[0].mxu0
  %v394 = vadd.f32 %v326, %v393
  %v395 = vpop.f32.mrb[0].mxu0
  %396 = vdwg.mxu0
  %v397 = vld [vmem:[%s8] sm:$0x1]
  %v399 = vlaneseq
  %v400 = vshrl.u32 %v399, 7
  %v401 = vsub.s32 0, %v400
  %v402 = vrot.slane %v397, %v401
  %v404 = vadd.f32 %v391, %v402
  %v405 = vadd.f32 %v394, %v402
  %v406 = vxor.u32 %v404, 2147483648
  %v407 = vxor.u32 %v405, 2147483648
  %v408 = vmul.f32 %v406, 1.442695
  %v409 = vpow.pop %v408
  %v410 = vmul.f32 %v407, 1.442695
  %v411 = vpow.pop %v410
  %v412 = vadd.f32 %v409, 1.0
  %v413 = vadd.f32 %v411, 1.0
  %v414 = vrcp.pop %v412
  %v415 = vmul.f32 1.0, %v414
  %v416 = vrcp.pop %v413
  %v417 = vmul.f32 1.0, %v416
  %s418 = scalar_lea.vmem %s6, 32
  %v419 = vld [vmem:[%s418] sm:$0xf]
  %v420 = vld [vmem:[%s418 + $0x4] sm:$0xf]
  %v421 = vld [vmem:[%s418 + $0x8] sm:$0xf]
  %v422 = vld [vmem:[%s418 + $0xc] sm:$0xf]
  %v423 = vld [vmem:[%s418 + $0x10] sm:$0xf]
  %v424 = vld [vmem:[%s418 + $0x14] sm:$0xf]
  %v425 = vld [vmem:[%s418 + $0x18] sm:$0xf]
  %v426 = vld [vmem:[%s418 + $0x1c] sm:$0xf]
  %s427 = scalar_lea.vmem %s7, 32
  %v428 = vld [vmem:[%s427] sm:$0xf]
  %v429 = vld [vmem:[%s427 + $0x4] sm:$0xf]
  %v430 = vld [vmem:[%s427 + $0x8] sm:$0xf]
  %v431 = vld [vmem:[%s427 + $0xc] sm:$0xf]
  %v432 = vld [vmem:[%s427 + $0x10] sm:$0xf]
  %v433 = vld [vmem:[%s427 + $0x14] sm:$0xf]
  %v434 = vld [vmem:[%s427 + $0x18] sm:$0xf]
  %v435 = vld [vmem:[%s427 + $0x1c] sm:$0xf]
  %v444 = vunpack.c.l.b16 %v428
  %v445 = vunpack.c.l.b16 %v429
  %v446 = vunpack.c.l.b16 %v430
  %v447 = vunpack.c.l.b16 %v431
  %v448 = vunpack.c.l.b16 %v432
  %v449 = vunpack.c.l.b16 %v433
  %v450 = vunpack.c.l.b16 %v434
  %v451 = vunpack.c.l.b16 %v435
  %v452 = vpack.c.b16 %v445, %v444
  %v453 = vpack.c.b16 %v447, %v446
  %v454 = vpack.c.b16 %v449, %v448
  %v455 = vpack.c.b16 %v451, %v450
  %460 = vmatprep.subr.bf16.mxu0 0
  %461 = vmatpush1.bf16.msra.mxu0 %v452
  %462 = vmatprep.subr.bf16.mxu0 0
  %463 = vmatpush1.bf16.msra.mxu0 %v453
  %464 = vmatprep.subr.bf16.mxu0 0
  %465 = vmatpush1.bf16.msra.mxu0 %v454
  %466 = vmatprep.subr.bf16.mxu0 0
  %467 = vmatpush1.bf16.msra.mxu0 %v455
  %468 = vmatprep.subr.bf16.mxu0 0
  %469 = vmatpush1.bf16.msra.mxu0 0
  %470 = vmatprep.subr.bf16.mxu0 0
  %471 = vmatpush1.bf16.msra.mxu0 0
  %472 = vmatprep.subr.bf16.mxu0 0
  %473 = vmatpush1.bf16.msra.mxu0 0
  %474 = vmatprep.subr.bf16.mxu0 0
  %475 = vmatpush1.bf16.msra.mxu0 0
  %476 = vmatprep.subr.bf16.mxu0 0
  %477 = vmatpush1.bf16.msra.mxu0 0
  %478 = vmatprep.subr.bf16.mxu0 0
  %479 = vmatpush1.bf16.msra.mxu0 0
  %480 = vmatprep.subr.bf16.mxu0 0
  %481 = vmatpush1.bf16.msra.mxu0 0
  %482 = vmatprep.subr.bf16.mxu0 0
  %483 = vmatpush1.bf16.msra.mxu0 0
  %484 = vmatprep.subr.bf16.mxu0 0
  %485 = vmatpush1.bf16.msra.mxu0 0
  %486 = vmatprep.subr.bf16.mxu0 0
  %487 = vmatpush1.bf16.msra.mxu0 0
  %488 = vmatprep.subr.bf16.mxu0 0
  %489 = vmatpush1.bf16.msra.mxu0 0
  %490 = vmatprep.subr.bf16.mxu0 0
  %491 = vmatpush1.bf16.msra.mxu0 0
  %492 = vmatprep.mubr.bf16.mxu0 0
  %493 = vmatmul.mubr.bf16.gmra.mrb[0].mxu0 %v79
  %v494 = vpop.f32.mrb[0].mxu0
  %v495 = vadd.f32 0.0, %v494
  %v496 = vpop.f32.mrb[0].mxu0
  %v497 = vpop.f32.mrb[0].mxu0
  %v498 = vadd.f32 0.0, %v497
  %v499 = vpop.f32.mrb[0].mxu0
  %500 = vdwg.mxu0
  %v509 = vunpack.c.l.b16 %v419
  %v510 = vunpack.c.l.b16 %v420
  %v511 = vunpack.c.l.b16 %v421
  %v512 = vunpack.c.l.b16 %v422
  %v513 = vunpack.c.l.b16 %v423
  %v514 = vunpack.c.l.b16 %v424
  %v515 = vunpack.c.l.b16 %v425
  %v516 = vunpack.c.l.b16 %v426
  %v517 = vpack.c.b16 %v510, %v509
  %v518 = vpack.c.b16 %v512, %v511
  %v519 = vpack.c.b16 %v514, %v513
  %v520 = vpack.c.b16 %v516, %v515
  %525 = vmatprep.subr.bf16.mxu0 0
  %526 = vmatpush1.bf16.msra.mxu0 %v517
  %527 = vmatprep.subr.bf16.mxu0 0
  %528 = vmatpush1.bf16.msra.mxu0 %v518
  %529 = vmatprep.subr.bf16.mxu0 0
  %530 = vmatpush1.bf16.msra.mxu0 %v519
  %531 = vmatprep.subr.bf16.mxu0 0
  %532 = vmatpush1.bf16.msra.mxu0 %v520
  %533 = vmatprep.subr.bf16.mxu0 0
  %534 = vmatpush1.bf16.msra.mxu0 0
  %535 = vmatprep.subr.bf16.mxu0 0
  %536 = vmatpush1.bf16.msra.mxu0 0
  %537 = vmatprep.subr.bf16.mxu0 0
  %538 = vmatpush1.bf16.msra.mxu0 0
  %539 = vmatprep.subr.bf16.mxu0 0
  %540 = vmatpush1.bf16.msra.mxu0 0
  %541 = vmatprep.subr.bf16.mxu0 0
  %542 = vmatpush1.bf16.msra.mxu0 0
  %543 = vmatprep.subr.bf16.mxu0 0
  %544 = vmatpush1.bf16.msra.mxu0 0
  %545 = vmatprep.subr.bf16.mxu0 0
  %546 = vmatpush1.bf16.msra.mxu0 0
  %547 = vmatprep.subr.bf16.mxu0 0
  %548 = vmatpush1.bf16.msra.mxu0 0
  %549 = vmatprep.subr.bf16.mxu0 0
  %550 = vmatpush1.bf16.msra.mxu0 0
  %551 = vmatprep.subr.bf16.mxu0 0
  %552 = vmatpush1.bf16.msra.mxu0 0
  %553 = vmatprep.subr.bf16.mxu0 0
  %554 = vmatpush1.bf16.msra.mxu0 0
  %555 = vmatprep.subr.bf16.mxu0 0
  %556 = vmatpush1.bf16.msra.mxu0 0
  %557 = vmatprep.mubr.bf16.mxu0 0
  %558 = vmatmul.mubr.bf16.gmra.mrb[0].mxu0 %v354
  %v559 = vpop.f32.mrb[0].mxu0
  %v560 = vadd.f32 %v495, %v559
  %v561 = vpop.f32.mrb[0].mxu0
  %v562 = vpop.f32.mrb[0].mxu0
  %v563 = vadd.f32 %v498, %v562
  %v564 = vpop.f32.mrb[0].mxu0
  %565 = vdwg.mxu0
  %s566 = scalar_lea.vmem %s8, 1
  %v567 = vld [vmem:[%s566] sm:$0x1]
  %v569 = vlaneseq
  %v570 = vshrl.u32 %v569, 7
  %v571 = vsub.s32 0, %v570
  %v572 = vrot.slane %v567, %v571
  %v574 = vadd.f32 %v560, %v572
  %v575 = vadd.f32 %v563, %v572
  %v576 = vxor.u32 %v574, 2147483648
  %v577 = vxor.u32 %v575, 2147483648
  %v578 = vmul.f32 %v576, 1.442695
  %v579 = vpow.pop %v578
  %v580 = vmul.f32 %v577, 1.442695
  %v581 = vpow.pop %v580
  %v582 = vadd.f32 %v579, 1.0
  %v583 = vadd.f32 %v581, 1.0
  %v584 = vrcp.pop %v582
  %v585 = vmul.f32 1.0, %v584
  %v586 = vrcp.pop %v583
  %v587 = vmul.f32 1.0, %v586
  %s588 = scalar_lea.vmem %s6, 64
  %v589 = vld [vmem:[%s588] sm:$0xf]
  %v590 = vld [vmem:[%s588 + $0x4] sm:$0xf]
  %v591 = vld [vmem:[%s588 + $0x8] sm:$0xf]
  %v592 = vld [vmem:[%s588 + $0xc] sm:$0xf]
  %v593 = vld [vmem:[%s588 + $0x10] sm:$0xf]
  %v594 = vld [vmem:[%s588 + $0x14] sm:$0xf]
  %v595 = vld [vmem:[%s588 + $0x18] sm:$0xf]
  %v596 = vld [vmem:[%s588 + $0x1c] sm:$0xf]
  %s597 = scalar_lea.vmem %s8, 2
  %v598 = vld [vmem:[%s597] sm:$0x1]
  %v600 = vlaneseq
  %v601 = vshrl.u32 %v600, 7
  %v602 = vsub.s32 0, %v601
  %v603 = vrot.slane %v598, %v602
  %v613 = vunpack.c.l.b16 %v589
  %v614 = vunpack.c.l.b16 %v590
  %v615 = vunpack.c.l.b16 %v591
  %v616 = vunpack.c.l.b16 %v592
  %v617 = vunpack.c.l.b16 %v593
  %v618 = vunpack.c.l.b16 %v594
  %v619 = vunpack.c.l.b16 %v595
  %v620 = vunpack.c.l.b16 %v596
  %v621 = vpack.c.b16 %v614, %v613
  %v622 = vpack.c.b16 %v616, %v615
  %v623 = vpack.c.b16 %v618, %v617
  %v624 = vpack.c.b16 %v620, %v619
  %629 = vmatprep.subr.bf16.mxu0 0
  %630 = vmatpush1.bf16.msra.mxu0 %v621
  %631 = vmatprep.subr.bf16.mxu0 0
  %632 = vmatpush1.bf16.msra.mxu0 %v622
  %633 = vmatprep.subr.bf16.mxu0 0
  %634 = vmatpush1.bf16.msra.mxu0 %v623
  %635 = vmatprep.subr.bf16.mxu0 0
  %636 = vmatpush1.bf16.msra.mxu0 %v624
  %637 = vmatprep.subr.bf16.mxu0 0
  %638 = vmatpush1.bf16.msra.mxu0 0
  %639 = vmatprep.subr.bf16.mxu0 0
  %640 = vmatpush1.bf16.msra.mxu0 0
  %641 = vmatprep.subr.bf16.mxu0 0
  %642 = vmatpush1.bf16.msra.mxu0 0
  %643 = vmatprep.subr.bf16.mxu0 0
  %644 = vmatpush1.bf16.msra.mxu0 0
  %645 = vmatprep.subr.bf16.mxu0 0
  %646 = vmatpush1.bf16.msra.mxu0 0
  %647 = vmatprep.subr.bf16.mxu0 0
  %648 = vmatpush1.bf16.msra.mxu0 0
  %649 = vmatprep.subr.bf16.mxu0 0
  %650 = vmatpush1.bf16.msra.mxu0 0
  %651 = vmatprep.subr.bf16.mxu0 0
  %652 = vmatpush1.bf16.msra.mxu0 0
  %653 = vmatprep.subr.bf16.mxu0 0
  %654 = vmatpush1.bf16.msra.mxu0 0
  %655 = vmatprep.subr.bf16.mxu0 0
  %656 = vmatpush1.bf16.msra.mxu0 0
  %657 = vmatprep.subr.bf16.mxu0 0
  %658 = vmatpush1.bf16.msra.mxu0 0
  %659 = vmatprep.subr.bf16.mxu0 0
  %660 = vmatpush1.bf16.msra.mxu0 0
  %661 = vmatprep.mubr.bf16.mxu0 0
  %662 = vmatmul.mubr.bf16.gmra.mrb[0].mxu0 %v354
  %v663 = vpop.f32.mrb[0].mxu0
  %v664 = vadd.f32 %v603, %v663
  %v665 = vpop.f32.mrb[0].mxu0
  %v666 = vpop.f32.mrb[0].mxu0
  %v667 = vadd.f32 %v603, %v666
  %v668 = vpop.f32.mrb[0].mxu0
  %669 = vdwg.mxu0
  %s670 = scalar_lea.vmem %s7, 64
  %v671 = vld [vmem:[%s670] sm:$0xf]
  %v672 = vld [vmem:[%s670 + $0x4] sm:$0xf]
  %v673 = vld [vmem:[%s670 + $0x8] sm:$0xf]
  %v674 = vld [vmem:[%s670 + $0xc] sm:$0xf]
  %v675 = vld [vmem:[%s670 + $0x10] sm:$0xf]
  %v676 = vld [vmem:[%s670 + $0x14] sm:$0xf]
  %v677 = vld [vmem:[%s670 + $0x18] sm:$0xf]
  %v678 = vld [vmem:[%s670 + $0x1c] sm:$0xf]
  %s679 = scalar_lea.vmem %s8, 3
  %v680 = vld [vmem:[%s679] sm:$0x1]
  %v682 = vlaneseq
  %v683 = vshrl.u32 %v682, 7
  %v684 = vsub.s32 0, %v683
  %v685 = vrot.slane %v680, %v684
  %v695 = vunpack.c.l.b16 %v671
  %v696 = vunpack.c.l.b16 %v672
  %v697 = vunpack.c.l.b16 %v673
  %v698 = vunpack.c.l.b16 %v674
  %v699 = vunpack.c.l.b16 %v675
  %v700 = vunpack.c.l.b16 %v676
  %v701 = vunpack.c.l.b16 %v677
  %v702 = vunpack.c.l.b16 %v678
  %v703 = vpack.c.b16 %v696, %v695
  %v704 = vpack.c.b16 %v698, %v697
  %v705 = vpack.c.b16 %v700, %v699
  %v706 = vpack.c.b16 %v702, %v701
  %711 = vmatprep.subr.bf16.mxu0 0
  %712 = vmatpush1.bf16.msra.mxu0 %v703
  %713 = vmatprep.subr.bf16.mxu0 0
  %714 = vmatpush1.bf16.msra.mxu0 %v704
  %715 = vmatprep.subr.bf16.mxu0 0
  %716 = vmatpush1.bf16.msra.mxu0 %v705
  %717 = vmatprep.subr.bf16.mxu0 0
  %718 = vmatpush1.bf16.msra.mxu0 %v706
  %719 = vmatprep.subr.bf16.mxu0 0
  %720 = vmatpush1.bf16.msra.mxu0 0
  %721 = vmatprep.subr.bf16.mxu0 0
  %722 = vmatpush1.bf16.msra.mxu0 0
  %723 = vmatprep.subr.bf16.mxu0 0
  %724 = vmatpush1.bf16.msra.mxu0 0
  %725 = vmatprep.subr.bf16.mxu0 0
  %726 = vmatpush1.bf16.msra.mxu0 0
  %727 = vmatprep.subr.bf16.mxu0 0
  %728 = vmatpush1.bf16.msra.mxu0 0
  %729 = vmatprep.subr.bf16.mxu0 0
  %730 = vmatpush1.bf16.msra.mxu0 0
  %731 = vmatprep.subr.bf16.mxu0 0
  %732 = vmatpush1.bf16.msra.mxu0 0
  %733 = vmatprep.subr.bf16.mxu0 0
  %734 = vmatpush1.bf16.msra.mxu0 0
  %735 = vmatprep.subr.bf16.mxu0 0
  %736 = vmatpush1.bf16.msra.mxu0 0
  %737 = vmatprep.subr.bf16.mxu0 0
  %738 = vmatpush1.bf16.msra.mxu0 0
  %739 = vmatprep.subr.bf16.mxu0 0
  %740 = vmatpush1.bf16.msra.mxu0 0
  %741 = vmatprep.subr.bf16.mxu0 0
  %742 = vmatpush1.bf16.msra.mxu0 0
  %743 = vmatprep.mubr.bf16.mxu0 0
  %744 = vmatmul.mubr.bf16.gmra.mrb[0].mxu0 %v79
  %v745 = vpop.f32.mrb[0].mxu0
  %v746 = vadd.f32 %v685, %v745
  %v747 = vpop.f32.mrb[0].mxu0
  %v748 = vpop.f32.mrb[0].mxu0
  %v749 = vadd.f32 %v685, %v748
  %v750 = vpop.f32.mrb[0].mxu0
  %751 = vdwg.mxu0
  %v752 = vmul.f32 %v415, %v746
  %v753 = vmul.f32 %v417, %v749
  %v754 = vadd.f32 %v664, %v752
  %v755 = vadd.f32 %v667, %v753
  %v756 = vtanh.pop %v754
  %v757 = vtanh.pop %v755
  %v758 = vsub.f32 1.0, %v585
  %v759 = vsub.f32 1.0, %v587
  %v760 = vmul.f32 %v758, %v756
  %v761 = vmul.f32 %v759, %v757
  %v762 = vmul.f32 %v585, %v35
  %v763 = vmul.f32 %v587, %v36
  %v764 = vadd.f32 %v760, %v762
  %v765 = vadd.f32 %v761, %v763
  %v766 = vmax.f32 %v764, 0.0
  %v767 = vmax.f32 %v765, 0.0
  %768 = vst.msk [vmem:[%s9] sm:$0xff] %vm77, %v766
  %769 = vst.msk [vmem:[%s9 + $0x8] sm:$0xff] %vm77, %v767
  // Predicated region
  $region38: #{attentive_fp_forward.6} parent=0 // pred_check
    _
  $region39: #{attentive_fp_forward.6} parent=0 // pred_check_branch
    %771 = sbr.rel (0) target = $region41
  $region40: #{attentive_fp_forward.6} parent=0 // pred_region
    _
  $region41: #{attentive_fp_forward.6} parent=0 // pred_fallthru
    _
  // Predicated region
  $region42: #{attentive_fp_forward.6} parent=0 // pred_check
    _
  $region43: #{attentive_fp_forward.6} parent=0 // pred_check_branch
    %773 = sbr.rel (0) target = $region45
  $region44: #{attentive_fp_forward.6} parent=0 // pred_region
    _
  $region45: #{attentive_fp_forward.6} parent=0 // pred_fallthru
    _

// kernel: attentive_fp_forward.8
$region0: #{attentive_fp_forward.8}
  #allocation0 [shape = 'u32[]', space=smem, size = 0x4, offset = 0x4, fixed_abs, tag = 'smem constant byte address 0x4 - core index']
  #allocation1 [shape = 'u32[144,128]{1,0:T(1,128)}', space=vmem, size = 0x12000, scoped, tag = 'internal scratch']
  #allocation2 [shape = 'f32[1,1]{1,0:T(1,128)S(1)}', space=vmem, size = 0x200, scoped, tag = 'scoped memory for attentive_fp_forward.8']
  %s0 = inlined_call_operand.vmem [shape: f32[2,64], index: 0, kind: input, shape index: {}]
  %s1 = inlined_call_operand.vmem [shape: bf16[2,16], index: 1, kind: input, shape index: {}]
  %s2 = inlined_call_operand.vmem [shape: f32[1,16], index: 2, kind: input, shape index: {}]
  %s3 = inlined_call_operand.vmem [shape: bf16[16,64], index: 3, kind: input, shape index: {}]
  %s4 = inlined_call_operand.vmem [shape: bf16[64,1], index: 4, kind: input, shape index: {}]
  %s5 = inlined_call_operand.<no memory space> [shape: f32[1,1], index: 5, kind: input, shape index: {}]
  %s6 = inlined_call_operand.vmem [shape: bf16[3,64,64], index: 6, kind: input, shape index: {}]
  %s7 = inlined_call_operand.vmem [shape: bf16[3,64,64], index: 7, kind: input, shape index: {}]
  %s8 = inlined_call_operand.vmem [shape: f32[4,1,64], index: 8, kind: input, shape index: {}]
  %s9 = inlined_call_operand.vmem [shape: f32[2,64], index: 9, kind: output, shape index: {}]
  %s10 = sld [smem:[#allocation0]]
  $region46: #{attentive_fp_forward.8} parent=0
    _
  %s12 = ssub.s32 1, %s10
  %s13 = scalar_select 0, %s12, %s10
  %v14 = vstv %s5
  %15 = vst [vmem:[#allocation2] sm:$0x1] %v14
  // Predicated region
  $region2: #{attentive_fp_forward.8} parent=0 // pred_check
    _
  $region3: #{attentive_fp_forward.8} parent=0 // pred_check_branch
    %17 = sbr.rel (0) target = $region5
  $region4: #{attentive_fp_forward.8} parent=0 // pred_region
    _
  $region5: #{attentive_fp_forward.8} parent=0 // pred_fallthru
    _
  // Predicated region
  $region6: #{attentive_fp_forward.8} parent=0 // pred_check
    _
  $region7: #{attentive_fp_forward.8} parent=0 // pred_check_branch
    %19 = sbr.rel (0) target = $region9
  $region8: #{attentive_fp_forward.8} parent=0 // pred_region
    _
  $region9: #{attentive_fp_forward.8} parent=0 // pred_fallthru
    _
  // Predicated region
  $region10: #{attentive_fp_forward.8} parent=0 // pred_check
    _
  $region11: #{attentive_fp_forward.8} parent=0 // pred_check_branch
    %21 = sbr.rel (0) target = $region13
  $region12: #{attentive_fp_forward.8} parent=0 // pred_region
    _
  $region13: #{attentive_fp_forward.8} parent=0 // pred_fallthru
    _
  // Predicated region
  $region14: #{attentive_fp_forward.8} parent=0 // pred_check
    _
  $region15: #{attentive_fp_forward.8} parent=0 // pred_check_branch
    %23 = sbr.rel (0) target = $region17
  $region16: #{attentive_fp_forward.8} parent=0 // pred_region
    _
  $region17: #{attentive_fp_forward.8} parent=0 // pred_fallthru
    _
  // Predicated region
  $region18: #{attentive_fp_forward.8} parent=0 // pred_check
    _
  $region19: #{attentive_fp_forward.8} parent=0 // pred_check_branch
    %25 = sbr.rel (0) target = $region21
  $region20: #{attentive_fp_forward.8} parent=0 // pred_region
    _
  $region21: #{attentive_fp_forward.8} parent=0 // pred_fallthru
    _
  // Predicated region
  $region22: #{attentive_fp_forward.8} parent=0 // pred_check
    _
  $region23: #{attentive_fp_forward.8} parent=0 // pred_check_branch
    %27 = sbr.rel (0) target = $region25
  $region24: #{attentive_fp_forward.8} parent=0 // pred_region
    _
  $region25: #{attentive_fp_forward.8} parent=0 // pred_fallthru
    _
  // Predicated region
  $region26: #{attentive_fp_forward.8} parent=0 // pred_check
    _
  $region27: #{attentive_fp_forward.8} parent=0 // pred_check_branch
    %29 = sbr.rel (0) target = $region29
  $region28: #{attentive_fp_forward.8} parent=0 // pred_region
    _
  $region29: #{attentive_fp_forward.8} parent=0 // pred_fallthru
    _
  // Predicated region
  $region30: #{attentive_fp_forward.8} parent=0 // pred_check
    _
  $region31: #{attentive_fp_forward.8} parent=0 // pred_check_branch
    %31 = sbr.rel (0) target = $region33
  $region32: #{attentive_fp_forward.8} parent=0 // pred_region
    _
  $region33: #{attentive_fp_forward.8} parent=0 // pred_fallthru
    _
  // Predicated region
  $region34: #{attentive_fp_forward.8} parent=0 // pred_check
    _
  $region35: #{attentive_fp_forward.8} parent=0 // pred_check_branch
    %33 = sbr.rel (0) target = $region37
  $region36: #{attentive_fp_forward.8} parent=0 // pred_region
    _
  $region37: #{attentive_fp_forward.8} parent=0 // pred_fallthru
    _
  %v35 = vld [vmem:[%s0] sm:$0x3]
  %v36 = vmax.f32 %v35, 0.0
  %v37 = vld [vmem:[%s4] sm:$0xf]
  %v38 = vld [vmem:[%s4 + $0x4] sm:$0xf]
  %v39 = vld [vmem:[%s4 + $0x8] sm:$0xf]
  %v40 = vld [vmem:[%s4 + $0xc] sm:$0xf]
  %v41 = vld [vmem:[%s4 + $0x10] sm:$0xf]
  %v42 = vld [vmem:[%s4 + $0x14] sm:$0xf]
  %v43 = vld [vmem:[%s4 + $0x18] sm:$0xf]
  %v44 = vld [vmem:[%s4 + $0x1c] sm:$0xf]
  %v45 = vpack.c.bf16 %v36, %v36
  %v46 = vld [vmem:[#allocation2] sm:$0x1]
  %v48 = vlaneseq
  %v49 = vshrl.u32 %v48, 7
  %v50 = vsub.s32 0, %v49
  %v51 = vrot.slane %v46, %v50
  %v61 = vunpack.c.l.b16 %v37
  %v62 = vunpack.c.l.b16 %v38
  %v63 = vunpack.c.l.b16 %v39
  %v64 = vunpack.c.l.b16 %v40
  %v65 = vunpack.c.l.b16 %v41
  %v66 = vunpack.c.l.b16 %v42
  %v67 = vunpack.c.l.b16 %v43
  %v68 = vunpack.c.l.b16 %v44
  %v69 = vpack.c.b16 %v62, %v61
  %v70 = vpack.c.b16 %v64, %v63
  %v71 = vpack.c.b16 %v66, %v65
  %v72 = vpack.c.b16 %v68, %v67
  %vm77 = vcmask 523264
  %v79 = vsel %vm77, %v45, 0
  %81 = vmatprep.subr.bf16.mxu0 0
  %82 = vmatpush1.bf16.msra.mxu0 %v69
  %83 = vmatprep.subr.bf16.mxu0 0
  %84 = vmatpush1.bf16.msra.mxu0 %v70
  %85 = vmatprep.subr.bf16.mxu0 0
  %86 = vmatpush1.bf16.msra.mxu0 %v71
  %87 = vmatprep.subr.bf16.mxu0 0
  %88 = vmatpush1.bf16.msra.mxu0 %v72
  %89 = vmatprep.subr.bf16.mxu0 0
  %90 = vmatpush1.bf16.msra.mxu0 0
  %91 = vmatprep.subr.bf16.mxu0 0
  %92 = vmatpush1.bf16.msra.mxu0 0
  %93 = vmatprep.subr.bf16.mxu0 0
  %94 = vmatpush1.bf16.msra.mxu0 0
  %95 = vmatprep.subr.bf16.mxu0 0
  %96 = vmatpush1.bf16.msra.mxu0 0
  %97 = vmatprep.subr.bf16.mxu0 0
  %98 = vmatpush1.bf16.msra.mxu0 0
  %99 = vmatprep.subr.bf16.mxu0 0
  %100 = vmatpush1.bf16.msra.mxu0 0
  %101 = vmatprep.subr.bf16.mxu0 0
  %102 = vmatpush1.bf16.msra.mxu0 0
  %103 = vmatprep.subr.bf16.mxu0 0
  %104 = vmatpush1.bf16.msra.mxu0 0
  %105 = vmatprep.subr.bf16.mxu0 0
  %106 = vmatpush1.bf16.msra.mxu0 0
  %107 = vmatprep.subr.bf16.mxu0 0
  %108 = vmatpush1.bf16.msra.mxu0 0
  %109 = vmatprep.subr.bf16.mxu0 0
  %110 = vmatpush1.bf16.msra.mxu0 0
  %111 = vmatprep.subr.bf16.mxu0 0
  %112 = vmatpush1.bf16.msra.mxu0 0
  %113 = vmatprep.mubr.bf16.mxu0 0
  %114 = vmatmul.mubr.bf16.gmra.mrb[0].mxu0 %v79
  %v115 = vpop.f32.mrb[0].mxu0
  %v116 = vadd.f32 %v51, %v115
  %v117 = vpop.f32.mrb[0].mxu0
  %v118 = vpop.f32.mrb[0].mxu0
  %v119 = vpop.f32.mrb[0].mxu0
  %120 = vdwg.mxu0
  %v121 = vld [vmem:[%s2] sm:$0x1]
  %123 = vset.pattern.permute.xlu0 0
  %124 = vperm.xlu0 %123, %v116
  %v125 = vpop.permute.xlu0 %124
  %v128 = vlaneseq
  %v129 = vshrl.u32 %v128, 7
  %v130 = vsub.s32 0, %v129
  %v131 = vrot.slane %v121, %v130
  %v133 = vadd.f32 %v125, %v131
  %v134 = vmul.f32 %v133, 0.01
  %v135 = vmax.f32 %v133, %v134
  %v136 = vld [vmem:[%s1] sm:$0x1]
  %v137 = vunpack.c.l.bf16 %v136
  %vm138 = vcmp.gt.f32.partialorder %v137, 0.0
  %v139 = vsel %vm138, %v135, -1e+30
  %vm140 = vcmask 123904
  %v141 = vsel %vm140, %v139, -inf
  %142 = vmax.xlane.f32.xlu0 %v141
  %v143 = vpop.xlane.xlu0 %142
  %v144 = vsub.f32 %v139, %v143
  %v145 = vmul.f32 %v144, 1.442695
  %v146 = vpow.pop %v145
  %v147 = vmul.f32 %v146, %v137
  %v148 = vsel %vm140, %v147, 0.0
  %149 = vadd.xlane.f32.xlu0 %v148
  %v150 = vpop.xlane.xlu0 %149
  %vm151 = vcmp.gt.f32.partialorder %v150, 0.0
  %v152 = vsel %vm151, %v150, 1.0
  %v153 = vrcp.pop %v152
  %v154 = vmul.f32 %v147, %v153
  %v155 = vld [vmem:[%s3] sm:$0xf]
  %v156 = vld [vmem:[%s3 + $0x4] sm:$0xf]
  %v157 = vpack.c.bf16 %v154, %v154
  %v160 = vunpack.c.l.b16 %v155
  %v161 = vunpack.c.l.b16 %v156
  %v162 = vpack.c.b16 %v161, %v160
  %vm164 = vcmask 130048
  %v166 = vsel %vm164, %v157, 0
  %168 = vmatprep.subr.bf16.mxu0 0
  %169 = vmatpush1.bf16.msra.mxu0 %v162
  %170 = vmatprep.subr.bf16.mxu0 0
  %171 = vmatpush1.bf16.msra.mxu0 0
  %172 = vmatprep.subr.bf16.mxu0 0
  %173 = vmatpush1.bf16.msra.mxu0 0
  %174 = vmatprep.subr.bf16.mxu0 0
  %175 = vmatpush1.bf16.msra.mxu0 0
  %176 = vmatprep.subr.bf16.mxu0 0
  %177 = vmatpush1.bf16.msra.mxu0 0
  %178 = vmatprep.subr.bf16.mxu0 0
  %179 = vmatpush1.bf16.msra.mxu0 0
  %180 = vmatprep.subr.bf16.mxu0 0
  %181 = vmatpush1.bf16.msra.mxu0 0
  %182 = vmatprep.subr.bf16.mxu0 0
  %183 = vmatpush1.bf16.msra.mxu0 0
  %184 = vmatprep.subr.bf16.mxu0 0
  %185 = vmatpush1.bf16.msra.mxu0 0
  %186 = vmatprep.subr.bf16.mxu0 0
  %187 = vmatpush1.bf16.msra.mxu0 0
  %188 = vmatprep.subr.bf16.mxu0 0
  %189 = vmatpush1.bf16.msra.mxu0 0
  %190 = vmatprep.subr.bf16.mxu0 0
  %191 = vmatpush1.bf16.msra.mxu0 0
  %192 = vmatprep.subr.bf16.mxu0 0
  %193 = vmatpush1.bf16.msra.mxu0 0
  %194 = vmatprep.subr.bf16.mxu0 0
  %195 = vmatpush1.bf16.msra.mxu0 0
  %196 = vmatprep.subr.bf16.mxu0 0
  %197 = vmatpush1.bf16.msra.mxu0 0
  %198 = vmatprep.subr.bf16.mxu0 0
  %199 = vmatpush1.bf16.msra.mxu0 0
  %200 = vmatprep.mubr.bf16.mxu0 0
  %201 = vmatmul.mubr.bf16.gmra.mrb[0].mxu0 %v166
  %v202 = vpop.f32.mrb[0].mxu0
  %v203 = vadd.f32 0.0, %v202
  %v204 = vpop.f32.mrb[0].mxu0
  %v205 = vpop.f32.mrb[0].mxu0
  %v206 = vpop.f32.mrb[0].mxu0
  %207 = vdwg.mxu0
  %vm208 = vcmp.gt.f32.partialorder %v203, 0.0
  %v209 = vmin.f32 %v203, 0.0
  %v210 = vmul.f32 %v209, 1.442695
  %v211 = vpow.pop %v210
  %v212 = vsub.f32 %v211, 1.0
  %v213 = vsel %vm208, %v203, %v212
  %v214 = vmax.f32 %v213, 0.0
  %v215 = vld [vmem:[%s6] sm:$0xf]
  %v216 = vld [vmem:[%s6 + $0x4] sm:$0xf]
  %v217 = vld [vmem:[%s6 + $0x8] sm:$0xf]
  %v218 = vld [vmem:[%s6 + $0xc] sm:$0xf]
  %v219 = vld [vmem:[%s6 + $0x10] sm:$0xf]
  %v220 = vld [vmem:[%s6 + $0x14] sm:$0xf]
  %v221 = vld [vmem:[%s6 + $0x18] sm:$0xf]
  %v222 = vld [vmem:[%s6 + $0x1c] sm:$0xf]
  %v223 = vpack.c.bf16 %v214, %v214
  %v224 = vld [vmem:[%s7] sm:$0xf]
  %v225 = vld [vmem:[%s7 + $0x4] sm:$0xf]
  %v226 = vld [vmem:[%s7 + $0x8] sm:$0xf]
  %v227 = vld [vmem:[%s7 + $0xc] sm:$0xf]
  %v228 = vld [vmem:[%s7 + $0x10] sm:$0xf]
  %v229 = vld [vmem:[%s7 + $0x14] sm:$0xf]
  %v230 = vld [vmem:[%s7 + $0x18] sm:$0xf]
  %v231 = vld [vmem:[%s7 + $0x1c] sm:$0xf]
  %v232 = vpack.c.bf16 %v35, %v35
  %v241 = vunpack.c.l.b16 %v224
  %v242 = vunpack.c.l.b16 %v225
  %v243 = vunpack.c.l.b16 %v226
  %v244 = vunpack.c.l.b16 %v227
  %v245 = vunpack.c.l.b16 %v228
  %v246 = vunpack.c.l.b16 %v229
  %v247 = vunpack.c.l.b16 %v230
  %v248 = vunpack.c.l.b16 %v231
  %v249 = vpack.c.b16 %v242, %v241
  %v250 = vpack.c.b16 %v244, %v243
  %v251 = vpack.c.b16 %v246, %v245
  %v252 = vpack.c.b16 %v248, %v247
  %v258 = vsel %vm77, %v232, 0
  %260 = vmatprep.subr.bf16.mxu0 0
  %261 = vmatpush1.bf16.msra.mxu0 %v249
  %262 = vmatprep.subr.bf16.mxu0 0
  %263 = vmatpush1.bf16.msra.mxu0 %v250
  %264 = vmatprep.subr.bf16.mxu0 0
  %265 = vmatpush1.bf16.msra.mxu0 %v251
  %266 = vmatprep.subr.bf16.mxu0 0
  %267 = vmatpush1.bf16.msra.mxu0 %v252
  %268 = vmatprep.subr.bf16.mxu0 0
  %269 = vmatpush1.bf16.msra.mxu0 0
  %270 = vmatprep.subr.bf16.mxu0 0
  %271 = vmatpush1.bf16.msra.mxu0 0
  %272 = vmatprep.subr.bf16.mxu0 0
  %273 = vmatpush1.bf16.msra.mxu0 0
  %274 = vmatprep.subr.bf16.mxu0 0
  %275 = vmatpush1.bf16.msra.mxu0 0
  %276 = vmatprep.subr.bf16.mxu0 0
  %277 = vmatpush1.bf16.msra.mxu0 0
  %278 = vmatprep.subr.bf16.mxu0 0
  %279 = vmatpush1.bf16.msra.mxu0 0
  %280 = vmatprep.subr.bf16.mxu0 0
  %281 = vmatpush1.bf16.msra.mxu0 0
  %282 = vmatprep.subr.bf16.mxu0 0
  %283 = vmatpush1.bf16.msra.mxu0 0
  %284 = vmatprep.subr.bf16.mxu0 0
  %285 = vmatpush1.bf16.msra.mxu0 0
  %286 = vmatprep.subr.bf16.mxu0 0
  %287 = vmatpush1.bf16.msra.mxu0 0
  %288 = vmatprep.subr.bf16.mxu0 0
  %289 = vmatpush1.bf16.msra.mxu0 0
  %290 = vmatprep.subr.bf16.mxu0 0
  %291 = vmatpush1.bf16.msra.mxu0 0
  %292 = vmatprep.mubr.bf16.mxu0 0
  %293 = vmatmul.mubr.bf16.gmra.mrb[0].mxu0 %v258
  %v294 = vpop.f32.mrb[0].mxu0
  %v295 = vadd.f32 0.0, %v294
  %v296 = vpop.f32.mrb[0].mxu0
  %v297 = vpop.f32.mrb[0].mxu0
  %v298 = vpop.f32.mrb[0].mxu0
  %299 = vdwg.mxu0
  %v308 = vunpack.c.l.b16 %v215
  %v309 = vunpack.c.l.b16 %v216
  %v310 = vunpack.c.l.b16 %v217
  %v311 = vunpack.c.l.b16 %v218
  %v312 = vunpack.c.l.b16 %v219
  %v313 = vunpack.c.l.b16 %v220
  %v314 = vunpack.c.l.b16 %v221
  %v315 = vunpack.c.l.b16 %v222
  %v316 = vpack.c.b16 %v309, %v308
  %v317 = vpack.c.b16 %v311, %v310
  %v318 = vpack.c.b16 %v313, %v312
  %v319 = vpack.c.b16 %v315, %v314
  %v325 = vsel %vm77, %v223, 0
  %327 = vmatprep.subr.bf16.mxu0 0
  %328 = vmatpush1.bf16.msra.mxu0 %v316
  %329 = vmatprep.subr.bf16.mxu0 0
  %330 = vmatpush1.bf16.msra.mxu0 %v317
  %331 = vmatprep.subr.bf16.mxu0 0
  %332 = vmatpush1.bf16.msra.mxu0 %v318
  %333 = vmatprep.subr.bf16.mxu0 0
  %334 = vmatpush1.bf16.msra.mxu0 %v319
  %335 = vmatprep.subr.bf16.mxu0 0
  %336 = vmatpush1.bf16.msra.mxu0 0
  %337 = vmatprep.subr.bf16.mxu0 0
  %338 = vmatpush1.bf16.msra.mxu0 0
  %339 = vmatprep.subr.bf16.mxu0 0
  %340 = vmatpush1.bf16.msra.mxu0 0
  %341 = vmatprep.subr.bf16.mxu0 0
  %342 = vmatpush1.bf16.msra.mxu0 0
  %343 = vmatprep.subr.bf16.mxu0 0
  %344 = vmatpush1.bf16.msra.mxu0 0
  %345 = vmatprep.subr.bf16.mxu0 0
  %346 = vmatpush1.bf16.msra.mxu0 0
  %347 = vmatprep.subr.bf16.mxu0 0
  %348 = vmatpush1.bf16.msra.mxu0 0
  %349 = vmatprep.subr.bf16.mxu0 0
  %350 = vmatpush1.bf16.msra.mxu0 0
  %351 = vmatprep.subr.bf16.mxu0 0
  %352 = vmatpush1.bf16.msra.mxu0 0
  %353 = vmatprep.subr.bf16.mxu0 0
  %354 = vmatpush1.bf16.msra.mxu0 0
  %355 = vmatprep.subr.bf16.mxu0 0
  %356 = vmatpush1.bf16.msra.mxu0 0
  %357 = vmatprep.subr.bf16.mxu0 0
  %358 = vmatpush1.bf16.msra.mxu0 0
  %359 = vmatprep.mubr.bf16.mxu0 0
  %360 = vmatmul.mubr.bf16.gmra.mrb[0].mxu0 %v325
  %v361 = vpop.f32.mrb[0].mxu0
  %v362 = vadd.f32 %v295, %v361
  %v363 = vpop.f32.mrb[0].mxu0
  %v364 = vpop.f32.mrb[0].mxu0
  %v365 = vpop.f32.mrb[0].mxu0
  %366 = vdwg.mxu0
  %v367 = vld [vmem:[%s8] sm:$0x1]
  %v369 = vlaneseq
  %v370 = vshrl.u32 %v369, 7
  %v371 = vsub.s32 0, %v370
  %v372 = vrot.slane %v367, %v371
  %v374 = vadd.f32 %v362, %v372
  %v375 = vxor.u32 %v374, 2147483648
  %v376 = vmul.f32 %v375, 1.442695
  %v377 = vpow.pop %v376
  %v378 = vadd.f32 %v377, 1.0
  %v379 = vrcp.pop %v378
  %v380 = vmul.f32 1.0, %v379
  %s381 = scalar_lea.vmem %s6, 32
  %v382 = vld [vmem:[%s381] sm:$0xf]
  %v383 = vld [vmem:[%s381 + $0x4] sm:$0xf]
  %v384 = vld [vmem:[%s381 + $0x8] sm:$0xf]
  %v385 = vld [vmem:[%s381 + $0xc] sm:$0xf]
  %v386 = vld [vmem:[%s381 + $0x10] sm:$0xf]
  %v387 = vld [vmem:[%s381 + $0x14] sm:$0xf]
  %v388 = vld [vmem:[%s381 + $0x18] sm:$0xf]
  %v389 = vld [vmem:[%s381 + $0x1c] sm:$0xf]
  %s390 = scalar_lea.vmem %s7, 32
  %v391 = vld [vmem:[%s390] sm:$0xf]
  %v392 = vld [vmem:[%s390 + $0x4] sm:$0xf]
  %v393 = vld [vmem:[%s390 + $0x8] sm:$0xf]
  %v394 = vld [vmem:[%s390 + $0xc] sm:$0xf]
  %v395 = vld [vmem:[%s390 + $0x10] sm:$0xf]
  %v396 = vld [vmem:[%s390 + $0x14] sm:$0xf]
  %v397 = vld [vmem:[%s390 + $0x18] sm:$0xf]
  %v398 = vld [vmem:[%s390 + $0x1c] sm:$0xf]
  %v407 = vunpack.c.l.b16 %v391
  %v408 = vunpack.c.l.b16 %v392
  %v409 = vunpack.c.l.b16 %v393
  %v410 = vunpack.c.l.b16 %v394
  %v411 = vunpack.c.l.b16 %v395
  %v412 = vunpack.c.l.b16 %v396
  %v413 = vunpack.c.l.b16 %v397
  %v414 = vunpack.c.l.b16 %v398
  %v415 = vpack.c.b16 %v408, %v407
  %v416 = vpack.c.b16 %v410, %v409
  %v417 = vpack.c.b16 %v412, %v411
  %v418 = vpack.c.b16 %v414, %v413
  %423 = vmatprep.subr.bf16.mxu0 0
  %424 = vmatpush1.bf16.msra.mxu0 %v415
  %425 = vmatprep.subr.bf16.mxu0 0
  %426 = vmatpush1.bf16.msra.mxu0 %v416
  %427 = vmatprep.subr.bf16.mxu0 0
  %428 = vmatpush1.bf16.msra.mxu0 %v417
  %429 = vmatprep.subr.bf16.mxu0 0
  %430 = vmatpush1.bf16.msra.mxu0 %v418
  %431 = vmatprep.subr.bf16.mxu0 0
  %432 = vmatpush1.bf16.msra.mxu0 0
  %433 = vmatprep.subr.bf16.mxu0 0
  %434 = vmatpush1.bf16.msra.mxu0 0
  %435 = vmatprep.subr.bf16.mxu0 0
  %436 = vmatpush1.bf16.msra.mxu0 0
  %437 = vmatprep.subr.bf16.mxu0 0
  %438 = vmatpush1.bf16.msra.mxu0 0
  %439 = vmatprep.subr.bf16.mxu0 0
  %440 = vmatpush1.bf16.msra.mxu0 0
  %441 = vmatprep.subr.bf16.mxu0 0
  %442 = vmatpush1.bf16.msra.mxu0 0
  %443 = vmatprep.subr.bf16.mxu0 0
  %444 = vmatpush1.bf16.msra.mxu0 0
  %445 = vmatprep.subr.bf16.mxu0 0
  %446 = vmatpush1.bf16.msra.mxu0 0
  %447 = vmatprep.subr.bf16.mxu0 0
  %448 = vmatpush1.bf16.msra.mxu0 0
  %449 = vmatprep.subr.bf16.mxu0 0
  %450 = vmatpush1.bf16.msra.mxu0 0
  %451 = vmatprep.subr.bf16.mxu0 0
  %452 = vmatpush1.bf16.msra.mxu0 0
  %453 = vmatprep.subr.bf16.mxu0 0
  %454 = vmatpush1.bf16.msra.mxu0 0
  %455 = vmatprep.mubr.bf16.mxu0 0
  %456 = vmatmul.mubr.bf16.gmra.mrb[0].mxu0 %v258
  %v457 = vpop.f32.mrb[0].mxu0
  %v458 = vadd.f32 0.0, %v457
  %v459 = vpop.f32.mrb[0].mxu0
  %v460 = vpop.f32.mrb[0].mxu0
  %v461 = vpop.f32.mrb[0].mxu0
  %462 = vdwg.mxu0
  %v471 = vunpack.c.l.b16 %v382
  %v472 = vunpack.c.l.b16 %v383
  %v473 = vunpack.c.l.b16 %v384
  %v474 = vunpack.c.l.b16 %v385
  %v475 = vunpack.c.l.b16 %v386
  %v476 = vunpack.c.l.b16 %v387
  %v477 = vunpack.c.l.b16 %v388
  %v478 = vunpack.c.l.b16 %v389
  %v479 = vpack.c.b16 %v472, %v471
  %v480 = vpack.c.b16 %v474, %v473
  %v481 = vpack.c.b16 %v476, %v475
  %v482 = vpack.c.b16 %v478, %v477
  %487 = vmatprep.subr.bf16.mxu0 0
  %488 = vmatpush1.bf16.msra.mxu0 %v479
  %489 = vmatprep.subr.bf16.mxu0 0
  %490 = vmatpush1.bf16.msra.mxu0 %v480
  %491 = vmatprep.subr.bf16.mxu0 0
  %492 = vmatpush1.bf16.msra.mxu0 %v481
  %493 = vmatprep.subr.bf16.mxu0 0
  %494 = vmatpush1.bf16.msra.mxu0 %v482
  %495 = vmatprep.subr.bf16.mxu0 0
  %496 = vmatpush1.bf16.msra.mxu0 0
  %497 = vmatprep.subr.bf16.mxu0 0
  %498 = vmatpush1.bf16.msra.mxu0 0
  %499 = vmatprep.subr.bf16.mxu0 0
  %500 = vmatpush1.bf16.msra.mxu0 0
  %501 = vmatprep.subr.bf16.mxu0 0
  %502 = vmatpush1.bf16.msra.mxu0 0
  %503 = vmatprep.subr.bf16.mxu0 0
  %504 = vmatpush1.bf16.msra.mxu0 0
  %505 = vmatprep.subr.bf16.mxu0 0
  %506 = vmatpush1.bf16.msra.mxu0 0
  %507 = vmatprep.subr.bf16.mxu0 0
  %508 = vmatpush1.bf16.msra.mxu0 0
  %509 = vmatprep.subr.bf16.mxu0 0
  %510 = vmatpush1.bf16.msra.mxu0 0
  %511 = vmatprep.subr.bf16.mxu0 0
  %512 = vmatpush1.bf16.msra.mxu0 0
  %513 = vmatprep.subr.bf16.mxu0 0
  %514 = vmatpush1.bf16.msra.mxu0 0
  %515 = vmatprep.subr.bf16.mxu0 0
  %516 = vmatpush1.bf16.msra.mxu0 0
  %517 = vmatprep.subr.bf16.mxu0 0
  %518 = vmatpush1.bf16.msra.mxu0 0
  %519 = vmatprep.mubr.bf16.mxu0 0
  %520 = vmatmul.mubr.bf16.gmra.mrb[0].mxu0 %v325
  %v521 = vpop.f32.mrb[0].mxu0
  %v522 = vadd.f32 %v458, %v521
  %v523 = vpop.f32.mrb[0].mxu0
  %v524 = vpop.f32.mrb[0].mxu0
  %v525 = vpop.f32.mrb[0].mxu0
  %526 = vdwg.mxu0
  %s527 = scalar_lea.vmem %s8, 1
  %v528 = vld [vmem:[%s527] sm:$0x1]
  %v530 = vlaneseq
  %v531 = vshrl.u32 %v530, 7
  %v532 = vsub.s32 0, %v531
  %v533 = vrot.slane %v528, %v532
  %v535 = vadd.f32 %v522, %v533
  %v536 = vxor.u32 %v535, 2147483648
  %v537 = vmul.f32 %v536, 1.442695
  %v538 = vpow.pop %v537
  %v539 = vadd.f32 %v538, 1.0
  %v540 = vrcp.pop %v539
  %v541 = vmul.f32 1.0, %v540
  %s542 = scalar_lea.vmem %s6, 64
  %v543 = vld [vmem:[%s542] sm:$0xf]
  %v544 = vld [vmem:[%s542 + $0x4] sm:$0xf]
  %v545 = vld [vmem:[%s542 + $0x8] sm:$0xf]
  %v546 = vld [vmem:[%s542 + $0xc] sm:$0xf]
  %v547 = vld [vmem:[%s542 + $0x10] sm:$0xf]
  %v548 = vld [vmem:[%s542 + $0x14] sm:$0xf]
  %v549 = vld [vmem:[%s542 + $0x18] sm:$0xf]
  %v550 = vld [vmem:[%s542 + $0x1c] sm:$0xf]
  %s551 = scalar_lea.vmem %s8, 2
  %v552 = vld [vmem:[%s551] sm:$0x1]
  %v554 = vlaneseq
  %v555 = vshrl.u32 %v554, 7
  %v556 = vsub.s32 0, %v555
  %v557 = vrot.slane %v552, %v556
  %v567 = vunpack.c.l.b16 %v543
  %v568 = vunpack.c.l.b16 %v544
  %v569 = vunpack.c.l.b16 %v545
  %v570 = vunpack.c.l.b16 %v546
  %v571 = vunpack.c.l.b16 %v547
  %v572 = vunpack.c.l.b16 %v548
  %v573 = vunpack.c.l.b16 %v549
  %v574 = vunpack.c.l.b16 %v550
  %v575 = vpack.c.b16 %v568, %v567
  %v576 = vpack.c.b16 %v570, %v569
  %v577 = vpack.c.b16 %v572, %v571
  %v578 = vpack.c.b16 %v574, %v573
  %583 = vmatprep.subr.bf16.mxu0 0
  %584 = vmatpush1.bf16.msra.mxu0 %v575
  %585 = vmatprep.subr.bf16.mxu0 0
  %586 = vmatpush1.bf16.msra.mxu0 %v576
  %587 = vmatprep.subr.bf16.mxu0 0
  %588 = vmatpush1.bf16.msra.mxu0 %v577
  %589 = vmatprep.subr.bf16.mxu0 0
  %590 = vmatpush1.bf16.msra.mxu0 %v578
  %591 = vmatprep.subr.bf16.mxu0 0
  %592 = vmatpush1.bf16.msra.mxu0 0
  %593 = vmatprep.subr.bf16.mxu0 0
  %594 = vmatpush1.bf16.msra.mxu0 0
  %595 = vmatprep.subr.bf16.mxu0 0
  %596 = vmatpush1.bf16.msra.mxu0 0
  %597 = vmatprep.subr.bf16.mxu0 0
  %598 = vmatpush1.bf16.msra.mxu0 0
  %599 = vmatprep.subr.bf16.mxu0 0
  %600 = vmatpush1.bf16.msra.mxu0 0
  %601 = vmatprep.subr.bf16.mxu0 0
  %602 = vmatpush1.bf16.msra.mxu0 0
  %603 = vmatprep.subr.bf16.mxu0 0
  %604 = vmatpush1.bf16.msra.mxu0 0
  %605 = vmatprep.subr.bf16.mxu0 0
  %606 = vmatpush1.bf16.msra.mxu0 0
  %607 = vmatprep.subr.bf16.mxu0 0
  %608 = vmatpush1.bf16.msra.mxu0 0
  %609 = vmatprep.subr.bf16.mxu0 0
  %610 = vmatpush1.bf16.msra.mxu0 0
  %611 = vmatprep.subr.bf16.mxu0 0
  %612 = vmatpush1.bf16.msra.mxu0 0
  %613 = vmatprep.subr.bf16.mxu0 0
  %614 = vmatpush1.bf16.msra.mxu0 0
  %615 = vmatprep.mubr.bf16.mxu0 0
  %616 = vmatmul.mubr.bf16.gmra.mrb[0].mxu0 %v325
  %v617 = vpop.f32.mrb[0].mxu0
  %v618 = vadd.f32 %v557, %v617
  %v619 = vpop.f32.mrb[0].mxu0
  %v620 = vpop.f32.mrb[0].mxu0
  %v621 = vpop.f32.mrb[0].mxu0
  %622 = vdwg.mxu0
  %s623 = scalar_lea.vmem %s7, 64
  %v624 = vld [vmem:[%s623] sm:$0xf]
  %v625 = vld [vmem:[%s623 + $0x4] sm:$0xf]
  %v626 = vld [vmem:[%s623 + $0x8] sm:$0xf]
  %v627 = vld [vmem:[%s623 + $0xc] sm:$0xf]
  %v628 = vld [vmem:[%s623 + $0x10] sm:$0xf]
  %v629 = vld [vmem:[%s623 + $0x14] sm:$0xf]
  %v630 = vld [vmem:[%s623 + $0x18] sm:$0xf]
  %v631 = vld [vmem:[%s623 + $0x1c] sm:$0xf]
  %s632 = scalar_lea.vmem %s8, 3
  %v633 = vld [vmem:[%s632] sm:$0x1]
  %v635 = vlaneseq
  %v636 = vshrl.u32 %v635, 7
  %v637 = vsub.s32 0, %v636
  %v638 = vrot.slane %v633, %v637
  %v648 = vunpack.c.l.b16 %v624
  %v649 = vunpack.c.l.b16 %v625
  %v650 = vunpack.c.l.b16 %v626
  %v651 = vunpack.c.l.b16 %v627
  %v652 = vunpack.c.l.b16 %v628
  %v653 = vunpack.c.l.b16 %v629
  %v654 = vunpack.c.l.b16 %v630
  %v655 = vunpack.c.l.b16 %v631
  %v656 = vpack.c.b16 %v649, %v648
  %v657 = vpack.c.b16 %v651, %v650
  %v658 = vpack.c.b16 %v653, %v652
  %v659 = vpack.c.b16 %v655, %v654
  %664 = vmatprep.subr.bf16.mxu0 0
  %665 = vmatpush1.bf16.msra.mxu0 %v656
  %666 = vmatprep.subr.bf16.mxu0 0
  %667 = vmatpush1.bf16.msra.mxu0 %v657
  %668 = vmatprep.subr.bf16.mxu0 0
  %669 = vmatpush1.bf16.msra.mxu0 %v658
  %670 = vmatprep.subr.bf16.mxu0 0
  %671 = vmatpush1.bf16.msra.mxu0 %v659
  %672 = vmatprep.subr.bf16.mxu0 0
  %673 = vmatpush1.bf16.msra.mxu0 0
  %674 = vmatprep.subr.bf16.mxu0 0
  %675 = vmatpush1.bf16.msra.mxu0 0
  %676 = vmatprep.subr.bf16.mxu0 0
  %677 = vmatpush1.bf16.msra.mxu0 0
  %678 = vmatprep.subr.bf16.mxu0 0
  %679 = vmatpush1.bf16.msra.mxu0 0
  %680 = vmatprep.subr.bf16.mxu0 0
  %681 = vmatpush1.bf16.msra.mxu0 0
  %682 = vmatprep.subr.bf16.mxu0 0
  %683 = vmatpush1.bf16.msra.mxu0 0
  %684 = vmatprep.subr.bf16.mxu0 0
  %685 = vmatpush1.bf16.msra.mxu0 0
  %686 = vmatprep.subr.bf16.mxu0 0
  %687 = vmatpush1.bf16.msra.mxu0 0
  %688 = vmatprep.subr.bf16.mxu0 0
  %689 = vmatpush1.bf16.msra.mxu0 0
  %690 = vmatprep.subr.bf16.mxu0 0
  %691 = vmatpush1.bf16.msra.mxu0 0
  %692 = vmatprep.subr.bf16.mxu0 0
  %693 = vmatpush1.bf16.msra.mxu0 0
  %694 = vmatprep.subr.bf16.mxu0 0
  %695 = vmatpush1.bf16.msra.mxu0 0
  %696 = vmatprep.mubr.bf16.mxu0 0
  %697 = vmatmul.mubr.bf16.gmra.mrb[0].mxu0 %v258
  %v698 = vpop.f32.mrb[0].mxu0
  %v699 = vadd.f32 %v638, %v698
  %v700 = vpop.f32.mrb[0].mxu0
  %v701 = vpop.f32.mrb[0].mxu0
  %v702 = vpop.f32.mrb[0].mxu0
  %703 = vdwg.mxu0
  %v704 = vmul.f32 %v380, %v699
  %v705 = vadd.f32 %v618, %v704
  %v706 = vtanh.pop %v705
  %v707 = vsub.f32 1.0, %v541
  %v708 = vmul.f32 %v707, %v706
  %v709 = vmul.f32 %v541, %v35
  %v710 = vadd.f32 %v708, %v709
  %vm711 = vcmask 517120
  %712 = vst.msk [vmem:[%s9] sm:$0x3] %vm711, %v710
  // Predicated region
  $region38: #{attentive_fp_forward.8} parent=0 // pred_check
    _
  $region39: #{attentive_fp_forward.8} parent=0 // pred_check_branch
    %714 = sbr.rel (0) target = $region41
  $region40: #{attentive_fp_forward.8} parent=0 // pred_region
    _
  $region41: #{attentive_fp_forward.8} parent=0 // pred_fallthru
    _
  // Predicated region
  $region42: #{attentive_fp_forward.8} parent=0 // pred_check
    _
  $region43: #{attentive_fp_forward.8} parent=0 // pred_check_branch
    %716 = sbr.rel (0) target = $region45
  $region44: #{attentive_fp_forward.8} parent=0 // pred_region
    _
  $region45: #{attentive_fp_forward.8} parent=0 // pred_fallthru
    _

// kernel: attentive_fp_forward.5
$region0: #{attentive_fp_forward.5}
  #allocation0 [shape = 'u32[]', space=smem, size = 0x4, offset = 0x4, fixed_abs, tag = 'smem constant byte address 0x4 - core index']
  #allocation1 [shape = 'u32[144,128]{1,0:T(1,128)}', space=vmem, size = 0x12000, scoped, tag = 'internal scratch']
  #allocation2 [shape = 'f32[16,1]{1,0:T(8,128)}', space=vmem, size = 0x2000, scoped, tag = 'scratch operand']
  #allocation3 [shape = 'f32[16,1]{1,0:T(8,128)}', space=vmem, size = 0x2000, scoped, tag = 'scratch operand']
  #allocation4 [shape = 'f32[16,64]{1,0:T(8,128)}', space=vmem, size = 0x2000, scoped, tag = 'scratch operand']
  %s0 = inlined_call_operand.vmem [shape: bf16[16,16,11], index: 0, kind: input, shape index: {}]
  %s1 = inlined_call_operand.vmem [shape: bf16[16,16], index: 1, kind: input, shape index: {}]
  %s2 = inlined_call_operand.vmem [shape: f32[16,64], index: 2, kind: input, shape index: {}]
  %s3 = inlined_call_operand.vmem [shape: f32[16,1], index: 3, kind: input, shape index: {}]
  %s4 = inlined_call_operand.vmem [shape: bf16[16,64], index: 4, kind: input, shape index: {}]
  %s5 = inlined_call_operand.vmem [shape: bf16[11,64], index: 5, kind: input, shape index: {}]
  %s6 = inlined_call_operand.vmem [shape: f32[1,64], index: 6, kind: input, shape index: {}]
  %s7 = inlined_call_operand.vmem [shape: bf16[64,64], index: 7, kind: input, shape index: {}]
  %s8 = inlined_call_operand.vmem [shape: f32[1,64], index: 8, kind: input, shape index: {}]
  %s9 = inlined_call_operand.vmem [shape: bf16[3,64,64], index: 9, kind: input, shape index: {}]
  %s10 = inlined_call_operand.vmem [shape: bf16[3,64,64], index: 10, kind: input, shape index: {}]
  %s11 = inlined_call_operand.vmem [shape: f32[4,1,64], index: 11, kind: input, shape index: {}]
  %s12 = inlined_call_operand.vmem [shape: f32[16,64], index: 12, kind: output, shape index: {}]
  %s13 = sld [smem:[#allocation0]]
  $region66: #{attentive_fp_forward.5} parent=0
    _
  %s15 = ssub.s32 1, %s13
  %s16 = scalar_select 0, %s15, %s13
  // Predicated region
  $region2: #{attentive_fp_forward.5} parent=0 // pred_check
    _
  $region3: #{attentive_fp_forward.5} parent=0 // pred_check_branch
    %18 = sbr.rel (0) target = $region5
  $region4: #{attentive_fp_forward.5} parent=0 // pred_region
    _
  $region5: #{attentive_fp_forward.5} parent=0 // pred_fallthru
    _
  // Predicated region
  $region6: #{attentive_fp_forward.5} parent=0 // pred_check
    _
  $region7: #{attentive_fp_forward.5} parent=0 // pred_check_branch
    %20 = sbr.rel (0) target = $region9
  $region8: #{attentive_fp_forward.5} parent=0 // pred_region
    _
  $region9: #{attentive_fp_forward.5} parent=0 // pred_fallthru
    _
  // Predicated region
  $region10: #{attentive_fp_forward.5} parent=0 // pred_check
    _
  $region11: #{attentive_fp_forward.5} parent=0 // pred_check_branch
    %22 = sbr.rel (0) target = $region13
  $region12: #{attentive_fp_forward.5} parent=0 // pred_region
    _
  $region13: #{attentive_fp_forward.5} parent=0 // pred_fallthru
    _
  // Predicated region
  $region14: #{attentive_fp_forward.5} parent=0 // pred_check
    _
  $region15: #{attentive_fp_forward.5} parent=0 // pred_check_branch
    %24 = sbr.rel (0) target = $region17
  $region16: #{attentive_fp_forward.5} parent=0 // pred_region
    _
  $region17: #{attentive_fp_forward.5} parent=0 // pred_fallthru
    _
  // Predicated region
  $region18: #{attentive_fp_forward.5} parent=0 // pred_check
    _
  $region19: #{attentive_fp_forward.5} parent=0 // pred_check_branch
    %26 = sbr.rel (0) target = $region21
  $region20: #{attentive_fp_forward.5} parent=0 // pred_region
    _
  $region21: #{attentive_fp_forward.5} parent=0 // pred_fallthru
    _
  // Predicated region
  $region22: #{attentive_fp_forward.5} parent=0 // pred_check
    _
  $region23: #{attentive_fp_forward.5} parent=0 // pred_check_branch
    %28 = sbr.rel (0) target = $region25
  $region24: #{attentive_fp_forward.5} parent=0 // pred_region
    _
  $region25: #{attentive_fp_forward.5} parent=0 // pred_fallthru
    _
  // Predicated region
  $region26: #{attentive_fp_forward.5} parent=0 // pred_check
    _
  $region27: #{attentive_fp_forward.5} parent=0 // pred_check_branch
    %30 = sbr.rel (0) target = $region29
  $region28: #{attentive_fp_forward.5} parent=0 // pred_region
    _
  $region29: #{attentive_fp_forward.5} parent=0 // pred_fallthru
    _
  // Predicated region
  $region30: #{attentive_fp_forward.5} parent=0 // pred_check
    _
  $region31: #{attentive_fp_forward.5} parent=0 // pred_check_branch
    %32 = sbr.rel (0) target = $region33
  $region32: #{attentive_fp_forward.5} parent=0 // pred_region
    _
  $region33: #{attentive_fp_forward.5} parent=0 // pred_fallthru
    _
  // Predicated region
  $region34: #{attentive_fp_forward.5} parent=0 // pred_check
    _
  $region35: #{attentive_fp_forward.5} parent=0 // pred_check_branch
    %34 = sbr.rel (0) target = $region37
  $region36: #{attentive_fp_forward.5} parent=0 // pred_region
    _
  $region37: #{attentive_fp_forward.5} parent=0 // pred_fallthru
    _
  // Predicated region
  $region38: #{attentive_fp_forward.5} parent=0 // pred_check
    _
  $region39: #{attentive_fp_forward.5} parent=0 // pred_check_branch
    %36 = sbr.rel (0) target = $region41
  $region40: #{attentive_fp_forward.5} parent=0 // pred_region
    _
  $region41: #{attentive_fp_forward.5} parent=0 // pred_fallthru
    _
  // Predicated region
  $region42: #{attentive_fp_forward.5} parent=0 // pred_check
    _
  $region43: #{attentive_fp_forward.5} parent=0 // pred_check_branch
    %38 = sbr.rel (0) target = $region45
  $region44: #{attentive_fp_forward.5} parent=0 // pred_region
    _
  $region45: #{attentive_fp_forward.5} parent=0 // pred_fallthru
    _
  // Predicated region
  $region46: #{attentive_fp_forward.5} parent=0 // pred_check
    _
  $region47: #{attentive_fp_forward.5} parent=0 // pred_check_branch
    %40 = sbr.rel (0) target = $region49
  $region48: #{attentive_fp_forward.5} parent=0 // pred_region
    _
  $region49: #{attentive_fp_forward.5} parent=0 // pred_fallthru
    _
  %p43 = scmp.eq.s32.totalorder 0, 0
  // Predicated region
  $region50: #{attentive_fp_forward.5} parent=0 // pred_check
    %p44 = pneg %p43
  $region51: #{attentive_fp_forward.5} parent=0 // pred_check_branch
    %46 = sbr.rel (%p44) target = $region53
  $region52: #{attentive_fp_forward.5} parent=0 // pred_region
    %vm47 = vcmask 7168
    %48 = vst.msk [vmem:[#allocation2] sm:$0xff] %vm47, -1e+30
    %49 = vst.msk [vmem:[#allocation2 + $0x8] sm:$0xff] %vm47, -1e+30
    %50 = vst.msk [vmem:[#allocation3] sm:$0xff] %vm47, 0.0
    %51 = vst.msk [vmem:[#allocation3 + $0x8] sm:$0xff] %vm47, 0.0
    %vm52 = vcmask 523264
    %53 = vst.msk [vmem:[#allocation4] sm:$0xff] %vm52, 0.0
    %54 = vst.msk [vmem:[#allocation4 + $0x8] sm:$0xff] %vm52, 0.0
  $region53: #{attentive_fp_forward.5} parent=0 // pred_fallthru
    _
  %v55 = vld [vmem:[%s0] sm:$0xf]
  %v56 = vld [vmem:[%s0 + $0x4] sm:$0xf]
  %v57 = vld [vmem:[%s0 + $0x8] sm:$0xf]
  %v58 = vld [vmem:[%s0 + $0xc] sm:$0xf]
  %v59 = vld [vmem:[%s0 + $0x10] sm:$0xf]
  %v60 = vld [vmem:[%s0 + $0x14] sm:$0xf]
  %v61 = vld [vmem:[%s0 + $0x18] sm:$0xf]
  %v62 = vld [vmem:[%s0 + $0x1c] sm:$0xf]
  %v63 = vld [vmem:[%s0 + $0x20] sm:$0xf]
  %v64 = vld [vmem:[%s0 + $0x24] sm:$0xf]
  %v65 = vld [vmem:[%s0 + $0x28] sm:$0xf]
  %v66 = vld [vmem:[%s0 + $0x2c] sm:$0xf]
  %v67 = vld [vmem:[%s0 + $0x30] sm:$0xf]
  %v68 = vld [vmem:[%s0 + $0x34] sm:$0xf]
  %v69 = vld [vmem:[%s0 + $0x38] sm:$0xf]
  %v70 = vld [vmem:[%s0 + $0x3c] sm:$0xf]
  %v71 = vld [vmem:[%s0 + $0x40] sm:$0xf]
  %v72 = vld [vmem:[%s0 + $0x44] sm:$0xf]
  %v73 = vld [vmem:[%s0 + $0x48] sm:$0xf]
  %v74 = vld [vmem:[%s0 + $0x4c] sm:$0xf]
  %v75 = vld [vmem:[%s0 + $0x50] sm:$0xf]
  %v76 = vld [vmem:[%s0 + $0x54] sm:$0xf]
  %v77 = vld [vmem:[%s0 + $0x58] sm:$0xf]
  %v78 = vld [vmem:[%s0 + $0x5c] sm:$0xf]
  %v79 = vld [vmem:[%s0 + $0x60] sm:$0xf]
  %v80 = vld [vmem:[%s0 + $0x64] sm:$0xf]
  %v81 = vld [vmem:[%s0 + $0x68] sm:$0xf]
  %v82 = vld [vmem:[%s0 + $0x6c] sm:$0xf]
  %v83 = vld [vmem:[%s0 + $0x70] sm:$0xf]
  %v84 = vld [vmem:[%s0 + $0x74] sm:$0xf]
  %v85 = vld [vmem:[%s0 + $0x78] sm:$0xf]
  %v86 = vld [vmem:[%s0 + $0x7c] sm:$0xf]
  %v87 = vld [vmem:[%s5] sm:$0xf]
  %v88 = vld [vmem:[%s5 + $0x4] sm:$0x3]
  %v121 = vunpack.c.l.b16 %v55
  %v122 = vunpack.c.l.b16 %v56
  %v123 = vunpack.c.l.b16 %v57
  %v124 = vunpack.c.l.b16 %v58
  %v125 = vunpack.c.l.b16 %v59
  %v126 = vunpack.c.l.b16 %v60
  %v127 = vunpack.c.l.b16 %v61
  %v128 = vunpack.c.l.b16 %v62
  %v129 = vunpack.c.l.b16 %v63
  %v130 = vunpack.c.l.b16 %v64
  %v131 = vunpack.c.l.b16 %v65
  %v132 = vunpack.c.l.b16 %v66
  %v133 = vunpack.c.l.b16 %v67
  %v134 = vunpack.c.l.b16 %v68
  %v135 = vunpack.c.l.b16 %v69
  %v136 = vunpack.c.l.b16 %v70
  %v137 = vunpack.c.l.b16 %v71
  %v138 = vunpack.c.l.b16 %v72
  %v139 = vunpack.c.l.b16 %v73
  %v140 = vunpack.c.l.b16 %v74
  %v141 = vunpack.c.l.b16 %v75
  %v142 = vunpack.c.l.b16 %v76
  %v143 = vunpack.c.l.b16 %v77
  %v144 = vunpack.c.l.b16 %v78
  %v145 = vunpack.c.l.b16 %v79
  %v146 = vunpack.c.l.b16 %v80
  %v147 = vunpack.c.l.b16 %v81
  %v148 = vunpack.c.l.b16 %v82
  %v149 = vunpack.c.l.b16 %v83
  %v150 = vunpack.c.l.b16 %v84
  %v151 = vunpack.c.l.b16 %v85
  %v152 = vunpack.c.l.b16 %v86
  %v153 = vpack.c.b16 %v122, %v121
  %v154 = vpack.c.b16 %v124, %v123
  %v155 = vpack.c.b16 %v126, %v125
  %v156 = vpack.c.b16 %v128, %v127
  %v157 = vpack.c.b16 %v130, %v129
  %v158 = vpack.c.b16 %v132, %v131
  %v159 = vpack.c.b16 %v134, %v133
  %v160 = vpack.c.b16 %v136, %v135
  %v161 = vpack.c.b16 %v138, %v137
  %v162 = vpack.c.b16 %v140, %v139
  %v163 = vpack.c.b16 %v142, %v141
  %v164 = vpack.c.b16 %v144, %v143
  %v165 = vpack.c.b16 %v146, %v145
  %v166 = vpack.c.b16 %v148, %v147
  %v167 = vpack.c.b16 %v150, %v149
  %v168 = vpack.c.b16 %v152, %v151
  %v171 = vunpack.c.l.b16 %v87
  %v172 = vunpack.c.l.b16 %v88
  %v173 = vpack.c.b16 %v172, %v171
  %vm174 = vcmask 89088
  %v176 = vsel %vm174, %v153, 0
  %v179 = vsel %vm174, %v154, 0
  %v182 = vsel %vm174, %v155, 0
  %v185 = vsel %vm174, %v156, 0
  %v188 = vsel %vm174, %v157, 0
  %v191 = vsel %vm174, %v158, 0
  %v194 = vsel %vm174, %v159, 0
  %v197 = vsel %vm174, %v160, 0
  %v200 = vsel %vm174, %v161, 0
  %v203 = vsel %vm174, %v162, 0
  %v206 = vsel %vm174, %v163, 0
  %v209 = vsel %vm174, %v164, 0
  %v212 = vsel %vm174, %v165, 0
  %v215 = vsel %vm174, %v166, 0
  %v218 = vsel %vm174, %v167, 0
  %v221 = vsel %vm174, %v168, 0
  %vm223 = vcmask 1044480
  %vm224 = vcmask 1045504
  %v225 = vsel %vm223, 4294967295, 65535
  %v226 = vsel %vm224, %v225, 0
  %v228 = vand.u32 %v173, %v226
  %230 = vmatprep.subr.bf16.mxu0 0
  %231 = vmatpush1.bf16.msra.mxu0 %v228
  %232 = vmatprep.subr.bf16.mxu0 0
  %233 = vmatpush1.bf16.msra.mxu0 0
  %234 = vmatprep.subr.bf16.mxu0 0
  %235 = vmatpush1.bf16.msra.mxu0 0
  %236 = vmatprep.subr.bf16.mxu0 0
  %237 = vmatpush1.bf16.msra.mxu0 0
  %238 = vmatprep.subr.bf16.mxu0 0
  %239 = vmatpush1.bf16.msra.mxu0 0
  %240 = vmatprep.subr.bf16.mxu0 0
  %241 = vmatpush1.bf16.msra.mxu0 0
  %242 = vmatprep.subr.bf16.mxu0 0
  %243 = vmatpush1.bf16.msra.mxu0 0
  %244 = vmatprep.subr.bf16.mxu0 0
  %245 = vmatpush1.bf16.msra.mxu0 0
  %246 = vmatprep.subr.bf16.mxu0 0
  %247 = vmatpush1.bf16.msra.mxu0 0
  %248 = vmatprep.subr.bf16.mxu0 0
  %249 = vmatpush1.bf16.msra.mxu0 0
  %250 = vmatprep.subr.bf16.mxu0 0
  %251 = vmatpush1.bf16.msra.mxu0 0
  %252 = vmatprep.subr.bf16.mxu0 0
  %253 = vmatpush1.bf16.msra.mxu0 0
  %254 = vmatprep.subr.bf16.mxu0 0
  %255 = vmatpush1.bf16.msra.mxu0 0
  %256 = vmatprep.subr.bf16.mxu0 0
  %257 = vmatpush1.bf16.msra.mxu0 0
  %258 = vmatprep.subr.bf16.mxu0 0
  %259 = vmatpush1.bf16.msra.mxu0 0
  %260 = vmatprep.subr.bf16.mxu0 0
  %261 = vmatpush1.bf16.msra.mxu0 0
  %262 = vmatprep.mubr.bf16.mxu0 0
  %263 = vmatmul.mubr.bf16.gmra.mrb[0].mxu0 %v176
  %v264 = vpop.f32.mrb[0].mxu0
  %v265 = vadd.f32 0.0, %v264
  %v266 = vpop.f32.mrb[0].mxu0
  %v267 = vpop.f32.mrb[0].mxu0
  %v268 = vadd.f32 0.0, %v267
  %v269 = vpop.f32.mrb[0].mxu0
  %270 = vmatprep.mubr.bf16.mxu0 0
  %271 = vmatmul.mubr.bf16.gmra.mrb[0].mxu0 %v179
  %v272 = vpop.f32.mrb[0].mxu0
  %v273 = vadd.f32 0.0, %v272
  %v274 = vpop.f32.mrb[0].mxu0
  %v275 = vpop.f32.mrb[0].mxu0
  %v276 = vadd.f32 0.0, %v275
  %v277 = vpop.f32.mrb[0].mxu0
  %278 = vmatprep.mubr.bf16.mxu0 0
  %279 = vmatmul.mubr.bf16.gmra.mrb[0].mxu0 %v182
  %v280 = vpop.f32.mrb[0].mxu0
  %v281 = vadd.f32 0.0, %v280
  %v282 = vpop.f32.mrb[0].mxu0
  %v283 = vpop.f32.mrb[0].mxu0
  %v284 = vadd.f32 0.0, %v283
  %v285 = vpop.f32.mrb[0].mxu0
  %286 = vmatprep.mubr.bf16.mxu0 0
  %287 = vmatmul.mubr.bf16.gmra.mrb[0].mxu0 %v185
  %v288 = vpop.f32.mrb[0].mxu0
  %v289 = vadd.f32 0.0, %v288
  %v290 = vpop.f32.mrb[0].mxu0
  %v291 = vpop.f32.mrb[0].mxu0
  %v292 = vadd.f32 0.0, %v291
  %v293 = vpop.f32.mrb[0].mxu0
  %294 = vmatprep.mubr.bf16.mxu0 0
  %295 = vmatmul.mubr.bf16.gmra.mrb[0].mxu0 %v188
  %v296 = vpop.f32.mrb[0].mxu0
  %v297 = vadd.f32 0.0, %v296
  %v298 = vpop.f32.mrb[0].mxu0
  %v299 = vpop.f32.mrb[0].mxu0
  %v300 = vadd.f32 0.0, %v299
  %v301 = vpop.f32.mrb[0].mxu0
  %302 = vmatprep.mubr.bf16.mxu0 0
  %303 = vmatmul.mubr.bf16.gmra.mrb[0].mxu0 %v191
  %v304 = vpop.f32.mrb[0].mxu0
  %v305 = vadd.f32 0.0, %v304
  %v306 = vpop.f32.mrb[0].mxu0
  %v307 = vpop.f32.mrb[0].mxu0
  %v308 = vadd.f32 0.0, %v307
  %v309 = vpop.f32.mrb[0].mxu0
  %310 = vmatprep.mubr.bf16.mxu0 0
  %311 = vmatmul.mubr.bf16.gmra.mrb[0].mxu0 %v194
  %v312 = vpop.f32.mrb[0].mxu0
  %v313 = vadd.f32 0.0, %v312
  %v314 = vpop.f32.mrb[0].mxu0
  %v315 = vpop.f32.mrb[0].mxu0
  %v316 = vadd.f32 0.0, %v315
  %v317 = vpop.f32.mrb[0].mxu0
  %318 = vmatprep.mubr.bf16.mxu0 0
  %319 = vmatmul.mubr.bf16.gmra.mrb[0].mxu0 %v197
  %v320 = vpop.f32.mrb[0].mxu0
  %v321 = vadd.f32 0.0, %v320
  %v322 = vpop.f32.mrb[0].mxu0
  %v323 = vpop.f32.mrb[0].mxu0
  %v324 = vadd.f32 0.0, %v323
  %v325 = vpop.f32.mrb[0].mxu0
  %326 = vmatprep.mubr.bf16.mxu0 0
  %327 = vmatmul.mubr.bf16.gmra.mrb[0].mxu0 %v200
  %v328 = vpop.f32.mrb[0].mxu0
  %v329 = vadd.f32 0.0, %v328
  %v330 = vpop.f32.mrb[0].mxu0
  %v331 = vpop.f32.mrb[0].mxu0
  %v332 = vadd.f32 0.0, %v331
  %v333 = vpop.f32.mrb[0].mxu0
  %334 = vmatprep.mubr.bf16.mxu0 0
  %335 = vmatmul.mubr.bf16.gmra.mrb[0].mxu0 %v203
  %v336 = vpop.f32.mrb[0].mxu0
  %v337 = vadd.f32 0.0, %v336
  %v338 = vpop.f32.mrb[0].mxu0
  %v339 = vpop.f32.mrb[0].mxu0
  %v340 = vadd.f32 0.0, %v339
  %v341 = vpop.f32.mrb[0].mxu0
  %342 = vmatprep.mubr.bf16.mxu0 0
  %343 = vmatmul.mubr.bf16.gmra.mrb[0].mxu0 %v206
  %v344 = vpop.f32.mrb[0].mxu0
  %v345 = vadd.f32 0.0, %v344
  %v346 = vpop.f32.mrb[0].mxu0
  %v347 = vpop.f32.mrb[0].mxu0
  %v348 = vadd.f32 0.0, %v347
  %v349 = vpop.f32.mrb[0].mxu0
  %350 = vmatprep.mubr.bf16.mxu0 0
  %351 = vmatmul.mubr.bf16.gmra.mrb[0].mxu0 %v209
  %v352 = vpop.f32.mrb[0].mxu0
  %v353 = vadd.f32 0.0, %v352
  %v354 = vpop.f32.mrb[0].mxu0
  %v355 = vpop.f32.mrb[0].mxu0
  %v356 = vadd.f32 0.0, %v355
  %v357 = vpop.f32.mrb[0].mxu0
  %358 = vmatprep.mubr.bf16.mxu0 0
  %359 = vmatmul.mubr.bf16.gmra.mrb[0].mxu0 %v212
  %v360 = vpop.f32.mrb[0].mxu0
  %v361 = vadd.f32 0.0, %v360
  %v362 = vpop.f32.mrb[0].mxu0
  %v363 = vpop.f32.mrb[0].mxu0
  %v364 = vadd.f32 0.0, %v363
  %v365 = vpop.f32.mrb[0].mxu0
  %366 = vmatprep.mubr.bf16.mxu0 0
  %367 = vmatmul.mubr.bf16.gmra.mrb[0].mxu0 %v215
  %v368 = vpop.f32.mrb[0].mxu0
  %v369 = vadd.f32 0.0, %v368
  %v370 = vpop.f32.mrb[0].mxu0
  %v371 = vpop.f32.mrb[0].mxu0
  %v372 = vadd.f32 0.0, %v371
  %v373 = vpop.f32.mrb[0].mxu0
  %374 = vmatprep.mubr.bf16.mxu0 0
  %375 = vmatmul.mubr.bf16.gmra.mrb[0].mxu0 %v218
  %v376 = vpop.f32.mrb[0].mxu0
  %v377 = vadd.f32 0.0, %v376
  %v378 = vpop.f32.mrb[0].mxu0
  %v379 = vpop.f32.mrb[0].mxu0
  %v380 = vadd.f32 0.0, %v379
  %v381 = vpop.f32.mrb[0].mxu0
  %382 = vmatprep.mubr.bf16.mxu0 0
  %383 = vmatmul.mubr.bf16.gmra.mrb[0].mxu0 %v221
  %v384 = vpop.f32.mrb[0].mxu0
  %v385 = vadd.f32 0.0, %v384
  %v386 = vpop.f32.mrb[0].mxu0
  %v387 = vpop.f32.mrb[0].mxu0
  %v388 = vadd.f32 0.0, %v387
  %v389 = vpop.f32.mrb[0].mxu0
  %390 = vdwg.mxu0
  %v391 = vpack.c.bf16 %v268, %v265
  %v392 = vpack.c.bf16 %v276, %v273
  %v393 = vpack.c.bf16 %v284, %v281
  %v394 = vpack.c.bf16 %v292, %v289
  %v395 = vpack.c.bf16 %v300, %v297
  %v396 = vpack.c.bf16 %v308, %v305
  %v397 = vpack.c.bf16 %v316, %v313
  %v398 = vpack.c.bf16 %v324, %v321
  %v399 = vpack.c.bf16 %v332, %v329
  %v400 = vpack.c.bf16 %v340, %v337
  %v401 = vpack.c.bf16 %v348, %v345
  %v402 = vpack.c.bf16 %v356, %v353
  %v403 = vpack.c.bf16 %v364, %v361
  %v404 = vpack.c.bf16 %v372, %v369
  %v405 = vpack.c.bf16 %v380, %v377
  %v406 = vpack.c.bf16 %v388, %v385
  %v407 = vld [vmem:[%s4] sm:$0xf]
  %v408 = vld [vmem:[%s4 + $0x4] sm:$0xf]
  %v411 = vunpack.c.l.b16 %v407
  %v412 = vunpack.c.l.b16 %v408
  %v413 = vpack.c.b16 %v412, %v411
  %v415 = vadd.bf16 %v391, %v413
  %v416 = vadd.bf16 %v392, %v413
  %v417 = vadd.bf16 %v393, %v413
  %v418 = vadd.bf16 %v394, %v413
  %v419 = vadd.bf16 %v395, %v413
  %v420 = vadd.bf16 %v396, %v413
  %v421 = vadd.bf16 %v397, %v413
  %v422 = vadd.bf16 %v398, %v413
  %v423 = vadd.bf16 %v399, %v413
  %v424 = vadd.bf16 %v400, %v413
  %v425 = vadd.bf16 %v401, %v413
  %v426 = vadd.bf16 %v402, %v413
  %v427 = vadd.bf16 %v403, %v413
  %v428 = vadd.bf16 %v404, %v413
  %v429 = vadd.bf16 %v405, %v413
  %v430 = vadd.bf16 %v406, %v413
  %v431 = vmul.bf16 %v415, 1009007652
  %v432 = vmul.bf16 %v416, 1009007652
  %v433 = vmul.bf16 %v417, 1009007652
  %v434 = vmul.bf16 %v418, 1009007652
  %v435 = vmul.bf16 %v419, 1009007652
  %v436 = vmul.bf16 %v420, 1009007652
  %v437 = vmul.bf16 %v421, 1009007652
  %v438 = vmul.bf16 %v422, 1009007652
  %v439 = vmul.bf16 %v423, 1009007652
  %v440 = vmul.bf16 %v424, 1009007652
  %v441 = vmul.bf16 %v425, 1009007652
  %v442 = vmul.bf16 %v426, 1009007652
  %v443 = vmul.bf16 %v427, 1009007652
  %v444 = vmul.bf16 %v428, 1009007652
  %v445 = vmul.bf16 %v429, 1009007652
  %v446 = vmul.bf16 %v430, 1009007652
  %v447 = vmax.bf16 %v415, %v431
  %v448 = vmax.bf16 %v416, %v432
  %v449 = vmax.bf16 %v417, %v433
  %v450 = vmax.bf16 %v418, %v434
  %v451 = vmax.bf16 %v419, %v435
  %v452 = vmax.bf16 %v420, %v436
  %v453 = vmax.bf16 %v421, %v437
  %v454 = vmax.bf16 %v422, %v438
  %v455 = vmax.bf16 %v423, %v439
  %v456 = vmax.bf16 %v424, %v440
  %v457 = vmax.bf16 %v425, %v441
  %v458 = vmax.bf16 %v426, %v442
  %v459 = vmax.bf16 %v427, %v443
  %v460 = vmax.bf16 %v428, %v444
  %v461 = vmax.bf16 %v429, %v445
  %v462 = vmax.bf16 %v430, %v446
  %v463 = vld [vmem:[%s6] sm:$0x1]
  %v464 = vpack.c.bf16 %v463, %v463
  %v466 = vpack.i.b16 %v464, %v464
  %v468 = vlaneseq
  %v469 = vshrl.u32 %v468, 7
  %v470 = vsub.s32 0, %v469
  %v471 = vrot.slane %v466, %v470
  %v472 = vmul.bf16 %v447, %v471
  %v473 = vmul.bf16 %v448, %v471
  %v474 = vmul.bf16 %v449, %v471
  %v475 = vmul.bf16 %v450, %v471
  %v476 = vmul.bf16 %v451, %v471
  %v477 = vmul.bf16 %v452, %v471
  %v478 = vmul.bf16 %v453, %v471
  %v479 = vmul.bf16 %v454, %v471
  %v480 = vmul.bf16 %v455, %v471
  %v481 = vmul.bf16 %v456, %v471
  %v482 = vmul.bf16 %v457, %v471
  %v483 = vmul.bf16 %v458, %v471
  %v484 = vmul.bf16 %v459, %v471
  %v485 = vmul.bf16 %v460, %v471
  %v486 = vmul.bf16 %v461, %v471
  %v487 = vmul.bf16 %v462, %v471
  %v488 = vunpack.c.l.bf16 %v472
  %v489 = vunpack.c.h.bf16 %v472
  %v490 = vunpack.c.l.bf16 %v473
  %v491 = vunpack.c.h.bf16 %v473
  %v492 = vunpack.c.l.bf16 %v474
  %v493 = vunpack.c.h.bf16 %v474
  %v494 = vunpack.c.l.bf16 %v475
  %v495 = vunpack.c.h.bf16 %v475
  %v496 = vunpack.c.l.bf16 %v476
  %v497 = vunpack.c.h.bf16 %v476
  %v498 = vunpack.c.l.bf16 %v477
  %v499 = vunpack.c.h.bf16 %v477
  %v500 = vunpack.c.l.bf16 %v478
  %v501 = vunpack.c.h.bf16 %v478
  %v502 = vunpack.c.l.bf16 %v479
  %v503 = vunpack.c.h.bf16 %v479
  %v504 = vunpack.c.l.bf16 %v480
  %v505 = vunpack.c.h.bf16 %v480
  %v506 = vunpack.c.l.bf16 %v481
  %v507 = vunpack.c.h.bf16 %v481
  %v508 = vunpack.c.l.bf16 %v482
  %v509 = vunpack.c.h.bf16 %v482
  %v510 = vunpack.c.l.bf16 %v483
  %v511 = vunpack.c.h.bf16 %v483
  %v512 = vunpack.c.l.bf16 %v484
  %v513 = vunpack.c.h.bf16 %v484
  %v514 = vunpack.c.l.bf16 %v485
  %v515 = vunpack.c.h.bf16 %v485
  %v516 = vunpack.c.l.bf16 %v486
  %v517 = vunpack.c.h.bf16 %v486
  %v518 = vunpack.c.l.bf16 %v487
  %v519 = vunpack.c.h.bf16 %v487
  %vm520 = vcmask 523264
  %v521 = vsel %vm520, %v488, 0.0
  %522 = vadd.xlane.f32.xlu0 %v521
  %v523 = vpop.xlane.xlu0 %522
  %v524 = vsel %vm520, %v489, 0.0
  %525 = vadd.xlane.f32.xlu0 %v524
  %v526 = vpop.xlane.xlu0 %525
  %v527 = vsel %vm520, %v490, 0.0
  %528 = vadd.xlane.f32.xlu0 %v527
  %v529 = vpop.xlane.xlu0 %528
  %v530 = vsel %vm520, %v491, 0.0
  %531 = vadd.xlane.f32.xlu0 %v530
  %v532 = vpop.xlane.xlu0 %531
  %v533 = vsel %vm520, %v492, 0.0
  %534 = vadd.xlane.f32.xlu0 %v533
  %v535 = vpop.xlane.xlu0 %534
  %v536 = vsel %vm520, %v493, 0.0
  %537 = vadd.xlane.f32.xlu0 %v536
  %v538 = vpop.xlane.xlu0 %537
  %v539 = vsel %vm520, %v494, 0.0
  %540 = vadd.xlane.f32.xlu0 %v539
  %v541 = vpop.xlane.xlu0 %540
  %v542 = vsel %vm520, %v495, 0.0
  %543 = vadd.xlane.f32.xlu0 %v542
  %v544 = vpop.xlane.xlu0 %543
  %v545 = vsel %vm520, %v496, 0.0
  %546 = vadd.xlane.f32.xlu0 %v545
  %v547 = vpop.xlane.xlu0 %546
  %v548 = vsel %vm520, %v497, 0.0
  %549 = vadd.xlane.f32.xlu0 %v548
  %v550 = vpop.xlane.xlu0 %549
  %v551 = vsel %vm520, %v498, 0.0
  %552 = vadd.xlane.f32.xlu0 %v551
  %v553 = vpop.xlane.xlu0 %552
  %v554 = vsel %vm520, %v499, 0.0
  %555 = vadd.xlane.f32.xlu0 %v554
  %v556 = vpop.xlane.xlu0 %555
  %v557 = vsel %vm520, %v500, 0.0
  %558 = vadd.xlane.f32.xlu0 %v557
  %v559 = vpop.xlane.xlu0 %558
  %v560 = vsel %vm520, %v501, 0.0
  %561 = vadd.xlane.f32.xlu0 %v560
  %v562 = vpop.xlane.xlu0 %561
  %v563 = vsel %vm520, %v502, 0.0
  %564 = vadd.xlane.f32.xlu0 %v563
  %v565 = vpop.xlane.xlu0 %564
  %v566 = vsel %vm520, %v503, 0.0
  %567 = vadd.xlane.f32.xlu0 %v566
  %v568 = vpop.xlane.xlu0 %567
  %v569 = vsel %vm520, %v504, 0.0
  %570 = vadd.xlane.f32.xlu0 %v569
  %v571 = vpop.xlane.xlu0 %570
  %v572 = vsel %vm520, %v505, 0.0
  %573 = vadd.xlane.f32.xlu0 %v572
  %v574 = vpop.xlane.xlu0 %573
  %v575 = vsel %vm520, %v506, 0.0
  %576 = vadd.xlane.f32.xlu0 %v575
  %v577 = vpop.xlane.xlu0 %576
  %v578 = vsel %vm520, %v507, 0.0
  %579 = vadd.xlane.f32.xlu0 %v578
  %v580 = vpop.xlane.xlu0 %579
  %v581 = vsel %vm520, %v508, 0.0
  %582 = vadd.xlane.f32.xlu0 %v581
  %v583 = vpop.xlane.xlu0 %582
  %v584 = vsel %vm520, %v509, 0.0
  %585 = vadd.xlane.f32.xlu0 %v584
  %v586 = vpop.xlane.xlu0 %585
  %v587 = vsel %vm520, %v510, 0.0
  %588 = vadd.xlane.f32.xlu0 %v587
  %v589 = vpop.xlane.xlu0 %588
  %v590 = vsel %vm520, %v511, 0.0
  %591 = vadd.xlane.f32.xlu0 %v590
  %v592 = vpop.xlane.xlu0 %591
  %v593 = vsel %vm520, %v512, 0.0
  %594 = vadd.xlane.f32.xlu0 %v593
  %v595 = vpop.xlane.xlu0 %594
  %v596 = vsel %vm520, %v513, 0.0
  %597 = vadd.xlane.f32.xlu0 %v596
  %v598 = vpop.xlane.xlu0 %597
  %v599 = vsel %vm520, %v514, 0.0
  %600 = vadd.xlane.f32.xlu0 %v599
  %v601 = vpop.xlane.xlu0 %600
  %v602 = vsel %vm520, %v515, 0.0
  %603 = vadd.xlane.f32.xlu0 %v602
  %v604 = vpop.xlane.xlu0 %603
  %v605 = vsel %vm520, %v516, 0.0
  %606 = vadd.xlane.f32.xlu0 %v605
  %v607 = vpop.xlane.xlu0 %606
  %v608 = vsel %vm520, %v517, 0.0
  %609 = vadd.xlane.f32.xlu0 %v608
  %v610 = vpop.xlane.xlu0 %609
  %v611 = vsel %vm520, %v518, 0.0
  %612 = vadd.xlane.f32.xlu0 %v611
  %v613 = vpop.xlane.xlu0 %612
  %v614 = vsel %vm520, %v519, 0.0
  %615 = vadd.xlane.f32.xlu0 %v614
  %v616 = vpop.xlane.xlu0 %615
  %v617 = vpack.c.bf16 %v526, %v523
  %v618 = vpack.c.bf16 %v532, %v529
  %v619 = vpack.c.bf16 %v538, %v535
  %v620 = vpack.c.bf16 %v544, %v541
  %v621 = vpack.c.bf16 %v550, %v547
  %v622 = vpack.c.bf16 %v556, %v553
  %v623 = vpack.c.bf16 %v562, %v559
  %v624 = vpack.c.bf16 %v568, %v565
  %v625 = vpack.c.bf16 %v574, %v571
  %v626 = vpack.c.bf16 %v580, %v577
  %v627 = vpack.c.bf16 %v586, %v583
  %v628 = vpack.c.bf16 %v592, %v589
  %v629 = vpack.c.bf16 %v598, %v595
  %v630 = vpack.c.bf16 %v604, %v601
  %v631 = vpack.c.bf16 %v610, %v607
  %v632 = vpack.c.bf16 %v616, %v613
  %v633 = vunpack.c.l.bf16 %v617
  %v634 = vunpack.c.h.bf16 %v617
  %v635 = vunpack.c.l.bf16 %v618
  %v636 = vunpack.c.h.bf16 %v618
  %v637 = vunpack.c.l.bf16 %v619
  %v638 = vunpack.c.h.bf16 %v619
  %v639 = vunpack.c.l.bf16 %v620
  %v640 = vunpack.c.h.bf16 %v620
  %v641 = vunpack.c.l.bf16 %v621
  %v642 = vunpack.c.h.bf16 %v621
  %v643 = vunpack.c.l.bf16 %v622
  %v644 = vunpack.c.h.bf16 %v622
  %v645 = vunpack.c.l.bf16 %v623
  %v646 = vunpack.c.h.bf16 %v623
  %v647 = vunpack.c.l.bf16 %v624
  %v648 = vunpack.c.h.bf16 %v624
  %v649 = vunpack.c.l.bf16 %v625
  %v650 = vunpack.c.h.bf16 %v625
  %v651 = vunpack.c.l.bf16 %v626
  %v652 = vunpack.c.h.bf16 %v626
  %v653 = vunpack.c.l.bf16 %v627
  %v654 = vunpack.c.h.bf16 %v627
  %v655 = vunpack.c.l.bf16 %v628
  %v656 = vunpack.c.h.bf16 %v628
  %v657 = vunpack.c.l.bf16 %v629
  %v658 = vunpack.c.h.bf16 %v629
  %v659 = vunpack.c.l.bf16 %v630
  %v660 = vunpack.c.h.bf16 %v630
  %v661 = vunpack.c.l.bf16 %v631
  %v662 = vunpack.c.h.bf16 %v631
  %v663 = vunpack.c.l.bf16 %v632
  %v664 = vunpack.c.h.bf16 %v632
  %v665 = vld [vmem:[%s3] sm:$0xff]
  %v666 = vld [vmem:[%s3 + $0x8] sm:$0xff]
  %668 = vset.pattern.permute.xlu0 0
  %669 = vperm.xlu0 %668, %v665
  %v670 = vpop.permute.xlu0 %669
  %673 = vset.pattern.permute.xlu0 0
  %674 = vperm.xlu0 %673, %v666
  %v675 = vpop.permute.xlu0 %674
  %v709 = vlaneseq
  %v710 = vand.u32 %v709, 127
  %v711 = vlaneseq
  %v712 = vshrl.u32 %v711, 7
  %v713 = vsub.s32 %v710, %v712
  %v714 = vrot.slane %v633, %v713
  %v715 = vadd.s32 %v710, 4294967288
  %v716 = vlaneseq
  %v717 = vshrl.u32 %v716, 7
  %v718 = vsub.s32 %v715, %v717
  %v719 = vrot.slane %v634, %v718
  %vm720 = vcmask 130112
  %v721 = vsel %vm720, %v719, %v714
  %v722 = vlaneseq
  %v723 = vshrl.u32 %v722, 7
  %v724 = vsub.s32 %v710, %v723
  %v725 = vrot.slane %v635, %v724
  %v726 = vlaneseq
  %v727 = vshrl.u32 %v726, 7
  %v728 = vsub.s32 %v715, %v727
  %v729 = vrot.slane %v636, %v728
  %v730 = vsel %vm720, %v729, %v725
  %v731 = vlaneseq
  %v732 = vshrl.u32 %v731, 7
  %v733 = vsub.s32 %v710, %v732
  %v734 = vrot.slane %v637, %v733
  %v735 = vlaneseq
  %v736 = vshrl.u32 %v735, 7
  %v737 = vsub.s32 %v715, %v736
  %v738 = vrot.slane %v638, %v737
  %v739 = vsel %vm720, %v738, %v734
  %v740 = vlaneseq
  %v741 = vshrl.u32 %v740, 7
  %v742 = vsub.s32 %v710, %v741
  %v743 = vrot.slane %v639, %v742
  %v744 = vlaneseq
  %v745 = vshrl.u32 %v744, 7
  %v746 = vsub.s32 %v715, %v745
  %v747 = vrot.slane %v640, %v746
  %v748 = vsel %vm720, %v747, %v743
  %v749 = vlaneseq
  %v750 = vshrl.u32 %v749, 7
  %v751 = vsub.s32 %v710, %v750
  %v752 = vrot.slane %v641, %v751
  %v753 = vlaneseq
  %v754 = vshrl.u32 %v753, 7
  %v755 = vsub.s32 %v715, %v754
  %v756 = vrot.slane %v642, %v755
  %v757 = vsel %vm720, %v756, %v752
  %v758 = vlaneseq
  %v759 = vshrl.u32 %v758, 7
  %v760 = vsub.s32 %v710, %v759
  %v761 = vrot.slane %v643, %v760
  %v762 = vlaneseq
  %v763 = vshrl.u32 %v762, 7
  %v764 = vsub.s32 %v715, %v763
  %v765 = vrot.slane %v644, %v764
  %v766 = vsel %vm720, %v765, %v761
  %v767 = vlaneseq
  %v768 = vshrl.u32 %v767, 7
  %v769 = vsub.s32 %v710, %v768
  %v770 = vrot.slane %v645, %v769
  %v771 = vlaneseq
  %v772 = vshrl.u32 %v771, 7
  %v773 = vsub.s32 %v715, %v772
  %v774 = vrot.slane %v646, %v773
  %v775 = vsel %vm720, %v774, %v770
  %v776 = vlaneseq
  %v777 = vshrl.u32 %v776, 7
  %v778 = vsub.s32 %v710, %v777
  %v779 = vrot.slane %v647, %v778
  %v780 = vlaneseq
  %v781 = vshrl.u32 %v780, 7
  %v782 = vsub.s32 %v715, %v781
  %v783 = vrot.slane %v648, %v782
  %v784 = vsel %vm720, %v783, %v779
  %v785 = vlaneseq
  %v786 = vshrl.u32 %v785, 7
  %v787 = vsub.s32 %v710, %v786
  %v788 = vrot.slane %v649, %v787
  %v789 = vlaneseq
  %v790 = vshrl.u32 %v789, 7
  %v791 = vsub.s32 %v715, %v790
  %v792 = vrot.slane %v650, %v791
  %v793 = vsel %vm720, %v792, %v788
  %v794 = vlaneseq
  %v795 = vshrl.u32 %v794, 7
  %v796 = vsub.s32 %v710, %v795
  %v797 = vrot.slane %v651, %v796
  %v798 = vlaneseq
  %v799 = vshrl.u32 %v798, 7
  %v800 = vsub.s32 %v715, %v799
  %v801 = vrot.slane %v652, %v800
  %v802 = vsel %vm720, %v801, %v797
  %v803 = vlaneseq
  %v804 = vshrl.u32 %v803, 7
  %v805 = vsub.s32 %v710, %v804
  %v806 = vrot.slane %v653, %v805
  %v807 = vlaneseq
  %v808 = vshrl.u32 %v807, 7
  %v809 = vsub.s32 %v715, %v808
  %v810 = vrot.slane %v654, %v809
  %v811 = vsel %vm720, %v810, %v806
  %v812 = vlaneseq
  %v813 = vshrl.u32 %v812, 7
  %v814 = vsub.s32 %v710, %v813
  %v815 = vrot.slane %v655, %v814
  %v816 = vlaneseq
  %v817 = vshrl.u32 %v816, 7
  %v818 = vsub.s32 %v715, %v817
  %v819 = vrot.slane %v656, %v818
  %v820 = vsel %vm720, %v819, %v815
  %v821 = vlaneseq
  %v822 = vshrl.u32 %v821, 7
  %v823 = vsub.s32 %v710, %v822
  %v824 = vrot.slane %v657, %v823
  %v825 = vlaneseq
  %v826 = vshrl.u32 %v825, 7
  %v827 = vsub.s32 %v715, %v826
  %v828 = vrot.slane %v658, %v827
  %v829 = vsel %vm720, %v828, %v824
  %v830 = vlaneseq
  %v831 = vshrl.u32 %v830, 7
  %v832 = vsub.s32 %v710, %v831
  %v833 = vrot.slane %v659, %v832
  %v834 = vlaneseq
  %v835 = vshrl.u32 %v834, 7
  %v836 = vsub.s32 %v715, %v835
  %v837 = vrot.slane %v660, %v836
  %v838 = vsel %vm720, %v837, %v833
  %v839 = vlaneseq
  %v840 = vshrl.u32 %v839, 7
  %v841 = vsub.s32 %v710, %v840
  %v842 = vrot.slane %v661, %v841
  %v843 = vlaneseq
  %v844 = vshrl.u32 %v843, 7
  %v845 = vsub.s32 %v715, %v844
  %v846 = vrot.slane %v662, %v845
  %v847 = vsel %vm720, %v846, %v842
  %v848 = vlaneseq
  %v849 = vshrl.u32 %v848, 7
  %v850 = vsub.s32 %v710, %v849
  %v851 = vrot.slane %v663, %v850
  %v852 = vlaneseq
  %v853 = vshrl.u32 %v852, 7
  %v854 = vsub.s32 %v715, %v853
  %v855 = vrot.slane %v664, %v854
  %v856 = vsel %vm720, %v855, %v851
  %vm857 = vcmask 1041409
  %v858 = vsel %vm857, %v730, %v721
  %vm859 = vcmask 1042434
  %v860 = vsel %vm859, %v739, %v858
  %vm861 = vcmask 1043459
  %v862 = vsel %vm861, %v748, %v860
  %vm863 = vcmask 1044484
  %v864 = vsel %vm863, %v757, %v862
  %vm865 = vcmask 1045509
  %v866 = vsel %vm865, %v766, %v864
  %vm867 = vcmask 1046534
  %v868 = vsel %vm867, %v775, %v866
  %vm869 = vcmask 1047559
  %v870 = vsel %vm869, %v784, %v868
  %v871 = vsel %vm857, %v802, %v793
  %v872 = vsel %vm859, %v811, %v871
  %v873 = vsel %vm861, %v820, %v872
  %v874 = vsel %vm863, %v829, %v873
  %v875 = vsel %vm865, %v838, %v874
  %v876 = vsel %vm867, %v847, %v875
  %v877 = vsel %vm869, %v856, %v876
  %v880 = vadd.f32 %v670, %v870
  %v881 = vadd.f32 %v675, %v877
  %v882 = vmul.f32 %v880, 0.01
  %v883 = vmul.f32 %v881, 0.01
  %v884 = vmax.f32 %v880, %v882
  %v885 = vmax.f32 %v881, %v883
  %v886 = vld [vmem:[%s1] sm:$0xf]
  %v887 = vld [vmem:[%s1 + $0x4] sm:$0xf]
  %v888 = vunpack.c.l.bf16 %v886
  %v889 = vunpack.c.l.bf16 %v887
  %vm890 = vcmp.gt.f32.partialorder %v888, 0.0
  %vm891 = vcmp.gt.f32.partialorder %v889, 0.0
  %v892 = vsel %vm890, %v884, -1e+30
  %v893 = vsel %vm891, %v885, -1e+30
  %v894 = vld [vmem:[#allocation2] sm:$0xff]
  %v895 = vld [vmem:[#allocation2 + $0x8] sm:$0xff]
  %vm896 = vcmask 130048
  %v897 = vsel %vm896, %v892, -inf
  %898 = vmax.xlane.f32.xlu0 %v897
  %v899 = vpop.xlane.xlu0 %898
  %v900 = vsel %vm896, %v893, -inf
  %901 = vmax.xlane.f32.xlu0 %v900
  %v902 = vpop.xlane.xlu0 %901
  %v903 = vmax.f32 %v894, %v899
  %v904 = vmax.f32 %v895, %v902
  %v905 = vsub.f32 %v894, %v903
  %v906 = vsub.f32 %v895, %v904
  %v907 = vmul.f32 %v905, 1.442695
  %v908 = vpow.pop %v907
  %v909 = vmul.f32 %v906, 1.442695
  %v910 = vpow.pop %v909
  %912 = vset.pattern.permute.xlu0 0
  %913 = vperm.xlu0 %912, %v903
  %v914 = vpop.permute.xlu0 %913
  %917 = vset.pattern.permute.xlu0 0
  %918 = vperm.xlu0 %917, %v904
  %v919 = vpop.permute.xlu0 %918
  %v921 = vsub.f32 %v892, %v914
  %v922 = vsub.f32 %v893, %v919
  %v923 = vmul.f32 %v921, 1.442695
  %v924 = vpow.pop %v923
  %v925 = vmul.f32 %v922, 1.442695
  %v926 = vpow.pop %v925
  %v927 = vmul.f32 %v924, %v888
  %v928 = vmul.f32 %v926, %v889
  %v929 = vld [vmem:[#allocation3] sm:$0xff]
  %v930 = vld [vmem:[#allocation3 + $0x8] sm:$0xff]
  %v931 = vmul.f32 %v908, %v929
  %v932 = vmul.f32 %v910, %v930
  %v933 = vsel %vm896, %v927, 0.0
  %934 = vadd.xlane.f32.xlu0 %v933
  %v935 = vpop.xlane.xlu0 %934
  %v936 = vsel %vm896, %v928, 0.0
  %937 = vadd.xlane.f32.xlu0 %v936
  %v938 = vpop.xlane.xlu0 %937
  %v939 = vadd.f32 %v931, %v935
  %v940 = vadd.f32 %v932, %v938
  %vm941 = vcmask 7168
  %942 = vst.msk [vmem:[#allocation3] sm:$0xff] %vm941, %v939
  %943 = vst.msk [vmem:[#allocation3 + $0x8] sm:$0xff] %vm941, %v940
  %v946 = vcombine.high %v927, %v927
  %v948 = vunpack.c.l.s4 1966171168
  %v949 = vunpack.c.0.s8 %v948
  %v950 = vlaneseq
  %v951 = vshrl.u32 %v950, 7
  %v952 = vsub.s32 %v949, %v951
  %v953 = vrot.slane %v927, %v952
  %v955 = vunpack.c.l.s4 1966171168
  %v956 = vunpack.c.0.s8 %v955
  %v957 = vlaneseq
  %v958 = vshrl.u32 %v957, 7
  %v959 = vsub.s32 %v956, %v958
  %v960 = vrot.slane %v946, %v959
  %v961 = vcombine.high %v953, %v953
  %v962 = vcombine.high %v960, %v960
  %v964 = vunpack.c.l.s4 1966171168
  %v965 = vunpack.c.0.s8 %v964
  %v966 = vlaneseq
  %v967 = vshrl.u32 %v966, 7
  %v968 = vsub.s32 %v965, %v967
  %v969 = vrot.slane %v953, %v968
  %v971 = vunpack.c.l.s4 1966171168
  %v972 = vunpack.c.0.s8 %v971
  %v973 = vlaneseq
  %v974 = vshrl.u32 %v973, 7
  %v975 = vsub.s32 %v972, %v974
  %v976 = vrot.slane %v960, %v975
  %v978 = vunpack.c.l.s4 1966171168
  %v979 = vunpack.c.0.s8 %v978
  %v980 = vlaneseq
  %v981 = vshrl.u32 %v980, 7
  %v982 = vsub.s32 %v979, %v981
  %v983 = vrot.slane %v961, %v982
  %v985 = vunpack.c.l.s4 1966171168
  %v986 = vunpack.c.0.s8 %v985
  %v987 = vlaneseq
  %v988 = vshrl.u32 %v987, 7
  %v989 = vsub.s32 %v986, %v988
  %v990 = vrot.slane %v962, %v989
  %v991 = vcombine.high %v969, %v969
  %v992 = vcombine.high %v976, %v976
  %v993 = vcombine.high %v983, %v983
  %v994 = vcombine.high %v990, %v990
  %v995 = vcombine.high %v928, %v928
  %v997 = vunpack.c.l.s4 1966171168
  %v998 = vunpack.c.0.s8 %v997
  %v999 = vlaneseq
  %v1000 = vshrl.u32 %v999, 7
  %v1001 = vsub.s32 %v998, %v1000
  %v1002 = vrot.slane %v928, %v1001
  %v1004 = vunpack.c.l.s4 1966171168
  %v1005 = vunpack.c.0.s8 %v1004
  %v1006 = vlaneseq
  %v1007 = vshrl.u32 %v1006, 7
  %v1008 = vsub.s32 %v1005, %v1007
  %v1009 = vrot.slane %v995, %v1008
  %v1010 = vcombine.high %v1002, %v1002
  %v1011 = vcombine.high %v1009, %v1009
  %v1013 = vunpack.c.l.s4 1966171168
  %v1014 = vunpack.c.0.s8 %v1013
  %v1015 = vlaneseq
  %v1016 = vshrl.u32 %v1015, 7
  %v1017 = vsub.s32 %v1014, %v1016
  %v1018 = vrot.slane %v1002, %v1017
  %v1020 = vunpack.c.l.s4 1966171168
  %v1021 = vunpack.c.0.s8 %v1020
  %v1022 = vlaneseq
  %v1023 = vshrl.u32 %v1022, 7
  %v1024 = vsub.s32 %v1021, %v1023
  %v1025 = vrot.slane %v1009, %v1024
  %v1027 = vunpack.c.l.s4 1966171168
  %v1028 = vunpack.c.0.s8 %v1027
  %v1029 = vlaneseq
  %v1030 = vshrl.u32 %v1029, 7
  %v1031 = vsub.s32 %v1028, %v1030
  %v1032 = vrot.slane %v1010, %v1031
  %v1034 = vunpack.c.l.s4 1966171168
  %v1035 = vunpack.c.0.s8 %v1034
  %v1036 = vlaneseq
  %v1037 = vshrl.u32 %v1036, 7
  %v1038 = vsub.s32 %v1035, %v1037
  %v1039 = vrot.slane %v1011, %v1038
  %v1040 = vcombine.high %v1018, %v1018
  %v1041 = vcombine.high %v1025, %v1025
  %v1042 = vcombine.high %v1032, %v1032
  %v1043 = vcombine.high %v1039, %v1039
  %v1060 = vpack.c.bf16 %v969, %v969
  %v1061 = vpack.c.bf16 %v983, %v983
  %v1062 = vpack.c.bf16 %v991, %v991
  %v1063 = vpack.c.bf16 %v993, %v993
  %v1064 = vpack.c.bf16 %v976, %v976
  %v1065 = vpack.c.bf16 %v990, %v990
  %v1066 = vpack.c.bf16 %v992, %v992
  %v1067 = vpack.c.bf16 %v994, %v994
  %v1068 = vpack.c.bf16 %v1018, %v1018
  %v1069 = vpack.c.bf16 %v1032, %v1032
  %v1070 = vpack.c.bf16 %v1040, %v1040
  %v1071 = vpack.c.bf16 %v1042, %v1042
  %v1072 = vpack.c.bf16 %v1025, %v1025
  %v1073 = vpack.c.bf16 %v1039, %v1039
  %v1074 = vpack.c.bf16 %v1041, %v1041
  %v1075 = vpack.c.bf16 %v1043, %v1043
  %v1077 = vsel %vm896, %v1060, 0
  %1079 = vmatprep.subr.bf16.mxu0 0
  %1080 = vmatpush1.bf16.msra.mxu0 %v447
  %1081 = vmatprep.subr.bf16.mxu0 0
  %1082 = vmatpush1.bf16.msra.mxu0 0
  %1083 = vmatprep.subr.bf16.mxu0 0
  %1084 = vmatpush1.bf16.msra.mxu0 0
  %1085 = vmatprep.subr.bf16.mxu0 0
  %1086 = vmatpush1.bf16.msra.mxu0 0
  %1087 = vmatprep.subr.bf16.mxu0 0
  %1088 = vmatpush1.bf16.msra.mxu0 0
  %1089 = vmatprep.subr.bf16.mxu0 0
  %1090 = vmatpush1.bf16.msra.mxu0 0
  %1091 = vmatprep.subr.bf16.mxu0 0
  %1092 = vmatpush1.bf16.msra.mxu0 0
  %1093 = vmatprep.subr.bf16.mxu0 0
  %1094 = vmatpush1.bf16.msra.mxu0 0
  %1095 = vmatprep.subr.bf16.mxu0 0
  %1096 = vmatpush1.bf16.msra.mxu0 0
  %1097 = vmatprep.subr.bf16.mxu0 0
  %1098 = vmatpush1.bf16.msra.mxu0 0
  %1099 = vmatprep.subr.bf16.mxu0 0
  %1100 = vmatpush1.bf16.msra.mxu0 0
  %1101 = vmatprep.subr.bf16.mxu0 0
  %1102 = vmatpush1.bf16.msra.mxu0 0
  %1103 = vmatprep.subr.bf16.mxu0 0
  %1104 = vmatpush1.bf16.msra.mxu0 0
  %1105 = vmatprep.subr.bf16.mxu0 0
  %1106 = vmatpush1.bf16.msra.mxu0 0
  %1107 = vmatprep.subr.bf16.mxu0 0
  %1108 = vmatpush1.bf16.msra.mxu0 0
  %1109 = vmatprep.subr.bf16.mxu0 0
  %1110 = vmatpush1.bf16.msra.mxu0 0
  %1111 = vmatprep.mubr.bf16.mxu0 0
  %1112 = vmatmul.mubr.bf16.gmra.mrb[0].mxu0 %v1077
  %v1113 = vpop.f32.mrb[0].mxu0
  %v1114 = vadd.f32 0.0, %v1113
  %v1115 = vpop.f32.mrb[0].mxu0
  %v1116 = vpop.f32.mrb[0].mxu0
  %v1117 = vpop.f32.mrb[0].mxu0
  %1118 = vdwg.mxu0
  %v1120 = vsel %vm896, %v1061, 0
  %1122 = vmatprep.subr.bf16.mxu0 0
  %1123 = vmatpush1.bf16.msra.mxu0 %v448
  %1124 = vmatprep.subr.bf16.mxu0 0
  %1125 = vmatpush1.bf16.msra.mxu0 0
  %1126 = vmatprep.subr.bf16.mxu0 0
  %1127 = vmatpush1.bf16.msra.mxu0 0
  %1128 = vmatprep.subr.bf16.mxu0 0
  %1129 = vmatpush1.bf16.msra.mxu0 0
  %1130 = vmatprep.subr.bf16.mxu0 0
  %1131 = vmatpush1.bf16.msra.mxu0 0
  %1132 = vmatprep.subr.bf16.mxu0 0
  %1133 = vmatpush1.bf16.msra.mxu0 0
  %1134 = vmatprep.subr.bf16.mxu0 0
  %1135 = vmatpush1.bf16.msra.mxu0 0
  %1136 = vmatprep.subr.bf16.mxu0 0
  %1137 = vmatpush1.bf16.msra.mxu0 0
  %1138 = vmatprep.subr.bf16.mxu0 0
  %1139 = vmatpush1.bf16.msra.mxu0 0
  %1140 = vmatprep.subr.bf16.mxu0 0
  %1141 = vmatpush1.bf16.msra.mxu0 0
  %1142 = vmatprep.subr.bf16.mxu0 0
  %1143 = vmatpush1.bf16.msra.mxu0 0
  %1144 = vmatprep.subr.bf16.mxu0 0
  %1145 = vmatpush1.bf16.msra.mxu0 0
  %1146 = vmatprep.subr.bf16.mxu0 0
  %1147 = vmatpush1.bf16.msra.mxu0 0
  %1148 = vmatprep.subr.bf16.mxu0 0
  %1149 = vmatpush1.bf16.msra.mxu0 0
  %1150 = vmatprep.subr.bf16.mxu0 0
  %1151 = vmatpush1.bf16.msra.mxu0 0
  %1152 = vmatprep.subr.bf16.mxu0 0
  %1153 = vmatpush1.bf16.msra.mxu0 0
  %1154 = vmatprep.mubr.bf16.mxu0 0
  %1155 = vmatmul.mubr.bf16.gmra.mrb[0].mxu0 %v1120
  %v1156 = vpop.f32.mrb[0].mxu0
  %v1157 = vadd.f32 0.0, %v1156
  %v1158 = vpop.f32.mrb[0].mxu0
  %v1159 = vpop.f32.mrb[0].mxu0
  %v1160 = vpop.f32.mrb[0].mxu0
  %1161 = vdwg.mxu0
  %v1163 = vsel %vm896, %v1062, 0
  %1165 = vmatprep.subr.bf16.mxu0 0
  %1166 = vmatpush1.bf16.msra.mxu0 %v449
  %1167 = vmatprep.subr.bf16.mxu0 0
  %1168 = vmatpush1.bf16.msra.mxu0 0
  %1169 = vmatprep.subr.bf16.mxu0 0
  %1170 = vmatpush1.bf16.msra.mxu0 0
  %1171 = vmatprep.subr.bf16.mxu0 0
  %1172 = vmatpush1.bf16.msra.mxu0 0
  %1173 = vmatprep.subr.bf16.mxu0 0
  %1174 = vmatpush1.bf16.msra.mxu0 0
  %1175 = vmatprep.subr.bf16.mxu0 0
  %1176 = vmatpush1.bf16.msra.mxu0 0
  %1177 = vmatprep.subr.bf16.mxu0 0
  %1178 = vmatpush1.bf16.msra.mxu0 0
  %1179 = vmatprep.subr.bf16.mxu0 0
  %1180 = vmatpush1.bf16.msra.mxu0 0
  %1181 = vmatprep.subr.bf16.mxu0 0
  %1182 = vmatpush1.bf16.msra.mxu0 0
  %1183 = vmatprep.subr.bf16.mxu0 0
  %1184 = vmatpush1.bf16.msra.mxu0 0
  %1185 = vmatprep.subr.bf16.mxu0 0
  %1186 = vmatpush1.bf16.msra.mxu0 0
  %1187 = vmatprep.subr.bf16.mxu0 0
  %1188 = vmatpush1.bf16.msra.mxu0 0
  %1189 = vmatprep.subr.bf16.mxu0 0
  %1190 = vmatpush1.bf16.msra.mxu0 0
  %1191 = vmatprep.subr.bf16.mxu0 0
  %1192 = vmatpush1.bf16.msra.mxu0 0
  %1193 = vmatprep.subr.bf16.mxu0 0
  %1194 = vmatpush1.bf16.msra.mxu0 0
  %1195 = vmatprep.subr.bf16.mxu0 0
  %1196 = vmatpush1.bf16.msra.mxu0 0
  %1197 = vmatprep.mubr.bf16.mxu0 0
  %1198 = vmatmul.mubr.bf16.gmra.mrb[0].mxu0 %v1163
  %v1199 = vpop.f32.mrb[0].mxu0
  %v1200 = vadd.f32 0.0, %v1199
  %v1201 = vpop.f32.mrb[0].mxu0
  %v1202 = vpop.f32.mrb[0].mxu0
  %v1203 = vpop.f32.mrb[0].mxu0
  %1204 = vdwg.mxu0
  %v1206 = vsel %vm896, %v1063, 0
  %1208 = vmatprep.subr.bf16.mxu0 0
  %1209 = vmatpush1.bf16.msra.mxu0 %v450
  %1210 = vmatprep.subr.bf16.mxu0 0
  %1211 = vmatpush1.bf16.msra.mxu0 0
  %1212 = vmatprep.subr.bf16.mxu0 0
  %1213 = vmatpush1.bf16.msra.mxu0 0
  %1214 = vmatprep.subr.bf16.mxu0 0
  %1215 = vmatpush1.bf16.msra.mxu0 0
  %1216 = vmatprep.subr.bf16.mxu0 0
  %1217 = vmatpush1.bf16.msra.mxu0 0
  %1218 = vmatprep.subr.bf16.mxu0 0
  %1219 = vmatpush1.bf16.msra.mxu0 0
  %1220 = vmatprep.subr.bf16.mxu0 0
  %1221 = vmatpush1.bf16.msra.mxu0 0
  %1222 = vmatprep.subr.bf16.mxu0 0
  %1223 = vmatpush1.bf16.msra.mxu0 0
  %1224 = vmatprep.subr.bf16.mxu0 0
  %1225 = vmatpush1.bf16.msra.mxu0 0
  %1226 = vmatprep.subr.bf16.mxu0 0
  %1227 = vmatpush1.bf16.msra.mxu0 0
  %1228 = vmatprep.subr.bf16.mxu0 0
  %1229 = vmatpush1.bf16.msra.mxu0 0
  %1230 = vmatprep.subr.bf16.mxu0 0
  %1231 = vmatpush1.bf16.msra.mxu0 0
  %1232 = vmatprep.subr.bf16.mxu0 0
  %1233 = vmatpush1.bf16.msra.mxu0 0
  %1234 = vmatprep.subr.bf16.mxu0 0
  %1235 = vmatpush1.bf16.msra.mxu0 0
  %1236 = vmatprep.subr.bf16.mxu0 0
  %1237 = vmatpush1.bf16.msra.mxu0 0
  %1238 = vmatprep.subr.bf16.mxu0 0
  %1239 = vmatpush1.bf16.msra.mxu0 0
  %1240 = vmatprep.mubr.bf16.mxu0 0
  %1241 = vmatmul.mubr.bf16.gmra.mrb[0].mxu0 %v1206
  %v1242 = vpop.f32.mrb[0].mxu0
  %v1243 = vadd.f32 0.0, %v1242
  %v1244 = vpop.f32.mrb[0].mxu0
  %v1245 = vpop.f32.mrb[0].mxu0
  %v1246 = vpop.f32.mrb[0].mxu0
  %1247 = vdwg.mxu0
  %v1249 = vsel %vm896, %v1064, 0
  %1251 = vmatprep.subr.bf16.mxu0 0
  %1252 = vmatpush1.bf16.msra.mxu0 %v451
  %1253 = vmatprep.subr.bf16.mxu0 0
  %1254 = vmatpush1.bf16.msra.mxu0 0
  %1255 = vmatprep.subr.bf16.mxu0 0
  %1256 = vmatpush1.bf16.msra.mxu0 0
  %1257 = vmatprep.subr.bf16.mxu0 0
  %1258 = vmatpush1.bf16.msra.mxu0 0
  %1259 = vmatprep.subr.bf16.mxu0 0
  %1260 = vmatpush1.bf16.msra.mxu0 0
  %1261 = vmatprep.subr.bf16.mxu0 0
  %1262 = vmatpush1.bf16.msra.mxu0 0
  %1263 = vmatprep.subr.bf16.mxu0 0
  %1264 = vmatpush1.bf16.msra.mxu0 0
  %1265 = vmatprep.subr.bf16.mxu0 0
  %1266 = vmatpush1.bf16.msra.mxu0 0
  %1267 = vmatprep.subr.bf16.mxu0 0
  %1268 = vmatpush1.bf16.msra.mxu0 0
  %1269 = vmatprep.subr.bf16.mxu0 0
  %1270 = vmatpush1.bf16.msra.mxu0 0
  %1271 = vmatprep.subr.bf16.mxu0 0
  %1272 = vmatpush1.bf16.msra.mxu0 0
  %1273 = vmatprep.subr.bf16.mxu0 0
  %1274 = vmatpush1.bf16.msra.mxu0 0
  %1275 = vmatprep.subr.bf16.mxu0 0
  %1276 = vmatpush1.bf16.msra.mxu0 0
  %1277 = vmatprep.subr.bf16.mxu0 0
  %1278 = vmatpush1.bf16.msra.mxu0 0
  %1279 = vmatprep.subr.bf16.mxu0 0
  %1280 = vmatpush1.bf16.msra.mxu0 0
  %1281 = vmatprep.subr.bf16.mxu0 0
  %1282 = vmatpush1.bf16.msra.mxu0 0
  %1283 = vmatprep.mubr.bf16.mxu0 0
  %1284 = vmatmul.mubr.bf16.gmra.mrb[0].mxu0 %v1249
  %v1285 = vpop.f32.mrb[0].mxu0
  %v1286 = vadd.f32 0.0, %v1285
  %v1287 = vpop.f32.mrb[0].mxu0
  %v1288 = vpop.f32.mrb[0].mxu0
  %v1289 = vpop.f32.mrb[0].mxu0
  %1290 = vdwg.mxu0
  %v1292 = vsel %vm896, %v1065, 0
  %1294 = vmatprep.subr.bf16.mxu0 0
  %1295 = vmatpush1.bf16.msra.mxu0 %v452
  %1296 = vmatprep.subr.bf16.mxu0 0
  %1297 = vmatpush1.bf16.msra.mxu0 0
  %1298 = vmatprep.subr.bf16.mxu0 0
  %1299 = vmatpush1.bf16.msra.mxu0 0
  %1300 = vmatprep.subr.bf16.mxu0 0
  %1301 = vmatpush1.bf16.msra.mxu0 0
  %1302 = vmatprep.subr.bf16.mxu0 0
  %1303 = vmatpush1.bf16.msra.mxu0 0
  %1304 = vmatprep.subr.bf16.mxu0 0
  %1305 = vmatpush1.bf16.msra.mxu0 0
  %1306 = vmatprep.subr.bf16.mxu0 0
  %1307 = vmatpush1.bf16.msra.mxu0 0
  %1308 = vmatprep.subr.bf16.mxu0 0
  %1309 = vmatpush1.bf16.msra.mxu0 0
  %1310 = vmatprep.subr.bf16.mxu0 0
  %1311 = vmatpush1.bf16.msra.mxu0 0
  %1312 = vmatprep.subr.bf16.mxu0 0
  %1313 = vmatpush1.bf16.msra.mxu0 0
  %1314 = vmatprep.subr.bf16.mxu0 0
  %1315 = vmatpush1.bf16.msra.mxu0 0
  %1316 = vmatprep.subr.bf16.mxu0 0
  %1317 = vmatpush1.bf16.msra.mxu0 0
  %1318 = vmatprep.subr.bf16.mxu0 0
  %1319 = vmatpush1.bf16.msra.mxu0 0
  %1320 = vmatprep.subr.bf16.mxu0 0
  %1321 = vmatpush1.bf16.msra.mxu0 0
  %1322 = vmatprep.subr.bf16.mxu0 0
  %1323 = vmatpush1.bf16.msra.mxu0 0
  %1324 = vmatprep.subr.bf16.mxu0 0
  %1325 = vmatpush1.bf16.msra.mxu0 0
  %1326 = vmatprep.mubr.bf16.mxu0 0
  %1327 = vmatmul.mubr.bf16.gmra.mrb[0].mxu0 %v1292
  %v1328 = vpop.f32.mrb[0].mxu0
  %v1329 = vadd.f32 0.0, %v1328
  %v1330 = vpop.f32.mrb[0].mxu0
  %v1331 = vpop.f32.mrb[0].mxu0
  %v1332 = vpop.f32.mrb[0].mxu0
  %1333 = vdwg.mxu0
  %v1335 = vsel %vm896, %v1066, 0
  %1337 = vmatprep.subr.bf16.mxu0 0
  %1338 = vmatpush1.bf16.msra.mxu0 %v453
  %1339 = vmatprep.subr.bf16.mxu0 0
  %1340 = vmatpush1.bf16.msra.mxu0 0
  %1341 = vmatprep.subr.bf16.mxu0 0
  %1342 = vmatpush1.bf16.msra.mxu0 0
  %1343 = vmatprep.subr.bf16.mxu0 0
  %1344 = vmatpush1.bf16.msra.mxu0 0
  %1345 = vmatprep.subr.bf16.mxu0 0
  %1346 = vmatpush1.bf16.msra.mxu0 0
  %1347 = vmatprep.subr.bf16.mxu0 0
  %1348 = vmatpush1.bf16.msra.mxu0 0
  %1349 = vmatprep.subr.bf16.mxu0 0
  %1350 = vmatpush1.bf16.msra.mxu0 0
  %1351 = vmatprep.subr.bf16.mxu0 0
  %1352 = vmatpush1.bf16.msra.mxu0 0
  %1353 = vmatprep.subr.bf16.mxu0 0
  %1354 = vmatpush1.bf16.msra.mxu0 0
  %1355 = vmatprep.subr.bf16.mxu0 0
  %1356 = vmatpush1.bf16.msra.mxu0 0
  %1357 = vmatprep.subr.bf16.mxu0 0
  %1358 = vmatpush1.bf16.msra.mxu0 0
  %1359 = vmatprep.subr.bf16.mxu0 0
  %1360 = vmatpush1.bf16.msra.mxu0 0
  %1361 = vmatprep.subr.bf16.mxu0 0
  %1362 = vmatpush1.bf16.msra.mxu0 0
  %1363 = vmatprep.subr.bf16.mxu0 0
  %1364 = vmatpush1.bf16.msra.mxu0 0
  %1365 = vmatprep.subr.bf16.mxu0 0
  %1366 = vmatpush1.bf16.msra.mxu0 0
  %1367 = vmatprep.subr.bf16.mxu0 0
  %1368 = vmatpush1.bf16.msra.mxu0 0
  %1369 = vmatprep.mubr.bf16.mxu0 0
  %1370 = vmatmul.mubr.bf16.gmra.mrb[0].mxu0 %v1335
  %v1371 = vpop.f32.mrb[0].mxu0
  %v1372 = vadd.f32 0.0, %v1371
  %v1373 = vpop.f32.mrb[0].mxu0
  %v1374 = vpop.f32.mrb[0].mxu0
  %v1375 = vpop.f32.mrb[0].mxu0
  %1376 = vdwg.mxu0
  %v1378 = vsel %vm896, %v1067, 0
  %1380 = vmatprep.subr.bf16.mxu0 0
  %1381 = vmatpush1.bf16.msra.mxu0 %v454
  %1382 = vmatprep.subr.bf16.mxu0 0
  %1383 = vmatpush1.bf16.msra.mxu0 0
  %1384 = vmatprep.subr.bf16.mxu0 0
  %1385 = vmatpush1.bf16.msra.mxu0 0
  %1386 = vmatprep.subr.bf16.mxu0 0
  %1387 = vmatpush1.bf16.msra.mxu0 0
  %1388 = vmatprep.subr.bf16.mxu0 0
  %1389 = vmatpush1.bf16.msra.mxu0 0
  %1390 = vmatprep.subr.bf16.mxu0 0
  %1391 = vmatpush1.bf16.msra.mxu0 0
  %1392 = vmatprep.subr.bf16.mxu0 0
  %1393 = vmatpush1.bf16.msra.mxu0 0
  %1394 = vmatprep.subr.bf16.mxu0 0
  %1395 = vmatpush1.bf16.msra.mxu0 0
  %1396 = vmatprep.subr.bf16.mxu0 0
  %1397 = vmatpush1.bf16.msra.mxu0 0
  %1398 = vmatprep.subr.bf16.mxu0 0
  %1399 = vmatpush1.bf16.msra.mxu0 0
  %1400 = vmatprep.subr.bf16.mxu0 0
  %1401 = vmatpush1.bf16.msra.mxu0 0
  %1402 = vmatprep.subr.bf16.mxu0 0
  %1403 = vmatpush1.bf16.msra.mxu0 0
  %1404 = vmatprep.subr.bf16.mxu0 0
  %1405 = vmatpush1.bf16.msra.mxu0 0
  %1406 = vmatprep.subr.bf16.mxu0 0
  %1407 = vmatpush1.bf16.msra.mxu0 0
  %1408 = vmatprep.subr.bf16.mxu0 0
  %1409 = vmatpush1.bf16.msra.mxu0 0
  %1410 = vmatprep.subr.bf16.mxu0 0
  %1411 = vmatpush1.bf16.msra.mxu0 0
  %1412 = vmatprep.mubr.bf16.mxu0 0
  %1413 = vmatmul.mubr.bf16.gmra.mrb[0].mxu0 %v1378
  %v1414 = vpop.f32.mrb[0].mxu0
  %v1415 = vadd.f32 0.0, %v1414
  %v1416 = vpop.f32.mrb[0].mxu0
  %v1417 = vpop.f32.mrb[0].mxu0
  %v1418 = vpop.f32.mrb[0].mxu0
  %1419 = vdwg.mxu0
  %v1421 = vsel %vm896, %v1068, 0
  %1423 = vmatprep.subr.bf16.mxu0 0
  %1424 = vmatpush1.bf16.msra.mxu0 %v455
  %1425 = vmatprep.subr.bf16.mxu0 0
  %1426 = vmatpush1.bf16.msra.mxu0 0
  %1427 = vmatprep.subr.bf16.mxu0 0
  %1428 = vmatpush1.bf16.msra.mxu0 0
  %1429 = vmatprep.subr.bf16.mxu0 0
  %1430 = vmatpush1.bf16.msra.mxu0 0
  %1431 = vmatprep.subr.bf16.mxu0 0
  %1432 = vmatpush1.bf16.msra.mxu0 0
  %1433 = vmatprep.subr.bf16.mxu0 0
  %1434 = vmatpush1.bf16.msra.mxu0 0
  %1435 = vmatprep.subr.bf16.mxu0 0
  %1436 = vmatpush1.bf16.msra.mxu0 0
  %1437 = vmatprep.subr.bf16.mxu0 0
  %1438 = vmatpush1.bf16.msra.mxu0 0
  %1439 = vmatprep.subr.bf16.mxu0 0
  %1440 = vmatpush1.bf16.msra.mxu0 0
  %1441 = vmatprep.subr.bf16.mxu0 0
  %1442 = vmatpush1.bf16.msra.mxu0 0
  %1443 = vmatprep.subr.bf16.mxu0 0
  %1444 = vmatpush1.bf16.msra.mxu0 0
  %1445 = vmatprep.subr.bf16.mxu0 0
  %1446 = vmatpush1.bf16.msra.mxu0 0
  %1447 = vmatprep.subr.bf16.mxu0 0
  %1448 = vmatpush1.bf16.msra.mxu0 0
  %1449 = vmatprep.subr.bf16.mxu0 0
  %1450 = vmatpush1.bf16.msra.mxu0 0
  %1451 = vmatprep.subr.bf16.mxu0 0
  %1452 = vmatpush1.bf16.msra.mxu0 0
  %1453 = vmatprep.subr.bf16.mxu0 0
  %1454 = vmatpush1.bf16.msra.mxu0 0
  %1455 = vmatprep.mubr.bf16.mxu0 0
  %1456 = vmatmul.mubr.bf16.gmra.mrb[0].mxu0 %v1421
  %v1457 = vpop.f32.mrb[0].mxu0
  %v1458 = vadd.f32 0.0, %v1457
  %v1459 = vpop.f32.mrb[0].mxu0
  %v1460 = vpop.f32.mrb[0].mxu0
  %v1461 = vpop.f32.mrb[0].mxu0
  %1462 = vdwg.mxu0
  %v1464 = vsel %vm896, %v1069, 0
  %1466 = vmatprep.subr.bf16.mxu0 0
  %1467 = vmatpush1.bf16.msra.mxu0 %v456
  %1468 = vmatprep.subr.bf16.mxu0 0
  %1469 = vmatpush1.bf16.msra.mxu0 0
  %1470 = vmatprep.subr.bf16.mxu0 0
  %1471 = vmatpush1.bf16.msra.mxu0 0
  %1472 = vmatprep.subr.bf16.mxu0 0
  %1473 = vmatpush1.bf16.msra.mxu0 0
  %1474 = vmatprep.subr.bf16.mxu0 0
  %1475 = vmatpush1.bf16.msra.mxu0 0
  %1476 = vmatprep.subr.bf16.mxu0 0
  %1477 = vmatpush1.bf16.msra.mxu0 0
  %1478 = vmatprep.subr.bf16.mxu0 0
  %1479 = vmatpush1.bf16.msra.mxu0 0
  %1480 = vmatprep.subr.bf16.mxu0 0
  %1481 = vmatpush1.bf16.msra.mxu0 0
  %1482 = vmatprep.subr.bf16.mxu0 0
  %1483 = vmatpush1.bf16.msra.mxu0 0
  %1484 = vmatprep.subr.bf16.mxu0 0
  %1485 = vmatpush1.bf16.msra.mxu0 0
  %1486 = vmatprep.subr.bf16.mxu0 0
  %1487 = vmatpush1.bf16.msra.mxu0 0
  %1488 = vmatprep.subr.bf16.mxu0 0
  %1489 = vmatpush1.bf16.msra.mxu0 0
  %1490 = vmatprep.subr.bf16.mxu0 0
  %1491 = vmatpush1.bf16.msra.mxu0 0
  %1492 = vmatprep.subr.bf16.mxu0 0
  %1493 = vmatpush1.bf16.msra.mxu0 0
  %1494 = vmatprep.subr.bf16.mxu0 0
  %1495 = vmatpush1.bf16.msra.mxu0 0
  %1496 = vmatprep.subr.bf16.mxu0 0
  %1497 = vmatpush1.bf16.msra.mxu0 0
  %1498 = vmatprep.mubr.bf16.mxu0 0
  %1499 = vmatmul.mubr.bf16.gmra.mrb[0].mxu0 %v1464
  %v1500 = vpop.f32.mrb[0].mxu0
  %v1501 = vadd.f32 0.0, %v1500
  %v1502 = vpop.f32.mrb[0].mxu0
  %v1503 = vpop.f32.mrb[0].mxu0
  %v1504 = vpop.f32.mrb[0].mxu0
  %1505 = vdwg.mxu0
  %v1507 = vsel %vm896, %v1070, 0
  %1509 = vmatprep.subr.bf16.mxu0 0
  %1510 = vmatpush1.bf16.msra.mxu0 %v457
  %1511 = vmatprep.subr.bf16.mxu0 0
  %1512 = vmatpush1.bf16.msra.mxu0 0
  %1513 = vmatprep.subr.bf16.mxu0 0
  %1514 = vmatpush1.bf16.msra.mxu0 0
  %1515 = vmatprep.subr.bf16.mxu0 0
  %1516 = vmatpush1.bf16.msra.mxu0 0
  %1517 = vmatprep.subr.bf16.mxu0 0
  %1518 = vmatpush1.bf16.msra.mxu0 0
  %1519 = vmatprep.subr.bf16.mxu0 0
  %1520 = vmatpush1.bf16.msra.mxu0 0
  %1521 = vmatprep.subr.bf16.mxu0 0
  %1522 = vmatpush1.bf16.msra.mxu0 0
  %1523 = vmatprep.subr.bf16.mxu0 0
  %1524 = vmatpush1.bf16.msra.mxu0 0
  %1525 = vmatprep.subr.bf16.mxu0 0
  %1526 = vmatpush1.bf16.msra.mxu0 0
  %1527 = vmatprep.subr.bf16.mxu0 0
  %1528 = vmatpush1.bf16.msra.mxu0 0
  %1529 = vmatprep.subr.bf16.mxu0 0
  %1530 = vmatpush1.bf16.msra.mxu0 0
  %1531 = vmatprep.subr.bf16.mxu0 0
  %1532 = vmatpush1.bf16.msra.mxu0 0
  %1533 = vmatprep.subr.bf16.mxu0 0
  %1534 = vmatpush1.bf16.msra.mxu0 0
  %1535 = vmatprep.subr.bf16.mxu0 0
  %1536 = vmatpush1.bf16.msra.mxu0 0
  %1537 = vmatprep.subr.bf16.mxu0 0
  %1538 = vmatpush1.bf16.msra.mxu0 0
  %1539 = vmatprep.subr.bf16.mxu0 0
  %1540 = vmatpush1.bf16.msra.mxu0 0
  %1541 = vmatprep.mubr.bf16.mxu0 0
  %1542 = vmatmul.mubr.bf16.gmra.mrb[0].mxu0 %v1507
  %v1543 = vpop.f32.mrb[0].mxu0
  %v1544 = vadd.f32 0.0, %v1543
  %v1545 = vpop.f32.mrb[0].mxu0
  %v1546 = vpop.f32.mrb[0].mxu0
  %v1547 = vpop.f32.mrb[0].mxu0
  %1548 = vdwg.mxu0
  %v1550 = vsel %vm896, %v1071, 0
  %1552 = vmatprep.subr.bf16.mxu0 0
  %1553 = vmatpush1.bf16.msra.mxu0 %v458
  %1554 = vmatprep.subr.bf16.mxu0 0
  %1555 = vmatpush1.bf16.msra.mxu0 0
  %1556 = vmatprep.subr.bf16.mxu0 0
  %1557 = vmatpush1.bf16.msra.mxu0 0
  %1558 = vmatprep.subr.bf16.mxu0 0
  %1559 = vmatpush1.bf16.msra.mxu0 0
  %1560 = vmatprep.subr.bf16.mxu0 0
  %1561 = vmatpush1.bf16.msra.mxu0 0
  %1562 = vmatprep.subr.bf16.mxu0 0
  %1563 = vmatpush1.bf16.msra.mxu0 0
  %1564 = vmatprep.subr.bf16.mxu0 0
  %1565 = vmatpush1.bf16.msra.mxu0 0
  %1566 = vmatprep.subr.bf16.mxu0 0
  %1567 = vmatpush1.bf16.msra.mxu0 0
  %1568 = vmatprep.subr.bf16.mxu0 0
  %1569 = vmatpush1.bf16.msra.mxu0 0
  %1570 = vmatprep.subr.bf16.mxu0 0
  %1571 = vmatpush1.bf16.msra.mxu0 0
  %1572 = vmatprep.subr.bf16.mxu0 0
  %1573 = vmatpush1.bf16.msra.mxu0 0
  %1574 = vmatprep.subr.bf16.mxu0 0
  %1575 = vmatpush1.bf16.msra.mxu0 0
  %1576 = vmatprep.subr.bf16.mxu0 0
  %1577 = vmatpush1.bf16.msra.mxu0 0
  %1578 = vmatprep.subr.bf16.mxu0 0
  %1579 = vmatpush1.bf16.msra.mxu0 0
  %1580 = vmatprep.subr.bf16.mxu0 0
  %1581 = vmatpush1.bf16.msra.mxu0 0
  %1582 = vmatprep.subr.bf16.mxu0 0
  %1583 = vmatpush1.bf16.msra.mxu0 0
  %1584 = vmatprep.mubr.bf16.mxu0 0
  %1585 = vmatmul.mubr.bf16.gmra.mrb[0].mxu0 %v1550
  %v1586 = vpop.f32.mrb[0].mxu0
  %v1587 = vadd.f32 0.0, %v1586
  %v1588 = vpop.f32.mrb[0].mxu0
  %v1589 = vpop.f32.mrb[0].mxu0
  %v1590 = vpop.f32.mrb[0].mxu0
  %1591 = vdwg.mxu0
  %v1593 = vsel %vm896, %v1072, 0
  %1595 = vmatprep.subr.bf16.mxu0 0
  %1596 = vmatpush1.bf16.msra.mxu0 %v459
  %1597 = vmatprep.subr.bf16.mxu0 0
  %1598 = vmatpush1.bf16.msra.mxu0 0
  %1599 = vmatprep.subr.bf16.mxu0 0
  %1600 = vmatpush1.bf16.msra.mxu0 0
  %1601 = vmatprep.subr.bf16.mxu0 0
  %1602 = vmatpush1.bf16.msra.mxu0 0
  %1603 = vmatprep.subr.bf16.mxu0 0
  %1604 = vmatpush1.bf16.msra.mxu0 0
  %1605 = vmatprep.subr.bf16.mxu0 0
  %1606 = vmatpush1.bf16.msra.mxu0 0
  %1607 = vmatprep.subr.bf16.mxu0 0
  %1608 = vmatpush1.bf16.msra.mxu0 0
  %1609 = vmatprep.subr.bf16.mxu0 0
  %1610 = vmatpush1.bf16.msra.mxu0 0
  %1611 = vmatprep.subr.bf16.mxu0 0
  %1612 = vmatpush1.bf16.msra.mxu0 0
  %1613 = vmatprep.subr.bf16.mxu0 0
  %1614 = vmatpush1.bf16.msra.mxu0 0
  %1615 = vmatprep.subr.bf16.mxu0 0
  %1616 = vmatpush1.bf16.msra.mxu0 0
  %1617 = vmatprep.subr.bf16.mxu0 0
  %1618 = vmatpush1.bf16.msra.mxu0 0
  %1619 = vmatprep.subr.bf16.mxu0 0
  %1620 = vmatpush1.bf16.msra.mxu0 0
  %1621 = vmatprep.subr.bf16.mxu0 0
  %1622 = vmatpush1.bf16.msra.mxu0 0
  %1623 = vmatprep.subr.bf16.mxu0 0
  %1624 = vmatpush1.bf16.msra.mxu0 0
  %1625 = vmatprep.subr.bf16.mxu0 0
  %1626 = vmatpush1.bf16.msra.mxu0 0
  %1627 = vmatprep.mubr.bf16.mxu0 0
  %1628 = vmatmul.mubr.bf16.gmra.mrb[0].mxu0 %v1593
  %v1629 = vpop.f32.mrb[0].mxu0
  %v1630 = vadd.f32 0.0, %v1629
  %v1631 = vpop.f32.mrb[0].mxu0
  %v1632 = vpop.f32.mrb[0].mxu0
  %v1633 = vpop.f32.mrb[0].mxu0
  %1634 = vdwg.mxu0
  %v1636 = vsel %vm896, %v1073, 0
  %1638 = vmatprep.subr.bf16.mxu0 0
  %1639 = vmatpush1.bf16.msra.mxu0 %v460
  %1640 = vmatprep.subr.bf16.mxu0 0
  %1641 = vmatpush1.bf16.msra.mxu0 0
  %1642 = vmatprep.subr.bf16.mxu0 0
  %1643 = vmatpush1.bf16.msra.mxu0 0
  %1644 = vmatprep.subr.bf16.mxu0 0
  %1645 = vmatpush1.bf16.msra.mxu0 0
  %1646 = vmatprep.subr.bf16.mxu0 0
  %1647 = vmatpush1.bf16.msra.mxu0 0
  %1648 = vmatprep.subr.bf16.mxu0 0
  %1649 = vmatpush1.bf16.msra.mxu0 0
  %1650 = vmatprep.subr.bf16.mxu0 0
  %1651 = vmatpush1.bf16.msra.mxu0 0
  %1652 = vmatprep.subr.bf16.mxu0 0
  %1653 = vmatpush1.bf16.msra.mxu0 0
  %1654 = vmatprep.subr.bf16.mxu0 0
  %1655 = vmatpush1.bf16.msra.mxu0 0
  %1656 = vmatprep.subr.bf16.mxu0 0
  %1657 = vmatpush1.bf16.msra.mxu0 0
  %1658 = vmatprep.subr.bf16.mxu0 0
  %1659 = vmatpush1.bf16.msra.mxu0 0
  %1660 = vmatprep.subr.bf16.mxu0 0
  %1661 = vmatpush1.bf16.msra.mxu0 0
  %1662 = vmatprep.subr.bf16.mxu0 0
  %1663 = vmatpush1.bf16.msra.mxu0 0
  %1664 = vmatprep.subr.bf16.mxu0 0
  %1665 = vmatpush1.bf16.msra.mxu0 0
  %1666 = vmatprep.subr.bf16.mxu0 0
  %1667 = vmatpush1.bf16.msra.mxu0 0
  %1668 = vmatprep.subr.bf16.mxu0 0
  %1669 = vmatpush1.bf16.msra.mxu0 0
  %1670 = vmatprep.mubr.bf16.mxu0 0
  %1671 = vmatmul.mubr.bf16.gmra.mrb[0].mxu0 %v1636
  %v1672 = vpop.f32.mrb[0].mxu0
  %v1673 = vadd.f32 0.0, %v1672
  %v1674 = vpop.f32.mrb[0].mxu0
  %v1675 = vpop.f32.mrb[0].mxu0
  %v1676 = vpop.f32.mrb[0].mxu0
  %1677 = vdwg.mxu0
  %v1679 = vsel %vm896, %v1074, 0
  %1681 = vmatprep.subr.bf16.mxu0 0
  %1682 = vmatpush1.bf16.msra.mxu0 %v461
  %1683 = vmatprep.subr.bf16.mxu0 0
  %1684 = vmatpush1.bf16.msra.mxu0 0
  %1685 = vmatprep.subr.bf16.mxu0 0
  %1686 = vmatpush1.bf16.msra.mxu0 0
  %1687 = vmatprep.subr.bf16.mxu0 0
  %1688 = vmatpush1.bf16.msra.mxu0 0
  %1689 = vmatprep.subr.bf16.mxu0 0
  %1690 = vmatpush1.bf16.msra.mxu0 0
  %1691 = vmatprep.subr.bf16.mxu0 0
  %1692 = vmatpush1.bf16.msra.mxu0 0
  %1693 = vmatprep.subr.bf16.mxu0 0
  %1694 = vmatpush1.bf16.msra.mxu0 0
  %1695 = vmatprep.subr.bf16.mxu0 0
  %1696 = vmatpush1.bf16.msra.mxu0 0
  %1697 = vmatprep.subr.bf16.mxu0 0
  %1698 = vmatpush1.bf16.msra.mxu0 0
  %1699 = vmatprep.subr.bf16.mxu0 0
  %1700 = vmatpush1.bf16.msra.mxu0 0
  %1701 = vmatprep.subr.bf16.mxu0 0
  %1702 = vmatpush1.bf16.msra.mxu0 0
  %1703 = vmatprep.subr.bf16.mxu0 0
  %1704 = vmatpush1.bf16.msra.mxu0 0
  %1705 = vmatprep.subr.bf16.mxu0 0
  %1706 = vmatpush1.bf16.msra.mxu0 0
  %1707 = vmatprep.subr.bf16.mxu0 0
  %1708 = vmatpush1.bf16.msra.mxu0 0
  %1709 = vmatprep.subr.bf16.mxu0 0
  %1710 = vmatpush1.bf16.msra.mxu0 0
  %1711 = vmatprep.subr.bf16.mxu0 0
  %1712 = vmatpush1.bf16.msra.mxu0 0
  %1713 = vmatprep.mubr.bf16.mxu0 0
  %1714 = vmatmul.mubr.bf16.gmra.mrb[0].mxu0 %v1679
  %v1715 = vpop.f32.mrb[0].mxu0
  %v1716 = vadd.f32 0.0, %v1715
  %v1717 = vpop.f32.mrb[0].mxu0
  %v1718 = vpop.f32.mrb[0].mxu0
  %v1719 = vpop.f32.mrb[0].mxu0
  %1720 = vdwg.mxu0
  %v1722 = vsel %vm896, %v1075, 0
  %1724 = vmatprep.subr.bf16.mxu0 0
  %1725 = vmatpush1.bf16.msra.mxu0 %v462
  %1726 = vmatprep.subr.bf16.mxu0 0
  %1727 = vmatpush1.bf16.msra.mxu0 0
  %1728 = vmatprep.subr.bf16.mxu0 0
  %1729 = vmatpush1.bf16.msra.mxu0 0
  %1730 = vmatprep.subr.bf16.mxu0 0
  %1731 = vmatpush1.bf16.msra.mxu0 0
  %1732 = vmatprep.subr.bf16.mxu0 0
  %1733 = vmatpush1.bf16.msra.mxu0 0
  %1734 = vmatprep.subr.bf16.mxu0 0
  %1735 = vmatpush1.bf16.msra.mxu0 0
  %1736 = vmatprep.subr.bf16.mxu0 0
  %1737 = vmatpush1.bf16.msra.mxu0 0
  %1738 = vmatprep.subr.bf16.mxu0 0
  %1739 = vmatpush1.bf16.msra.mxu0 0
  %1740 = vmatprep.subr.bf16.mxu0 0
  %1741 = vmatpush1.bf16.msra.mxu0 0
  %1742 = vmatprep.subr.bf16.mxu0 0
  %1743 = vmatpush1.bf16.msra.mxu0 0
  %1744 = vmatprep.subr.bf16.mxu0 0
  %1745 = vmatpush1.bf16.msra.mxu0 0
  %1746 = vmatprep.subr.bf16.mxu0 0
  %1747 = vmatpush1.bf16.msra.mxu0 0
  %1748 = vmatprep.subr.bf16.mxu0 0
  %1749 = vmatpush1.bf16.msra.mxu0 0
  %1750 = vmatprep.subr.bf16.mxu0 0
  %1751 = vmatpush1.bf16.msra.mxu0 0
  %1752 = vmatprep.subr.bf16.mxu0 0
  %1753 = vmatpush1.bf16.msra.mxu0 0
  %1754 = vmatprep.subr.bf16.mxu0 0
  %1755 = vmatpush1.bf16.msra.mxu0 0
  %1756 = vmatprep.mubr.bf16.mxu0 0
  %1757 = vmatmul.mubr.bf16.gmra.mrb[0].mxu0 %v1722
  %v1758 = vpop.f32.mrb[0].mxu0
  %v1759 = vadd.f32 0.0, %v1758
  %v1760 = vpop.f32.mrb[0].mxu0
  %v1761 = vpop.f32.mrb[0].mxu0
  %v1762 = vpop.f32.mrb[0].mxu0
  %1763 = vdwg.mxu0
  %v1764 = vld [vmem:[#allocation4] sm:$0xff]
  %v1765 = vld [vmem:[#allocation4 + $0x8] sm:$0xff]
  %1767 = vset.pattern.permute.xlu0 0
  %1768 = vperm.xlu0 %1767, %v908
  %v1769 = vpop.permute.xlu0 %1768
  %1772 = vset.pattern.permute.xlu0 0
  %1773 = vperm.xlu0 %1772, %v910
  %v1774 = vpop.permute.xlu0 %1773
  %v1776 = vmul.f32 %v1769, %v1764
  %v1777 = vmul.f32 %v1774, %v1765
  %v1794 = vrot.slane %v1157, 7
  %v1795 = vsel %vm857, %v1794, %v1114
  %v1796 = vrot.slane %v1200, 6
  %v1797 = vsel %vm859, %v1796, %v1795
  %v1798 = vrot.slane %v1243, 5
  %v1799 = vsel %vm861, %v1798, %v1797
  %v1800 = vrot.slane %v1286, 4
  %v1801 = vsel %vm863, %v1800, %v1799
  %v1802 = vrot.slane %v1329, 3
  %v1803 = vsel %vm865, %v1802, %v1801
  %v1804 = vrot.slane %v1372, 2
  %v1805 = vsel %vm867, %v1804, %v1803
  %v1806 = vrot.slane %v1415, 1
  %v1807 = vsel %vm869, %v1806, %v1805
  %v1808 = vrot.slane %v1501, 7
  %v1809 = vsel %vm857, %v1808, %v1458
  %v1810 = vrot.slane %v1544, 6
  %v1811 = vsel %vm859, %v1810, %v1809
  %v1812 = vrot.slane %v1587, 5
  %v1813 = vsel %vm861, %v1812, %v1811
  %v1814 = vrot.slane %v1630, 4
  %v1815 = vsel %vm863, %v1814, %v1813
  %v1816 = vrot.slane %v1673, 3
  %v1817 = vsel %vm865, %v1816, %v1815
  %v1818 = vrot.slane %v1716, 2
  %v1819 = vsel %vm867, %v1818, %v1817
  %v1820 = vrot.slane %v1759, 1
  %v1821 = vsel %vm869, %v1820, %v1819
  %v1824 = vadd.f32 %v1776, %v1807
  %v1825 = vadd.f32 %v1777, %v1821
  %1826 = vst.msk [vmem:[#allocation4] sm:$0xff] %vm520, %v1824
  %1827 = vst.msk [vmem:[#allocation4 + $0x8] sm:$0xff] %vm520, %v1825
  %1828 = vst.msk [vmem:[#allocation2] sm:$0xff] %vm941, %v903
  %1829 = vst.msk [vmem:[#allocation2 + $0x8] sm:$0xff] %vm941, %v904
  // Predicated region
  $region54: #{attentive_fp_forward.5} parent=0 // pred_check
    %p1830 = pneg %p43
  $region55: #{attentive_fp_forward.5} parent=0 // pred_check_branch
    %1832 = sbr.rel (%p1830) target = $region57
  $region56: #{attentive_fp_forward.5} parent=0 // pred_region
    %v1833 = vld [vmem:[#allocation3] sm:$0xff]
    %v1834 = vld [vmem:[#allocation3 + $0x8] sm:$0xff]
    %vm1835 = vcmp.gt.f32.partialorder %v1833, 0.0
    %vm1836 = vcmp.gt.f32.partialorder %v1834, 0.0
    %v1837 = vsel %vm1835, %v1833, 1.0
    %v1838 = vsel %vm1836, %v1834, 1.0
    %v1839 = vrcp.pop %v1837
    %v1840 = vrcp.pop %v1838
    %v1841 = vld [vmem:[#allocation4] sm:$0xff]
    %v1842 = vld [vmem:[#allocation4 + $0x8] sm:$0xff]
    %1844 = vset.pattern.permute.xlu0 0
    %1845 = vperm.xlu0 %1844, %v1839
    %v1846 = vpop.permute.xlu0 %1845
    %1849 = vset.pattern.permute.xlu0 0
    %1850 = vperm.xlu0 %1849, %v1840
    %v1851 = vpop.permute.xlu0 %1850
    %v1853 = vmul.f32 %v1841, %v1846
    %v1854 = vmul.f32 %v1842, %v1851
    %v1855 = vsel %vm1835, 1, 0
    %v1856 = vsel %vm1836, 1, 0
    %v1857 = vcvt.s32.f32 %v1855
    %v1858 = vcvt.s32.f32 %v1856
    %v1859 = vld [vmem:[%s7] sm:$0xf]
    %v1860 = vld [vmem:[%s7 + $0x4] sm:$0xf]
    %v1861 = vld [vmem:[%s7 + $0x8] sm:$0xf]
    %v1862 = vld [vmem:[%s7 + $0xc] sm:$0xf]
    %v1863 = vld [vmem:[%s7 + $0x10] sm:$0xf]
    %v1864 = vld [vmem:[%s7 + $0x14] sm:$0xf]
    %v1865 = vld [vmem:[%s7 + $0x18] sm:$0xf]
    %v1866 = vld [vmem:[%s7 + $0x1c] sm:$0xf]
    %v1867 = vpack.c.bf16 %v1854, %v1853
    %v1868 = vld [vmem:[%s8] sm:$0x1]
    %1870 = vset.pattern.permute.xlu0 0
    %1871 = vperm.xlu0 %1870, %v1857
    %v1872 = vpop.permute.xlu0 %1871
    %1875 = vset.pattern.permute.xlu0 0
    %1876 = vperm.xlu0 %1875, %v1858
    %v1877 = vpop.permute.xlu0 %1876
    %v1880 = vlaneseq
    %v1881 = vshrl.u32 %v1880, 7
    %v1882 = vsub.s32 0, %v1881
    %v1883 = vrot.slane %v1868, %v1882
    %v1885 = vmul.f32 %v1872, %v1883
    %v1886 = vmul.f32 %v1877, %v1883
    %v1895 = vunpack.c.l.b16 %v1859
    %v1896 = vunpack.c.l.b16 %v1860
    %v1897 = vunpack.c.l.b16 %v1861
    %v1898 = vunpack.c.l.b16 %v1862
    %v1899 = vunpack.c.l.b16 %v1863
    %v1900 = vunpack.c.l.b16 %v1864
    %v1901 = vunpack.c.l.b16 %v1865
    %v1902 = vunpack.c.l.b16 %v1866
    %v1903 = vpack.c.b16 %v1896, %v1895
    %v1904 = vpack.c.b16 %v1898, %v1897
    %v1905 = vpack.c.b16 %v1900, %v1899
    %v1906 = vpack.c.b16 %v1902, %v1901
    %v1912 = vsel %vm520, %v1867, 0
    %1914 = vmatprep.subr.bf16.mxu0 0
    %1915 = vmatpush1.bf16.msra.mxu0 %v1903
    %1916 = vmatprep.subr.bf16.mxu0 0
    %1917 = vmatpush1.bf16.msra.mxu0 %v1904
    %1918 = vmatprep.subr.bf16.mxu0 0
    %1919 = vmatpush1.bf16.msra.mxu0 %v1905
    %1920 = vmatprep.subr.bf16.mxu0 0
    %1921 = vmatpush1.bf16.msra.mxu0 %v1906
    %1922 = vmatprep.subr.bf16.mxu0 0
    %1923 = vmatpush1.bf16.msra.mxu0 0
    %1924 = vmatprep.subr.bf16.mxu0 0
    %1925 = vmatpush1.bf16.msra.mxu0 0
    %1926 = vmatprep.subr.bf16.mxu0 0
    %1927 = vmatpush1.bf16.msra.mxu0 0
    %1928 = vmatprep.subr.bf16.mxu0 0
    %1929 = vmatpush1.bf16.msra.mxu0 0
    %1930 = vmatprep.subr.bf16.mxu0 0
    %1931 = vmatpush1.bf16.msra.mxu0 0
    %1932 = vmatprep.subr.bf16.mxu0 0
    %1933 = vmatpush1.bf16.msra.mxu0 0
    %1934 = vmatprep.subr.bf16.mxu0 0
    %1935 = vmatpush1.bf16.msra.mxu0 0
    %1936 = vmatprep.subr.bf16.mxu0 0
    %1937 = vmatpush1.bf16.msra.mxu0 0
    %1938 = vmatprep.subr.bf16.mxu0 0
    %1939 = vmatpush1.bf16.msra.mxu0 0
    %1940 = vmatprep.subr.bf16.mxu0 0
    %1941 = vmatpush1.bf16.msra.mxu0 0
    %1942 = vmatprep.subr.bf16.mxu0 0
    %1943 = vmatpush1.bf16.msra.mxu0 0
    %1944 = vmatprep.subr.bf16.mxu0 0
    %1945 = vmatpush1.bf16.msra.mxu0 0
    %1946 = vmatprep.mubr.bf16.mxu0 0
    %1947 = vmatmul.mubr.bf16.gmra.mrb[0].mxu0 %v1912
    %v1948 = vpop.f32.mrb[0].mxu0
    %v1949 = vadd.f32 %v1885, %v1948
    %v1950 = vpop.f32.mrb[0].mxu0
    %v1951 = vpop.f32.mrb[0].mxu0
    %v1952 = vadd.f32 %v1886, %v1951
    %v1953 = vpop.f32.mrb[0].mxu0
    %1954 = vdwg.mxu0
    %vm1955 = vcmp.gt.f32.partialorder %v1949, 0.0
    %vm1956 = vcmp.gt.f32.partialorder %v1952, 0.0
    %v1957 = vmin.f32 %v1949, 0.0
    %v1958 = vmin.f32 %v1952, 0.0
    %v1959 = vmul.f32 %v1957, 1.442695
    %v1960 = vpow.pop %v1959
    %v1961 = vmul.f32 %v1958, 1.442695
    %v1962 = vpow.pop %v1961
    %v1963 = vsub.f32 %v1960, 1.0
    %v1964 = vsub.f32 %v1962, 1.0
    %v1965 = vsel %vm1955, %v1949, %v1963
    %v1966 = vsel %vm1956, %v1952, %v1964
    %v1967 = vld [vmem:[%s2] sm:$0xff]
    %v1968 = vld [vmem:[%s2 + $0x8] sm:$0xff]
    %v1969 = vld [vmem:[%s9] sm:$0xf]
    %v1970 = vld [vmem:[%s9 + $0x4] sm:$0xf]
    %v1971 = vld [vmem:[%s9 + $0x8] sm:$0xf]
    %v1972 = vld [vmem:[%s9 + $0xc] sm:$0xf]
    %v1973 = vld [vmem:[%s9 + $0x10] sm:$0xf]
    %v1974 = vld [vmem:[%s9 + $0x14] sm:$0xf]
    %v1975 = vld [vmem:[%s9 + $0x18] sm:$0xf]
    %v1976 = vld [vmem:[%s9 + $0x1c] sm:$0xf]
    %v1977 = vpack.c.bf16 %v1966, %v1965
    %v1978 = vld [vmem:[%s10] sm:$0xf]
    %v1979 = vld [vmem:[%s10 + $0x4] sm:$0xf]
    %v1980 = vld [vmem:[%s10 + $0x8] sm:$0xf]
    %v1981 = vld [vmem:[%s10 + $0xc] sm:$0xf]
    %v1982 = vld [vmem:[%s10 + $0x10] sm:$0xf]
    %v1983 = vld [vmem:[%s10 + $0x14] sm:$0xf]
    %v1984 = vld [vmem:[%s10 + $0x18] sm:$0xf]
    %v1985 = vld [vmem:[%s10 + $0x1c] sm:$0xf]
    %v1986 = vpack.c.bf16 %v1968, %v1967
    %v1995 = vunpack.c.l.b16 %v1978
    %v1996 = vunpack.c.l.b16 %v1979
    %v1997 = vunpack.c.l.b16 %v1980
    %v1998 = vunpack.c.l.b16 %v1981
    %v1999 = vunpack.c.l.b16 %v1982
    %v2000 = vunpack.c.l.b16 %v1983
    %v2001 = vunpack.c.l.b16 %v1984
    %v2002 = vunpack.c.l.b16 %v1985
    %v2003 = vpack.c.b16 %v1996, %v1995
    %v2004 = vpack.c.b16 %v1998, %v1997
    %v2005 = vpack.c.b16 %v2000, %v1999
    %v2006 = vpack.c.b16 %v2002, %v2001
    %v2012 = vsel %vm520, %v1986, 0
    %2014 = vmatprep.subr.bf16.mxu0 0
    %2015 = vmatpush1.bf16.msra.mxu0 %v2003
    %2016 = vmatprep.subr.bf16.mxu0 0
    %2017 = vmatpush1.bf16.msra.mxu0 %v2004
    %2018 = vmatprep.subr.bf16.mxu0 0
    %2019 = vmatpush1.bf16.msra.mxu0 %v2005
    %2020 = vmatprep.subr.bf16.mxu0 0
    %2021 = vmatpush1.bf16.msra.mxu0 %v2006
    %2022 = vmatprep.subr.bf16.mxu0 0
    %2023 = vmatpush1.bf16.msra.mxu0 0
    %2024 = vmatprep.subr.bf16.mxu0 0
    %2025 = vmatpush1.bf16.msra.mxu0 0
    %2026 = vmatprep.subr.bf16.mxu0 0
    %2027 = vmatpush1.bf16.msra.mxu0 0
    %2028 = vmatprep.subr.bf16.mxu0 0
    %2029 = vmatpush1.bf16.msra.mxu0 0
    %2030 = vmatprep.subr.bf16.mxu0 0
    %2031 = vmatpush1.bf16.msra.mxu0 0
    %2032 = vmatprep.subr.bf16.mxu0 0
    %2033 = vmatpush1.bf16.msra.mxu0 0
    %2034 = vmatprep.subr.bf16.mxu0 0
    %2035 = vmatpush1.bf16.msra.mxu0 0
    %2036 = vmatprep.subr.bf16.mxu0 0
    %2037 = vmatpush1.bf16.msra.mxu0 0
    %2038 = vmatprep.subr.bf16.mxu0 0
    %2039 = vmatpush1.bf16.msra.mxu0 0
    %2040 = vmatprep.subr.bf16.mxu0 0
    %2041 = vmatpush1.bf16.msra.mxu0 0
    %2042 = vmatprep.subr.bf16.mxu0 0
    %2043 = vmatpush1.bf16.msra.mxu0 0
    %2044 = vmatprep.subr.bf16.mxu0 0
    %2045 = vmatpush1.bf16.msra.mxu0 0
    %2046 = vmatprep.mubr.bf16.mxu0 0
    %2047 = vmatmul.mubr.bf16.gmra.mrb[0].mxu0 %v2012
    %v2048 = vpop.f32.mrb[0].mxu0
    %v2049 = vadd.f32 0.0, %v2048
    %v2050 = vpop.f32.mrb[0].mxu0
    %v2051 = vpop.f32.mrb[0].mxu0
    %v2052 = vadd.f32 0.0, %v2051
    %v2053 = vpop.f32.mrb[0].mxu0
    %2054 = vdwg.mxu0
    %v2063 = vunpack.c.l.b16 %v1969
    %v2064 = vunpack.c.l.b16 %v1970
    %v2065 = vunpack.c.l.b16 %v1971
    %v2066 = vunpack.c.l.b16 %v1972
    %v2067 = vunpack.c.l.b16 %v1973
    %v2068 = vunpack.c.l.b16 %v1974
    %v2069 = vunpack.c.l.b16 %v1975
    %v2070 = vunpack.c.l.b16 %v1976
    %v2071 = vpack.c.b16 %v2064, %v2063
    %v2072 = vpack.c.b16 %v2066, %v2065
    %v2073 = vpack.c.b16 %v2068, %v2067
    %v2074 = vpack.c.b16 %v2070, %v2069
    %v2080 = vsel %vm520, %v1977, 0
    %2082 = vmatprep.subr.bf16.mxu0 0
    %2083 = vmatpush1.bf16.msra.mxu0 %v2071
    %2084 = vmatprep.subr.bf16.mxu0 0
    %2085 = vmatpush1.bf16.msra.mxu0 %v2072
    %2086 = vmatprep.subr.bf16.mxu0 0
    %2087 = vmatpush1.bf16.msra.mxu0 %v2073
    %2088 = vmatprep.subr.bf16.mxu0 0
    %2089 = vmatpush1.bf16.msra.mxu0 %v2074
    %2090 = vmatprep.subr.bf16.mxu0 0
    %2091 = vmatpush1.bf16.msra.mxu0 0
    %2092 = vmatprep.subr.bf16.mxu0 0
    %2093 = vmatpush1.bf16.msra.mxu0 0
    %2094 = vmatprep.subr.bf16.mxu0 0
    %2095 = vmatpush1.bf16.msra.mxu0 0
    %2096 = vmatprep.subr.bf16.mxu0 0
    %2097 = vmatpush1.bf16.msra.mxu0 0
    %2098 = vmatprep.subr.bf16.mxu0 0
    %2099 = vmatpush1.bf16.msra.mxu0 0
    %2100 = vmatprep.subr.bf16.mxu0 0
    %2101 = vmatpush1.bf16.msra.mxu0 0
    %2102 = vmatprep.subr.bf16.mxu0 0
    %2103 = vmatpush1.bf16.msra.mxu0 0
    %2104 = vmatprep.subr.bf16.mxu0 0
    %2105 = vmatpush1.bf16.msra.mxu0 0
    %2106 = vmatprep.subr.bf16.mxu0 0
    %2107 = vmatpush1.bf16.msra.mxu0 0
    %2108 = vmatprep.subr.bf16.mxu0 0
    %2109 = vmatpush1.bf16.msra.mxu0 0
    %2110 = vmatprep.subr.bf16.mxu0 0
    %2111 = vmatpush1.bf16.msra.mxu0 0
    %2112 = vmatprep.subr.bf16.mxu0 0
    %2113 = vmatpush1.bf16.msra.mxu0 0
    %2114 = vmatprep.mubr.bf16.mxu0 0
    %2115 = vmatmul.mubr.bf16.gmra.mrb[0].mxu0 %v2080
    %v2116 = vpop.f32.mrb[0].mxu0
    %v2117 = vadd.f32 %v2049, %v2116
    %v2118 = vpop.f32.mrb[0].mxu0
    %v2119 = vpop.f32.mrb[0].mxu0
    %v2120 = vadd.f32 %v2052, %v2119
    %v2121 = vpop.f32.mrb[0].mxu0
    %2122 = vdwg.mxu0
    %v2123 = vld [vmem:[%s11] sm:$0x1]
    %v2125 = vlaneseq
    %v2126 = vshrl.u32 %v2125, 7
    %v2127 = vsub.s32 0, %v2126
    %v2128 = vrot.slane %v2123, %v2127
    %v2130 = vadd.f32 %v2117, %v2128
    %v2131 = vadd.f32 %v2120, %v2128
    %v2132 = vxor.u32 %v2130, 2147483648
    %v2133 = vxor.u32 %v2131, 2147483648
    %v2134 = vmul.f32 %v2132, 1.442695
    %v2135 = vpow.pop %v2134
    %v2136 = vmul.f32 %v2133, 1.442695
    %v2137 = vpow.pop %v2136
    %v2138 = vadd.f32 %v2135, 1.0
    %v2139 = vadd.f32 %v2137, 1.0
    %v2140 = vrcp.pop %v2138
    %v2141 = vmul.f32 1.0, %v2140
    %v2142 = vrcp.pop %v2139
    %v2143 = vmul.f32 1.0, %v2142
    %s2144 = scalar_lea.vmem %s9, 32
    %v2145 = vld [vmem:[%s2144] sm:$0xf]
    %v2146 = vld [vmem:[%s2144 + $0x4] sm:$0xf]
    %v2147 = vld [vmem:[%s2144 + $0x8] sm:$0xf]
    %v2148 = vld [vmem:[%s2144 + $0xc] sm:$0xf]
    %v2149 = vld [vmem:[%s2144 + $0x10] sm:$0xf]
    %v2150 = vld [vmem:[%s2144 + $0x14] sm:$0xf]
    %v2151 = vld [vmem:[%s2144 + $0x18] sm:$0xf]
    %v2152 = vld [vmem:[%s2144 + $0x1c] sm:$0xf]
    %s2153 = scalar_lea.vmem %s10, 32
    %v2154 = vld [vmem:[%s2153] sm:$0xf]
    %v2155 = vld [vmem:[%s2153 + $0x4] sm:$0xf]
    %v2156 = vld [vmem:[%s2153 + $0x8] sm:$0xf]
    %v2157 = vld [vmem:[%s2153 + $0xc] sm:$0xf]
    %v2158 = vld [vmem:[%s2153 + $0x10] sm:$0xf]
    %v2159 = vld [vmem:[%s2153 + $0x14] sm:$0xf]
    %v2160 = vld [vmem:[%s2153 + $0x18] sm:$0xf]
    %v2161 = vld [vmem:[%s2153 + $0x1c] sm:$0xf]
    %v2170 = vunpack.c.l.b16 %v2154
    %v2171 = vunpack.c.l.b16 %v2155
    %v2172 = vunpack.c.l.b16 %v2156
    %v2173 = vunpack.c.l.b16 %v2157
    %v2174 = vunpack.c.l.b16 %v2158
    %v2175 = vunpack.c.l.b16 %v2159
    %v2176 = vunpack.c.l.b16 %v2160
    %v2177 = vunpack.c.l.b16 %v2161
    %v2178 = vpack.c.b16 %v2171, %v2170
    %v2179 = vpack.c.b16 %v2173, %v2172
    %v2180 = vpack.c.b16 %v2175, %v2174
    %v2181 = vpack.c.b16 %v2177, %v2176
    %2186 = vmatprep.subr.bf16.mxu0 0
    %2187 = vmatpush1.bf16.msra.mxu0 %v2178
    %2188 = vmatprep.subr.bf16.mxu0 0
    %2189 = vmatpush1.bf16.msra.mxu0 %v2179
    %2190 = vmatprep.subr.bf16.mxu0 0
    %2191 = vmatpush1.bf16.msra.mxu0 %v2180
    %2192 = vmatprep.subr.bf16.mxu0 0
    %2193 = vmatpush1.bf16.msra.mxu0 %v2181
    %2194 = vmatprep.subr.bf16.mxu0 0
    %2195 = vmatpush1.bf16.msra.mxu0 0
    %2196 = vmatprep.subr.bf16.mxu0 0
    %2197 = vmatpush1.bf16.msra.mxu0 0
    %2198 = vmatprep.subr.bf16.mxu0 0
    %2199 = vmatpush1.bf16.msra.mxu0 0
    %2200 = vmatprep.subr.bf16.mxu0 0
    %2201 = vmatpush1.bf16.msra.mxu0 0
    %2202 = vmatprep.subr.bf16.mxu0 0
    %2203 = vmatpush1.bf16.msra.mxu0 0
    %2204 = vmatprep.subr.bf16.mxu0 0
    %2205 = vmatpush1.bf16.msra.mxu0 0
    %2206 = vmatprep.subr.bf16.mxu0 0
    %2207 = vmatpush1.bf16.msra.mxu0 0
    %2208 = vmatprep.subr.bf16.mxu0 0
    %2209 = vmatpush1.bf16.msra.mxu0 0
    %2210 = vmatprep.subr.bf16.mxu0 0
    %2211 = vmatpush1.bf16.msra.mxu0 0
    %2212 = vmatprep.subr.bf16.mxu0 0
    %2213 = vmatpush1.bf16.msra.mxu0 0
    %2214 = vmatprep.subr.bf16.mxu0 0
    %2215 = vmatpush1.bf16.msra.mxu0 0
    %2216 = vmatprep.subr.bf16.mxu0 0
    %2217 = vmatpush1.bf16.msra.mxu0 0
    %2218 = vmatprep.mubr.bf16.mxu0 0
    %2219 = vmatmul.mubr.bf16.gmra.mrb[0].mxu0 %v2012
    %v2220 = vpop.f32.mrb[0].mxu0
    %v2221 = vadd.f32 0.0, %v2220
    %v2222 = vpop.f32.mrb[0].mxu0
    %v2223 = vpop.f32.mrb[0].mxu0
    %v2224 = vadd.f32 0.0, %v2223
    %v2225 = vpop.f32.mrb[0].mxu0
    %2226 = vdwg.mxu0
    %v2235 = vunpack.c.l.b16 %v2145
    %v2236 = vunpack.c.l.b16 %v2146
    %v2237 = vunpack.c.l.b16 %v2147
    %v2238 = vunpack.c.l.b16 %v2148
    %v2239 = vunpack.c.l.b16 %v2149
    %v2240 = vunpack.c.l.b16 %v2150
    %v2241 = vunpack.c.l.b16 %v2151
    %v2242 = vunpack.c.l.b16 %v2152
    %v2243 = vpack.c.b16 %v2236, %v2235
    %v2244 = vpack.c.b16 %v2238, %v2237
    %v2245 = vpack.c.b16 %v2240, %v2239
    %v2246 = vpack.c.b16 %v2242, %v2241
    %2251 = vmatprep.subr.bf16.mxu0 0
    %2252 = vmatpush1.bf16.msra.mxu0 %v2243
    %2253 = vmatprep.subr.bf16.mxu0 0
    %2254 = vmatpush1.bf16.msra.mxu0 %v2244
    %2255 = vmatprep.subr.bf16.mxu0 0
    %2256 = vmatpush1.bf16.msra.mxu0 %v2245
    %2257 = vmatprep.subr.bf16.mxu0 0
    %2258 = vmatpush1.bf16.msra.mxu0 %v2246
    %2259 = vmatprep.subr.bf16.mxu0 0
    %2260 = vmatpush1.bf16.msra.mxu0 0
    %2261 = vmatprep.subr.bf16.mxu0 0
    %2262 = vmatpush1.bf16.msra.mxu0 0
    %2263 = vmatprep.subr.bf16.mxu0 0
    %2264 = vmatpush1.bf16.msra.mxu0 0
    %2265 = vmatprep.subr.bf16.mxu0 0
    %2266 = vmatpush1.bf16.msra.mxu0 0
    %2267 = vmatprep.subr.bf16.mxu0 0
    %2268 = vmatpush1.bf16.msra.mxu0 0
    %2269 = vmatprep.subr.bf16.mxu0 0
    %2270 = vmatpush1.bf16.msra.mxu0 0
    %2271 = vmatprep.subr.bf16.mxu0 0
    %2272 = vmatpush1.bf16.msra.mxu0 0
    %2273 = vmatprep.subr.bf16.mxu0 0
    %2274 = vmatpush1.bf16.msra.mxu0 0
    %2275 = vmatprep.subr.bf16.mxu0 0
    %2276 = vmatpush1.bf16.msra.mxu0 0
    %2277 = vmatprep.subr.bf16.mxu0 0
    %2278 = vmatpush1.bf16.msra.mxu0 0
    %2279 = vmatprep.subr.bf16.mxu0 0
    %2280 = vmatpush1.bf16.msra.mxu0 0
    %2281 = vmatprep.subr.bf16.mxu0 0
    %2282 = vmatpush1.bf16.msra.mxu0 0
    %2283 = vmatprep.mubr.bf16.mxu0 0
    %2284 = vmatmul.mubr.bf16.gmra.mrb[0].mxu0 %v2080
    %v2285 = vpop.f32.mrb[0].mxu0
    %v2286 = vadd.f32 %v2221, %v2285
    %v2287 = vpop.f32.mrb[0].mxu0
    %v2288 = vpop.f32.mrb[0].mxu0
    %v2289 = vadd.f32 %v2224, %v2288
    %v2290 = vpop.f32.mrb[0].mxu0
    %2291 = vdwg.mxu0
    %s2292 = scalar_lea.vmem %s11, 1
    %v2293 = vld [vmem:[%s2292] sm:$0x1]
    %v2295 = vlaneseq
    %v2296 = vshrl.u32 %v2295, 7
    %v2297 = vsub.s32 0, %v2296
    %v2298 = vrot.slane %v2293, %v2297
    %v2300 = vadd.f32 %v2286, %v2298
    %v2301 = vadd.f32 %v2289, %v2298
    %v2302 = vxor.u32 %v2300, 2147483648
    %v2303 = vxor.u32 %v2301, 2147483648
    %v2304 = vmul.f32 %v2302, 1.442695
    %v2305 = vpow.pop %v2304
    %v2306 = vmul.f32 %v2303, 1.442695
    %v2307 = vpow.pop %v2306
    %v2308 = vadd.f32 %v2305, 1.0
    %v2309 = vadd.f32 %v2307, 1.0
    %v2310 = vrcp.pop %v2308
    %v2311 = vmul.f32 1.0, %v2310
    %v2312 = vrcp.pop %v2309
    %v2313 = vmul.f32 1.0, %v2312
    %s2314 = scalar_lea.vmem %s9, 64
    %v2315 = vld [vmem:[%s2314] sm:$0xf]
    %v2316 = vld [vmem:[%s2314 + $0x4] sm:$0xf]
    %v2317 = vld [vmem:[%s2314 + $0x8] sm:$0xf]
    %v2318 = vld [vmem:[%s2314 + $0xc] sm:$0xf]
    %v2319 = vld [vmem:[%s2314 + $0x10] sm:$0xf]
    %v2320 = vld [vmem:[%s2314 + $0x14] sm:$0xf]
    %v2321 = vld [vmem:[%s2314 + $0x18] sm:$0xf]
    %v2322 = vld [vmem:[%s2314 + $0x1c] sm:$0xf]
    %s2323 = scalar_lea.vmem %s11, 2
    %v2324 = vld [vmem:[%s2323] sm:$0x1]
    %v2326 = vlaneseq
    %v2327 = vshrl.u32 %v2326, 7
    %v2328 = vsub.s32 0, %v2327
    %v2329 = vrot.slane %v2324, %v2328
    %v2339 = vunpack.c.l.b16 %v2315
    %v2340 = vunpack.c.l.b16 %v2316
    %v2341 = vunpack.c.l.b16 %v2317
    %v2342 = vunpack.c.l.b16 %v2318
    %v2343 = vunpack.c.l.b16 %v2319
    %v2344 = vunpack.c.l.b16 %v2320
    %v2345 = vunpack.c.l.b16 %v2321
    %v2346 = vunpack.c.l.b16 %v2322
    %v2347 = vpack.c.b16 %v2340, %v2339
    %v2348 = vpack.c.b16 %v2342, %v2341
    %v2349 = vpack.c.b16 %v2344, %v2343
    %v2350 = vpack.c.b16 %v2346, %v2345
    %2355 = vmatprep.subr.bf16.mxu0 0
    %2356 = vmatpush1.bf16.msra.mxu0 %v2347
    %2357 = vmatprep.subr.bf16.mxu0 0
    %2358 = vmatpush1.bf16.msra.mxu0 %v2348
    %2359 = vmatprep.subr.bf16.mxu0 0
    %2360 = vmatpush1.bf16.msra.mxu0 %v2349
    %2361 = vmatprep.subr.bf16.mxu0 0
    %2362 = vmatpush1.bf16.msra.mxu0 %v2350
    %2363 = vmatprep.subr.bf16.mxu0 0
    %2364 = vmatpush1.bf16.msra.mxu0 0
    %2365 = vmatprep.subr.bf16.mxu0 0
    %2366 = vmatpush1.bf16.msra.mxu0 0
    %2367 = vmatprep.subr.bf16.mxu0 0
    %2368 = vmatpush1.bf16.msra.mxu0 0
    %2369 = vmatprep.subr.bf16.mxu0 0
    %2370 = vmatpush1.bf16.msra.mxu0 0
    %2371 = vmatprep.subr.bf16.mxu0 0
    %2372 = vmatpush1.bf16.msra.mxu0 0
    %2373 = vmatprep.subr.bf16.mxu0 0
    %2374 = vmatpush1.bf16.msra.mxu0 0
    %2375 = vmatprep.subr.bf16.mxu0 0
    %2376 = vmatpush1.bf16.msra.mxu0 0
    %2377 = vmatprep.subr.bf16.mxu0 0
    %2378 = vmatpush1.bf16.msra.mxu0 0
    %2379 = vmatprep.subr.bf16.mxu0 0
    %2380 = vmatpush1.bf16.msra.mxu0 0
    %2381 = vmatprep.subr.bf16.mxu0 0
    %2382 = vmatpush1.bf16.msra.mxu0 0
    %2383 = vmatprep.subr.bf16.mxu0 0
    %2384 = vmatpush1.bf16.msra.mxu0 0
    %2385 = vmatprep.subr.bf16.mxu0 0
    %2386 = vmatpush1.bf16.msra.mxu0 0
    %2387 = vmatprep.mubr.bf16.mxu0 0
    %2388 = vmatmul.mubr.bf16.gmra.mrb[0].mxu0 %v2080
    %v2389 = vpop.f32.mrb[0].mxu0
    %v2390 = vadd.f32 %v2329, %v2389
    %v2391 = vpop.f32.mrb[0].mxu0
    %v2392 = vpop.f32.mrb[0].mxu0
    %v2393 = vadd.f32 %v2329, %v2392
    %v2394 = vpop.f32.mrb[0].mxu0
    %2395 = vdwg.mxu0
    %s2396 = scalar_lea.vmem %s10, 64
    %v2397 = vld [vmem:[%s2396] sm:$0xf]
    %v2398 = vld [vmem:[%s2396 + $0x4] sm:$0xf]
    %v2399 = vld [vmem:[%s2396 + $0x8] sm:$0xf]
    %v2400 = vld [vmem:[%s2396 + $0xc] sm:$0xf]
    %v2401 = vld [vmem:[%s2396 + $0x10] sm:$0xf]
    %v2402 = vld [vmem:[%s2396 + $0x14] sm:$0xf]
    %v2403 = vld [vmem:[%s2396 + $0x18] sm:$0xf]
    %v2404 = vld [vmem:[%s2396 + $0x1c] sm:$0xf]
    %s2405 = scalar_lea.vmem %s11, 3
    %v2406 = vld [vmem:[%s2405] sm:$0x1]
    %v2408 = vlaneseq
    %v2409 = vshrl.u32 %v2408, 7
    %v2410 = vsub.s32 0, %v2409
    %v2411 = vrot.slane %v2406, %v2410
    %v2421 = vunpack.c.l.b16 %v2397
    %v2422 = vunpack.c.l.b16 %v2398
    %v2423 = vunpack.c.l.b16 %v2399
    %v2424 = vunpack.c.l.b16 %v2400
    %v2425 = vunpack.c.l.b16 %v2401
    %v2426 = vunpack.c.l.b16 %v2402
    %v2427 = vunpack.c.l.b16 %v2403
    %v2428 = vunpack.c.l.b16 %v2404
    %v2429 = vpack.c.b16 %v2422, %v2421
    %v2430 = vpack.c.b16 %v2424, %v2423
    %v2431 = vpack.c.b16 %v2426, %v2425
    %v2432 = vpack.c.b16 %v2428, %v2427
    %2437 = vmatprep.subr.bf16.mxu0 0
    %2438 = vmatpush1.bf16.msra.mxu0 %v2429
    %2439 = vmatprep.subr.bf16.mxu0 0
    %2440 = vmatpush1.bf16.msra.mxu0 %v2430
    %2441 = vmatprep.subr.bf16.mxu0 0
    %2442 = vmatpush1.bf16.msra.mxu0 %v2431
    %2443 = vmatprep.subr.bf16.mxu0 0
    %2444 = vmatpush1.bf16.msra.mxu0 %v2432
    %2445 = vmatprep.subr.bf16.mxu0 0
    %2446 = vmatpush1.bf16.msra.mxu0 0
    %2447 = vmatprep.subr.bf16.mxu0 0
    %2448 = vmatpush1.bf16.msra.mxu0 0
    %2449 = vmatprep.subr.bf16.mxu0 0
    %2450 = vmatpush1.bf16.msra.mxu0 0
    %2451 = vmatprep.subr.bf16.mxu0 0
    %2452 = vmatpush1.bf16.msra.mxu0 0
    %2453 = vmatprep.subr.bf16.mxu0 0
    %2454 = vmatpush1.bf16.msra.mxu0 0
    %2455 = vmatprep.subr.bf16.mxu0 0
    %2456 = vmatpush1.bf16.msra.mxu0 0
    %2457 = vmatprep.subr.bf16.mxu0 0
    %2458 = vmatpush1.bf16.msra.mxu0 0
    %2459 = vmatprep.subr.bf16.mxu0 0
    %2460 = vmatpush1.bf16.msra.mxu0 0
    %2461 = vmatprep.subr.bf16.mxu0 0
    %2462 = vmatpush1.bf16.msra.mxu0 0
    %2463 = vmatprep.subr.bf16.mxu0 0
    %2464 = vmatpush1.bf16.msra.mxu0 0
    %2465 = vmatprep.subr.bf16.mxu0 0
    %2466 = vmatpush1.bf16.msra.mxu0 0
    %2467 = vmatprep.subr.bf16.mxu0 0
    %2468 = vmatpush1.bf16.msra.mxu0 0
    %2469 = vmatprep.mubr.bf16.mxu0 0
    %2470 = vmatmul.mubr.bf16.gmra.mrb[0].mxu0 %v2012
    %v2471 = vpop.f32.mrb[0].mxu0
    %v2472 = vadd.f32 %v2411, %v2471
    %v2473 = vpop.f32.mrb[0].mxu0
    %v2474 = vpop.f32.mrb[0].mxu0
    %v2475 = vadd.f32 %v2411, %v2474
    %v2476 = vpop.f32.mrb[0].mxu0
    %2477 = vdwg.mxu0
    %v2478 = vmul.f32 %v2141, %v2472
    %v2479 = vmul.f32 %v2143, %v2475
    %v2480 = vadd.f32 %v2390, %v2478
    %v2481 = vadd.f32 %v2393, %v2479
    %v2482 = vtanh.pop %v2480
    %v2483 = vtanh.pop %v2481
    %v2484 = vsub.f32 1.0, %v2311
    %v2485 = vsub.f32 1.0, %v2313
    %v2486 = vmul.f32 %v2484, %v2482
    %v2487 = vmul.f32 %v2485, %v2483
    %v2488 = vmul.f32 %v2311, %v1967
    %v2489 = vmul.f32 %v2313, %v1968
    %v2490 = vadd.f32 %v2486, %v2488
    %v2491 = vadd.f32 %v2487, %v2489
    %v2492 = vmax.f32 %v2490, 0.0
    %v2493 = vmax.f32 %v2491, 0.0
    %2494 = vst.msk [vmem:[%s12] sm:$0xff] %vm520, %v2492
    %2495 = vst.msk [vmem:[%s12 + $0x8] sm:$0xff] %vm520, %v2493
  $region57: #{attentive_fp_forward.5} parent=0 // pred_fallthru
    _
  // Predicated region
  $region58: #{attentive_fp_forward.5} parent=0 // pred_check
    _
  $region59: #{attentive_fp_forward.5} parent=0 // pred_check_branch
    %2497 = sbr.rel (0) target = $region61
  $region60: #{attentive_fp_forward.5} parent=0 // pred_region
    _
  $region61: #{attentive_fp_forward.5} parent=0 // pred_fallthru
    _
  // Predicated region
  $region62: #{attentive_fp_forward.5} parent=0 // pred_check
    _
  $region63: #{attentive_fp_forward.5} parent=0 // pred_check_branch
    %2499 = sbr.rel (0) target = $region65
  $region64: #{attentive_fp_forward.5} parent=0 // pred_region
    _
  $region65: #{attentive_fp_forward.5} parent=0 // pred_fallthru
    _

</llo_original>
